<compile_context>
chip_gen: v5e
topology: v5e:2x2
jax: 0.10.0
libtpu: 0.0.40
codegen_flags: <defaults>
</compile_context>

<pallas_src>
import jax
import jax.numpy as jnp
import numpy as np
from jax.experimental import pallas as pl
from jax.experimental.pallas import tpu as pltpu

# ----------------------- model hyper-parameters (small) ----------------------
LATENT = 16          # latent_size
HID = 8              # hidden_chanels
NC = 3               # num_chanel
KSIZE = 4
CHANS = [LATENT, 8 * HID, 4 * HID, 2 * HID, HID, NC]
STRIDES = [1, 2, 2, 2, 2]
PADS = [0, 1, 1, 1, 1]
BN_EPS = 1e-5


def _num_tensorcores_per_chip():
    """v7x packs 2 TensorCores per chip (megacore); v5e/v6e expose 1."""
    try:
        kind = jax.devices()[0].device_kind.lower()
    except Exception:
        return 1
    return 2 if ("v7" in kind or "7x" in kind) else 1


_NUM_TC = _num_tensorcores_per_chip()
# Single-TC chips: bigger tiles amortize the ~0.35us/step grid overhead.
# Dual-TC (v7x): cap at 1024 so the "parallel" M grid always feeds both cores.
M_TILE = 1024 if _NUM_TC > 1 else 2048


def _pick_tm(M):
    """Largest row tile that divides M, is a multiple of 8, is <= M_TILE and
    (on dual-TC chips) leaves a grid of >= 2 steps."""
    upper = min(M, M_TILE)
    if _NUM_TC > 1:
        upper = min(upper, max(8, M // _NUM_TC))
    tm = (upper // 8) * 8
    while tm >= 8:
        if M % tm == 0:
            return tm
        tm -= 8
    return M          # fallback: single full-extent block (always legal)


# ------------------------------- Pallas kernel -------------------------------
def _bn_relu_matmul_kernel(x_ref, w_ref, scale_ref, shift_ref, o_ref):
    """relu(x * scale + shift) @ w -- f32 BN/ReLU prologue, bf16 MXU matmul.

    x_ref     : (tm, Cin)      f32   raw (pre-BN) activations of prev layer
    w_ref     : (Cin, Npad)    bf16  output-stationary ConvT weight matrix
    scale_ref : (1, Cin)       f32   gamma * rsqrt(var + eps)
    shift_ref : (1, Cin)       f32   beta  - mean * scale
    o_ref     : (tm, Npad)     f32   per-pixel patch contributions (lane-dense)
    """
    x = jnp.maximum(x_ref[...] * scale_ref[...] + shift_ref[...], 0.0)
    o_ref[...] = jnp.dot(x.astype(jnp.bfloat16), w_ref[...],
                         preferred_element_type=jnp.float32)


def fused_bn_relu_matmul(x, w_mat, scale, shift):
    """x: (M, K) f32, w_mat: (K, N) bf16, scale/shift: (1, K) f32 -> (M, N) f32."""
    M, K = x.shape
    N = w_mat.shape[1]
    tm = _pick_tm(M)
    grid = (M // tm,)

    flops = 2 * M * K * N + 3 * M * K          # matmul + BN/ReLU prologue
    bytes_accessed = (x.size * 4 + w_mat.size * 2
                      + (scale.size + shift.size) * 4 + M * N * 4)

    return pl.pallas_call(
        _bn_relu_matmul_kernel,
        out_shape=jax.ShapeDtypeStruct((M, N), jnp.float32),
        grid_spec=pltpu.PrefetchScalarGridSpec(
            num_scalar_prefetch=0,
            grid=grid,
            in_specs=[
                pl.BlockSpec((tm, K), lambda m: (m, 0)),
                pl.BlockSpec((K, N), lambda m: (0, 0)),
                pl.BlockSpec((1, K), lambda m: (0, 0)),
                pl.BlockSpec((1, K), lambda m: (0, 0)),
            ],
            out_specs=pl.BlockSpec((tm, N), lambda m: (m, 0)),
        ),
        compiler_params=pltpu.CompilerParams(
            dimension_semantics=("parallel",),
            vmem_limit_bytes=16 * 1024 * 1024,   # real footprint ~2 MiB; safe on v7x
        ),
        cost_estimate=pl.CostEstimate(flops=flops, transcendentals=0,
                                      bytes_accessed=bytes_accessed),
    )(x, w_mat, scale, shift)


# ----------------- ConvTranspose2d output-stationary lowering ----------------
def convt_os_weight(w):
    """PyTorch ConvTranspose2d weight (Cin, Cout, k, k) -> (Cin, k*k*Cout).

    Column order is (ky, kx, co); co is fastest so channels land in lanes
    after the col2im reshape.  No spatial flip in the output-stationary form.
    """
    cin, cout, k, _ = w.shape
    return w.transpose(0, 2, 3, 1).reshape(cin, k * k * cout)


def pack_params(params):
    """One-time packing (transpose/reshape/bf16 cast/lane pad) OUTSIDE jit."""
    packed = []
    for (w, gamma, beta) in params:
        wmat = convt_os_weight(w).astype(jnp.bfloat16)
        n = wmat.shape[1]
        n_pad = -(-n // 128) * 128                     # lane-dense output block
        if n_pad != n:
            wmat = jnp.pad(wmat, ((0, 0), (0, n_pad - n)))
        packed.append((wmat, gamma, beta))
    return packed


# ----------------- sub-pixel col2im for the stride-2 / pad-1 layers ----------
# oy = 2*iy + ky - 1  ->  output parity (ky+1)%2.  Per output phase the
# contributing taps and the row shift (out[j] = in[j - d]):
_TAPS_S2 = {0: ((1, 0), (3, 1)), 1: ((2, 0), (0, -1))}


def _shift(a, axis, d):
    """out[j] = a[j - d] along `axis`, zero-filled at the border (|d| <= 1)."""
    if d == 0:
        return a
    pad = [(0, 0)] * a.ndim
    pad[axis] = (d, 0) if d > 0 else (0, -d)
    padded = jnp.pad(a, pad)
    start = 0 if d > 0 else -d
    return jax.lax.slice_in_dim(padded, start, start + a.shape[axis], axis=axis)


def col2im_s2(contrib, B, Hin, Win, cout, k=KSIZE):
    """Overlap-add for ConvTranspose2d(k=4, s=2, p=1) via stride-phase
    decomposition: 12 adds at input resolution + one depth-to-space reshape."""
    c = contrib.reshape(B, Hin, Win, k, k, cout)
    rows = {}
    for py in (0, 1):
        for kx in range(k):
            rows[(py, kx)] = sum(_shift(c[:, :, :, ky, kx, :], 1, dy)
                                 for ky, dy in _TAPS_S2[py])
    phase = {}
    for py in (0, 1):
        for px in (0, 1):
            phase[(py, px)] = sum(_shift(rows[(py, kx)], 2, dx)
                                  for kx, dx in _TAPS_S2[px])
    ph = jnp.stack([jnp.stack([phase[(py, px)] for px in (0, 1)], axis=3)
                    for py in (0, 1)], axis=2)          # (B, Hin, 2, Win, 2, cout)
    return ph.reshape(B, 2 * Hin, 2 * Win, cout)


def bn_scale_shift(y, gamma, beta):
    """Training-mode BatchNorm2d (batch stats) folded to per-channel scale/shift."""
    mean = jnp.mean(y, axis=(0, 1, 2))
    var = jnp.mean(jnp.square(y - mean), axis=(0, 1, 2))
    scale = gamma * jax.lax.rsqrt(var + BN_EPS)
    shift = beta - mean * scale
    return scale.reshape(1, -1), shift.reshape(1, -1)


# --------------------------------- forward -----------------------------------
@jax.jit
def generator_forward(z, packed):
    """z: (B, LATENT) f32 -> (B, NC, 64, 64) f32 (PyTorch NCHW at the boundary)."""
    B = z.shape[0]

    # ---- layer 0: ConvTranspose2d(LATENT, 8H, 4, 1, 0) on a 1x1 input ----
    # Plain (B,16)@(16,1024) matmul (too small for a Pallas dispatch); col2im
    # on a 1x1 input with s=1, p=0 is just a reshape.
    contrib = jnp.dot(z.astype(jnp.bfloat16), packed[0][0],
                      preferred_element_type=jnp.float32)
    H = W = KSIZE
    y = contrib.reshape(B, H, W, CHANS[1])

    # ---- layers 1..4: fused (prev BN + ReLU) + ConvT matmul in Pallas ----
    # TODO(synk): the review's top structural item -- fusing the whole 5-layer
    # forward (col2im, BN batch stats, tanh) into one VMEM-resident
    # pallas_call -- is left out: the in-kernel row/lane interleave needed for
    # col2im (sub-lane scatter / depth-to-space) has no robust Mosaic lowering
    # today.  The col2im overlap-add, BN stat reductions and final
    # tanh/transpose stay in XLA (tiny tensors).
    for i in range(1, 5):
        cout = CHANS[i + 1]
        scale, shift = bn_scale_shift(y, packed[i - 1][1], packed[i - 1][2])
        contrib = fused_bn_relu_matmul(y.reshape(B * H * W, CHANS[i]),
                                       packed[i][0], scale, shift)
        contrib = contrib[:, :KSIZE * KSIZE * cout]     # drop lane pad (layer 4)
        y = col2im_s2(contrib, B, H, W, cout)
        H, W = 2 * H, 2 * W

    # ---- final Tanh + single NHWC -> NCHW transpose at the module boundary ----
    return jnp.tanh(y).transpose(0, 3, 1, 2)


# --------------------------- pure-JAX reference path -------------------------
def ref_forward(z, params):
    x = z.reshape(z.shape[0], LATENT, 1, 1)
    n_layers = len(params)
    for i, (w, gamma, beta) in enumerate(params):
        s, p, k = STRIDES[i], PADS[i], KSIZE
        wc = jnp.flip(w, axis=(2, 3)).transpose(1, 0, 2, 3)   # (Cout, Cin, k, k)
        x = jax.lax.conv_general_dilated(
            x, wc, window_strides=(1, 1),
            padding=[(k - 1 - p, k - 1 - p)] * 2,
            lhs_dilation=(s, s),
            dimension_numbers=("NCHW", "OIHW", "NCHW"))
        if i < n_layers - 1:
            mean = x.mean(axis=(0, 2, 3), keepdims=True)
            var = ((x - mean) ** 2).mean(axis=(0, 2, 3), keepdims=True)
            x = (x - mean) * jax.lax.rsqrt(var + BN_EPS)
            x = x * gamma.reshape(1, -1, 1, 1) + beta.reshape(1, -1, 1, 1)
            x = jnp.maximum(x, 0.0)
        else:
            x = jnp.tanh(x)
    return x


# ----------------------------- deterministic init ----------------------------
def init_params(key):
    keys = jax.random.split(key, 3 * len(CHANS))
    params = []
    for i in range(5):
        cin, cout = CHANS[i], CHANS[i + 1]
        w = 0.02 * jax.random.normal(keys[3 * i], (cin, cout, KSIZE, KSIZE),
                                     dtype=jnp.float32)
        if i < 4:  # BatchNorm affine params
            gamma = 1.0 + 0.1 * jax.random.normal(keys[3 * i + 1], (cout,),
                                                  dtype=jnp.float32)
            beta = 0.1 * jax.random.normal(keys[3 * i + 2], (cout,),
                                           dtype=jnp.float32)
        else:      # last layer has no BN; dummy affine (unused)
            gamma = jnp.ones((cout,), jnp.float32)
            beta = jnp.zeros((cout,), jnp.float32)
        params.append((w, gamma, beta))
    return params


if __name__ == "__main__":
    root = jax.random.PRNGKey(0)
    k_param, k_z = jax.random.split(root)
    params = init_params(k_param)
    packed = pack_params(params)          # one-time weight packing, outside jit
    z = jax.random.normal(k_z, (2, LATENT), dtype=jnp.float32)

    out = jax.block_until_ready(generator_forward(z, packed))
    assert out.shape == (2, NC, 64, 64), out.shape
    assert bool(jnp.all(jnp.isfinite(out)))

    ref = jax.block_until_ready(ref_forward(z, params))
    # bf16 MXU matmuls (f32 accumulation) vs XLA convs; f32 activations now go
    # straight into the kernel, so tolerance is tightened 5x from v2.
    np.testing.assert_allclose(np.asarray(out), np.asarray(ref),
                               atol=2e-2, rtol=0)

    print("KERNEL_OK")
</pallas_src>

<mosaic_0001>
module attributes {stable_mosaic.version = 11 : i64} {
  func.func @_bn_relu_matmul_kernel(%arg0: i32, %arg1: memref<32x64xf32, #tpu.memory_space<vmem>>, %arg2: memref<64x512xbf16, #tpu.memory_space<vmem>>, %arg3: memref<1x64xf32, #tpu.memory_space<vmem>>, %arg4: memref<1x64xf32, #tpu.memory_space<vmem>>, %arg5: memref<32x512xf32, #tpu.memory_space<vmem>>) attributes {dimension_semantics = [#tpu.dimension_semantics<parallel>], iteration_bounds = array<i64: 1>, scalar_prefetch = 0 : i64, scratch_operands = 0 : i64, tpu.core_type = #tpu.core_type<tc>, window_params = [{transform_indices = @transform_0, window_bounds = array<i64: 32, 64>}, {pipeline_mode = #tpu.pipeline_mode<synchronous>, transform_indices = @transform_1, window_bounds = array<i64: 64, 512>}, {pipeline_mode = #tpu.pipeline_mode<synchronous>, transform_indices = @transform_2, window_bounds = array<i64: 1, 64>}, {pipeline_mode = #tpu.pipeline_mode<synchronous>, transform_indices = @transform_3, window_bounds = array<i64: 1, 64>}, {transform_indices = @transform_4, window_bounds = array<i64: 32, 512>}]} {
    %c0 = arith.constant 0 : index
    %c0_0 = arith.constant 0 : index
    %0 = vector.load %arg1[%c0, %c0_0] : memref<32x64xf32, #tpu.memory_space<vmem>>, vector<32x64xf32>
    %c0_1 = arith.constant 0 : index
    %c0_2 = arith.constant 0 : index
    %1 = vector.load %arg3[%c0_1, %c0_2] : memref<1x64xf32, #tpu.memory_space<vmem>>, vector<1x64xf32>
    %2 = vector.broadcast %1 : vector<1x64xf32> to vector<32x64xf32>
    %3 = arith.mulf %0, %2 : vector<32x64xf32>
    %c0_3 = arith.constant 0 : index
    %c0_4 = arith.constant 0 : index
    %4 = vector.load %arg4[%c0_3, %c0_4] : memref<1x64xf32, #tpu.memory_space<vmem>>, vector<1x64xf32>
    %5 = vector.broadcast %4 : vector<1x64xf32> to vector<32x64xf32>
    %6 = arith.addf %3, %5 : vector<32x64xf32>
    %cst = arith.constant 0.000000e+00 : f32
    %7 = vector.broadcast %cst : f32 to vector<32x64xf32>
    %8 = arith.maximumf %6, %7 : vector<32x64xf32>
    %9 = arith.truncf %8 : vector<32x64xf32> to vector<32x64xbf16>
    %c0_5 = arith.constant 0 : index
    %c0_6 = arith.constant 0 : index
    %10 = vector.load %arg2[%c0_5, %c0_6] : memref<64x512xbf16, #tpu.memory_space<vmem>>, vector<64x512xbf16>
    %cst_7 = arith.constant dense<0.000000e+00> : vector<32x512xf32>
    %11 = tpu.matmul %9, %10, %cst_7 {dimension_numbers = #tpu.dot_dimension_numbers<[1], [0], [0], [1], [0, 0, 1, 1], [], []>} : vector<32x64xbf16>, vector<64x512xbf16>, vector<32x512xf32> -> vector<32x512xf32>
    %c0_8 = arith.constant 0 : index
    %c0_9 = arith.constant 0 : index
    %12 = vector.load %arg5[%c0_8, %c0_9] : memref<32x512xf32, #tpu.memory_space<vmem>>, vector<32x512xf32>
    tpu.vector_store %arg5[%c0_8, %c0_9], %11 {strides = array<i32>} : memref<32x512xf32, #tpu.memory_space<vmem>>, vector<32x512xf32>,
    return
  }
  func.func @transform_0(%arg0: i32) -> (i32, i32) {
    %c0_i32 = arith.constant 0 : i32
    %c0_i32_0 = arith.constant 0 : i32
    return %arg0, %c0_i32 : i32, i32
  }
  func.func @transform_1(%arg0: i32) -> (i32, i32) {
    %c0_i32 = arith.constant 0 : i32
    %c0_i32_0 = arith.constant 0 : i32
    %c0_i32_1 = arith.constant 0 : i32
    return %c0_i32, %c0_i32_0 : i32, i32
  }
  func.func @transform_2(%arg0: i32) -> (i32, i32) {
    %c0_i32 = arith.constant 0 : i32
    %c0_i32_0 = arith.constant 0 : i32
    %c0_i32_1 = arith.constant 0 : i32
    return %c0_i32, %c0_i32_0 : i32, i32
  }
  func.func @transform_3(%arg0: i32) -> (i32, i32) {
    %c0_i32 = arith.constant 0 : i32
    %c0_i32_0 = arith.constant 0 : i32
    %c0_i32_1 = arith.constant 0 : i32
    return %c0_i32, %c0_i32_0 : i32, i32
  }
  func.func @transform_4(%arg0: i32) -> (i32, i32) {
    %c0_i32 = arith.constant 0 : i32
    %c0_i32_0 = arith.constant 0 : i32
    return %arg0, %c0_i32 : i32, i32
  }
}

module attributes {stable_mosaic.version = 11 : i64} {
  func.func @_bn_relu_matmul_kernel(%arg0: i32, %arg1: memref<128x32xf32, #tpu.memory_space<vmem>>, %arg2: memref<32x256xbf16, #tpu.memory_space<vmem>>, %arg3: memref<1x32xf32, #tpu.memory_space<vmem>>, %arg4: memref<1x32xf32, #tpu.memory_space<vmem>>, %arg5: memref<128x256xf32, #tpu.memory_space<vmem>>) attributes {dimension_semantics = [#tpu.dimension_semantics<parallel>], iteration_bounds = array<i64: 1>, scalar_prefetch = 0 : i64, scratch_operands = 0 : i64, tpu.core_type = #tpu.core_type<tc>, window_params = [{transform_indices = @transform_0, window_bounds = array<i64: 128, 32>}, {pipeline_mode = #tpu.pipeline_mode<synchronous>, transform_indices = @transform_1, window_bounds = array<i64: 32, 256>}, {pipeline_mode = #tpu.pipeline_mode<synchronous>, transform_indices = @transform_2, window_bounds = array<i64: 1, 32>}, {pipeline_mode = #tpu.pipeline_mode<synchronous>, transform_indices = @transform_3, window_bounds = array<i64: 1, 32>}, {transform_indices = @transform_4, window_bounds = array<i64: 128, 256>}]} {
    %c0 = arith.constant 0 : index
    %c0_0 = arith.constant 0 : index
    %0 = vector.load %arg1[%c0, %c0_0] : memref<128x32xf32, #tpu.memory_space<vmem>>, vector<128x32xf32>
    %c0_1 = arith.constant 0 : index
    %c0_2 = arith.constant 0 : index
    %1 = vector.load %arg3[%c0_1, %c0_2] : memref<1x32xf32, #tpu.memory_space<vmem>>, vector<1x32xf32>
    %2 = vector.broadcast %1 : vector<1x32xf32> to vector<128x32xf32>
    %3 = arith.mulf %0, %2 : vector<128x32xf32>
    %c0_3 = arith.constant 0 : index
    %c0_4 = arith.constant 0 : index
    %4 = vector.load %arg4[%c0_3, %c0_4] : memref<1x32xf32, #tpu.memory_space<vmem>>, vector<1x32xf32>
    %5 = vector.broadcast %4 : vector<1x32xf32> to vector<128x32xf32>
    %6 = arith.addf %3, %5 : vector<128x32xf32>
    %cst = arith.constant 0.000000e+00 : f32
    %7 = vector.broadcast %cst : f32 to vector<128x32xf32>
    %8 = arith.maximumf %6, %7 : vector<128x32xf32>
    %9 = arith.truncf %8 : vector<128x32xf32> to vector<128x32xbf16>
    %c0_5 = arith.constant 0 : index
    %c0_6 = arith.constant 0 : index
    %10 = vector.load %arg2[%c0_5, %c0_6] : memref<32x256xbf16, #tpu.memory_space<vmem>>, vector<32x256xbf16>
    %cst_7 = arith.constant dense<0.000000e+00> : vector<128x256xf32>
    %11 = tpu.matmul %9, %10, %cst_7 {dimension_numbers = #tpu.dot_dimension_numbers<[1], [0], [0], [1], [0, 0, 1, 1], [], []>} : vector<128x32xbf16>, vector<32x256xbf16>, vector<128x256xf32> -> vector<128x256xf32>
    %c0_8 = arith.constant 0 : index
    %c0_9 = arith.constant 0 : index
    %12 = vector.load %arg5[%c0_8, %c0_9] : memref<128x256xf32, #tpu.memory_space<vmem>>, vector<128x256xf32>
    tpu.vector_store %arg5[%c0_8, %c0_9], %11 {strides = array<i32>} : memref<128x256xf32, #tpu.memory_space<vmem>>, vector<128x256xf32>,
    return
  }
  func.func @transform_0(%arg0: i32) -> (i32, i32) {
    %c0_i32 = arith.constant 0 : i32
    %c0_i32_0 = arith.constant 0 : i32
    return %arg0, %c0_i32 : i32, i32
  }
  func.func @transform_1(%arg0: i32) -> (i32, i32) {
    %c0_i32 = arith.constant 0 : i32
    %c0_i32_0 = arith.constant 0 : i32
    %c0_i32_1 = arith.constant 0 : i32
    return %c0_i32, %c0_i32_0 : i32, i32
  }
  func.func @transform_2(%arg0: i32) -> (i32, i32) {
    %c0_i32 = arith.constant 0 : i32
    %c0_i32_0 = arith.constant 0 : i32
    %c0_i32_1 = arith.constant 0 : i32
    return %c0_i32, %c0_i32_0 : i32, i32
  }
  func.func @transform_3(%arg0: i32) -> (i32, i32) {
    %c0_i32 = arith.constant 0 : i32
    %c0_i32_0 = arith.constant 0 : i32
    %c0_i32_1 = arith.constant 0 : i32
    return %c0_i32, %c0_i32_0 : i32, i32
  }
  func.func @transform_4(%arg0: i32) -> (i32, i32) {
    %c0_i32 = arith.constant 0 : i32
    %c0_i32_0 = arith.constant 0 : i32
    return %arg0, %c0_i32 : i32, i32
  }
}

module attributes {stable_mosaic.version = 11 : i64} {
  func.func @_bn_relu_matmul_kernel(%arg0: i32, %arg1: memref<512x16xf32, #tpu.memory_space<vmem>>, %arg2: memref<16x128xbf16, #tpu.memory_space<vmem>>, %arg3: memref<1x16xf32, #tpu.memory_space<vmem>>, %arg4: memref<1x16xf32, #tpu.memory_space<vmem>>, %arg5: memref<512x128xf32, #tpu.memory_space<vmem>>) attributes {dimension_semantics = [#tpu.dimension_semantics<parallel>], iteration_bounds = array<i64: 1>, scalar_prefetch = 0 : i64, scratch_operands = 0 : i64, tpu.core_type = #tpu.core_type<tc>, window_params = [{transform_indices = @transform_0, window_bounds = array<i64: 512, 16>}, {pipeline_mode = #tpu.pipeline_mode<synchronous>, transform_indices = @transform_1, window_bounds = array<i64: 16, 128>}, {pipeline_mode = #tpu.pipeline_mode<synchronous>, transform_indices = @transform_2, window_bounds = array<i64: 1, 16>}, {pipeline_mode = #tpu.pipeline_mode<synchronous>, transform_indices = @transform_3, window_bounds = array<i64: 1, 16>}, {transform_indices = @transform_4, window_bounds = array<i64: 512, 128>}]} {
    %c0 = arith.constant 0 : index
    %c0_0 = arith.constant 0 : index
    %0 = vector.load %arg1[%c0, %c0_0] : memref<512x16xf32, #tpu.memory_space<vmem>>, vector<512x16xf32>
    %c0_1 = arith.constant 0 : index
    %c0_2 = arith.constant 0 : index
    %1 = vector.load %arg3[%c0_1, %c0_2] : memref<1x16xf32, #tpu.memory_space<vmem>>, vector<1x16xf32>
    %2 = vector.broadcast %1 : vector<1x16xf32> to vector<512x16xf32>
    %3 = arith.mulf %0, %2 : vector<512x16xf32>
    %c0_3 = arith.constant 0 : index
    %c0_4 = arith.constant 0 : index
    %4 = vector.load %arg4[%c0_3, %c0_4] : memref<1x16xf32, #tpu.memory_space<vmem>>, vector<1x16xf32>
    %5 = vector.broadcast %4 : vector<1x16xf32> to vector<512x16xf32>
    %6 = arith.addf %3, %5 : vector<512x16xf32>
    %cst = arith.constant 0.000000e+00 : f32
    %7 = vector.broadcast %cst : f32 to vector<512x16xf32>
    %8 = arith.maximumf %6, %7 : vector<512x16xf32>
    %9 = arith.truncf %8 : vector<512x16xf32> to vector<512x16xbf16>
    %c0_5 = arith.constant 0 : index
    %c0_6 = arith.constant 0 : index
    %10 = vector.load %arg2[%c0_5, %c0_6] : memref<16x128xbf16, #tpu.memory_space<vmem>>, vector<16x128xbf16>
    %cst_7 = arith.constant dense<0.000000e+00> : vector<512x128xf32>
    %11 = tpu.matmul %9, %10, %cst_7 {dimension_numbers = #tpu.dot_dimension_numbers<[1], [0], [0], [1], [0, 0, 1, 1], [], []>} : vector<512x16xbf16>, vector<16x128xbf16>, vector<512x128xf32> -> vector<512x128xf32>
    %c0_8 = arith.constant 0 : index
    %c0_9 = arith.constant 0 : index
    %12 = vector.load %arg5[%c0_8, %c0_9] : memref<512x128xf32, #tpu.memory_space<vmem>>, vector<512x128xf32>
    tpu.vector_store %arg5[%c0_8, %c0_9], %11 {strides = array<i32>} : memref<512x128xf32, #tpu.memory_space<vmem>>, vector<512x128xf32>,
    return
  }
  func.func @transform_0(%arg0: i32) -> (i32, i32) {
    %c0_i32 = arith.constant 0 : i32
    %c0_i32_0 = arith.constant 0 : i32
    return %arg0, %c0_i32 : i32, i32
  }
  func.func @transform_1(%arg0: i32) -> (i32, i32) {
    %c0_i32 = arith.constant 0 : i32
    %c0_i32_0 = arith.constant 0 : i32
    %c0_i32_1 = arith.constant 0 : i32
    return %c0_i32, %c0_i32_0 : i32, i32
  }
  func.func @transform_2(%arg0: i32) -> (i32, i32) {
    %c0_i32 = arith.constant 0 : i32
    %c0_i32_0 = arith.constant 0 : i32
    %c0_i32_1 = arith.constant 0 : i32
    return %c0_i32, %c0_i32_0 : i32, i32
  }
  func.func @transform_3(%arg0: i32) -> (i32, i32) {
    %c0_i32 = arith.constant 0 : i32
    %c0_i32_0 = arith.constant 0 : i32
    %c0_i32_1 = arith.constant 0 : i32
    return %c0_i32, %c0_i32_0 : i32, i32
  }
  func.func @transform_4(%arg0: i32) -> (i32, i32) {
    %c0_i32 = arith.constant 0 : i32
    %c0_i32_0 = arith.constant 0 : i32
    return %arg0, %c0_i32 : i32, i32
  }
}

module attributes {stable_mosaic.version = 11 : i64} {
  func.func @_bn_relu_matmul_kernel(%arg0: i32, %arg1: memref<2048x8xf32, #tpu.memory_space<vmem>>, %arg2: memref<8x128xbf16, #tpu.memory_space<vmem>>, %arg3: memref<1x8xf32, #tpu.memory_space<vmem>>, %arg4: memref<1x8xf32, #tpu.memory_space<vmem>>, %arg5: memref<2048x128xf32, #tpu.memory_space<vmem>>) attributes {dimension_semantics = [#tpu.dimension_semantics<parallel>], iteration_bounds = array<i64: 1>, scalar_prefetch = 0 : i64, scratch_operands = 0 : i64, tpu.core_type = #tpu.core_type<tc>, window_params = [{transform_indices = @transform_0, window_bounds = array<i64: 2048, 8>}, {pipeline_mode = #tpu.pipeline_mode<synchronous>, transform_indices = @transform_1, window_bounds = array<i64: 8, 128>}, {pipeline_mode = #tpu.pipeline_mode<synchronous>, transform_indices = @transform_2, window_bounds = array<i64: 1, 8>}, {pipeline_mode = #tpu.pipeline_mode<synchronous>, transform_indices = @transform_3, window_bounds = array<i64: 1, 8>}, {transform_indices = @transform_4, window_bounds = array<i64: 2048, 128>}]} {
    %c0 = arith.constant 0 : index
    %c0_0 = arith.constant 0 : index
    %0 = vector.load %arg1[%c0, %c0_0] : memref<2048x8xf32, #tpu.memory_space<vmem>>, vector<2048x8xf32>
    %c0_1 = arith.constant 0 : index
    %c0_2 = arith.constant 0 : index
    %1 = vector.load %arg3[%c0_1, %c0_2] : memref<1x8xf32, #tpu.memory_space<vmem>>, vector<1x8xf32>
    %2 = vector.broadcast %1 : vector<1x8xf32> to vector<2048x8xf32>
    %3 = arith.mulf %0, %2 : vector<2048x8xf32>
    %c0_3 = arith.constant 0 : index
    %c0_4 = arith.constant 0 : index
    %4 = vector.load %arg4[%c0_3, %c0_4] : memref<1x8xf32, #tpu.memory_space<vmem>>, vector<1x8xf32>
    %5 = vector.broadcast %4 : vector<1x8xf32> to vector<2048x8xf32>
    %6 = arith.addf %3, %5 : vector<2048x8xf32>
    %cst = arith.constant 0.000000e+00 : f32
    %7 = vector.broadcast %cst : f32 to vector<2048x8xf32>
    %8 = arith.maximumf %6, %7 : vector<2048x8xf32>
    %9 = arith.truncf %8 : vector<2048x8xf32> to vector<2048x8xbf16>
    %c0_5 = arith.constant 0 : index
    %c0_6 = arith.constant 0 : index
    %10 = vector.load %arg2[%c0_5, %c0_6] : memref<8x128xbf16, #tpu.memory_space<vmem>>, vector<8x128xbf16>
    %cst_7 = arith.constant dense<0.000000e+00> : vector<2048x128xf32>
    %11 = tpu.matmul %9, %10, %cst_7 {dimension_numbers = #tpu.dot_dimension_numbers<[1], [0], [0], [1], [0, 0, 1, 1], [], []>} : vector<2048x8xbf16>, vector<8x128xbf16>, vector<2048x128xf32> -> vector<2048x128xf32>
    %c0_8 = arith.constant 0 : index
    %c0_9 = arith.constant 0 : index
    %12 = vector.load %arg5[%c0_8, %c0_9] : memref<2048x128xf32, #tpu.memory_space<vmem>>, vector<2048x128xf32>
    tpu.vector_store %arg5[%c0_8, %c0_9], %11 {strides = array<i32>} : memref<2048x128xf32, #tpu.memory_space<vmem>>, vector<2048x128xf32>,
    return
  }
  func.func @transform_0(%arg0: i32) -> (i32, i32) {
    %c0_i32 = arith.constant 0 : i32
    %c0_i32_0 = arith.constant 0 : i32
    return %arg0, %c0_i32 : i32, i32
  }
  func.func @transform_1(%arg0: i32) -> (i32, i32) {
    %c0_i32 = arith.constant 0 : i32
    %c0_i32_0 = arith.constant 0 : i32
    %c0_i32_1 = arith.constant 0 : i32
    return %c0_i32, %c0_i32_0 : i32, i32
  }
  func.func @transform_2(%arg0: i32) -> (i32, i32) {
    %c0_i32 = arith.constant 0 : i32
    %c0_i32_0 = arith.constant 0 : i32
    %c0_i32_1 = arith.constant 0 : i32
    return %c0_i32, %c0_i32_0 : i32, i32
  }
  func.func @transform_3(%arg0: i32) -> (i32, i32) {
    %c0_i32 = arith.constant 0 : i32
    %c0_i32_0 = arith.constant 0 : i32
    %c0_i32_1 = arith.constant 0 : i32
    return %c0_i32, %c0_i32_0 : i32, i32
  }
  func.func @transform_4(%arg0: i32) -> (i32, i32) {
    %c0_i32 = arith.constant 0 : i32
    %c0_i32_0 = arith.constant 0 : i32
    return %arg0, %c0_i32 : i32, i32
  }
}

</mosaic_0001>

<llo_original>
// kernel: generator_forward.4
$region0: #{generator_forward.4}
  #allocation0 [shape = 'u32[]', space=smem, size = 0x4, offset = 0x4, fixed_abs, tag = 'smem constant byte address 0x4 - core index']
  #allocation1 [shape = 'u32[72,128]{1,0:T(1,128)}', space=vmem, size = 0x9000, scoped, tag = 'internal scratch']
  %s0 = inlined_call_operand.vmem [shape: f32[32,64], index: 0, kind: input, shape index: {}]
  %s1 = inlined_call_operand.hbm [shape: bf16[64,512], index: 1, kind: input, shape index: {}]
  %s2 = inlined_call_operand.vmem [shape: f32[1,64], index: 2, kind: input, shape index: {}]
  %s3 = inlined_call_operand.vmem [shape: f32[1,64], index: 3, kind: input, shape index: {}]
  %s4 = inlined_call_operand.vmem [shape: f32[32,512], index: 4, kind: output, shape index: {}]
  %s5 = sld [smem:[#allocation0]]
  $region30: #{generator_forward.4} parent=0
    _
  %s7 = ssub.s32 1, %s5
  %s8 = scalar_select 0, %s7, %s5
  $region1: #{generator_forward.4} parent=0
    #allocation2 [shape = 'u8[65536]{0}', space=vmem, size = 0x10000, scoped, tag = 'input window, operand 1, single buffered']
    #allocation3 [shape = 's32[1]{0}', space=sflag, size = 0x4, scoped, tag = 'scoped memory for generator_forward.4']
    %9 = vsyncpa [#allocation3], 0
    // Predicated region
    $region2: #{generator_forward.4} parent=1 // pred_check
      _
    $region3: #{generator_forward.4} parent=1 // pred_check_branch
      %11 = sbr.rel (0) target = $region5
    $region4: #{generator_forward.4} parent=1 // pred_region
      _
    $region5: #{generator_forward.4} parent=1 // pred_fallthru
      _
    // Predicated region
    $region6: #{generator_forward.4} parent=1 // pred_check
      _
    $region7: #{generator_forward.4} parent=1 // pred_check_branch
      %13 = sbr.rel (0) target = $region9
    $region8: #{generator_forward.4} parent=1 // pred_region
      %15 = vsyncadd [#allocation3], 0
      %s16 = sshll.u32 %s1, 4
      %s17 = int_to_ptr.hbm [resolvable:$true] %s16
      %s18 = sshll.u32 [#allocation2], 4
      %s19 = int_to_ptr.vmem [resolvable:$true] %s18
      %24 = dma.hbm_to_vmem [thread:$0]  %s17, 2048, %s19, [#allocation3], 256, 256, 16
    $region9: #{generator_forward.4} parent=1 // pred_fallthru
      _
    // Predicated region
    $region10: #{generator_forward.4} parent=1 // pred_check
      _
    $region11: #{generator_forward.4} parent=1 // pred_check_branch
      %26 = sbr.rel (0) target = $region13
    $region12: #{generator_forward.4} parent=1 // pred_region
      _
    $region13: #{generator_forward.4} parent=1 // pred_fallthru
      _
    // Predicated region
    $region14: #{generator_forward.4} parent=1 // pred_check
      _
    $region15: #{generator_forward.4} parent=1 // pred_check_branch
      %28 = sbr.rel (0) target = $region17
    $region16: #{generator_forward.4} parent=1 // pred_region
      _
    $region17: #{generator_forward.4} parent=1 // pred_fallthru
      _
    // Predicated region
    $region18: #{generator_forward.4} parent=1 // pred_check
      _
    $region19: #{generator_forward.4} parent=1 // pred_check_branch
      %30 = sbr.rel (0) target = $region21
    $region20: #{generator_forward.4} parent=1 // pred_region
      %32 = dma.done [#allocation3], 2048
    $region21: #{generator_forward.4} parent=1 // pred_fallthru
      _
    %v34 = vld [vmem:[%s0] sm:$0xff]
    %v35 = vld [vmem:[%s0 + $0x8] sm:$0xff]
    %v36 = vld [vmem:[%s0 + $0x10] sm:$0xff]
    %v37 = vld [vmem:[%s0 + $0x18] sm:$0xff]
    %v38 = vld [vmem:[%s2] sm:$0x1]
    %v40 = vperm.slane %v38, 0
    %v42 = vmul.f32 %v34, %v40
    %v43 = vmul.f32 %v35, %v40
    %v44 = vmul.f32 %v36, %v40
    %v45 = vmul.f32 %v37, %v40
    %v46 = vld [vmem:[%s3] sm:$0x1]
    %v48 = vperm.slane %v46, 0
    %v50 = vadd.f32 %v42, %v48
    %v51 = vadd.f32 %v43, %v48
    %v52 = vadd.f32 %v44, %v48
    %v53 = vadd.f32 %v45, %v48
    %v54 = vmax.f32 %v50, 0.0
    %v55 = vmax.f32 %v51, 0.0
    %v56 = vmax.f32 %v52, 0.0
    %v57 = vmax.f32 %v53, 0.0
    %v58 = vpack.c.bf16 %v55, %v54
    %v59 = vpack.c.bf16 %v57, %v56
    %v60 = vld [vmem:[#allocation2] sm:$0xff]
    %v61 = vld [vmem:[#allocation2 + $0x8] sm:$0xff]
    %v62 = vld [vmem:[#allocation2 + $0x10] sm:$0xff]
    %v63 = vld [vmem:[#allocation2 + $0x18] sm:$0xff]
    %v64 = vld [vmem:[#allocation2 + $0x20] sm:$0xff]
    %v65 = vld [vmem:[#allocation2 + $0x28] sm:$0xff]
    %v66 = vld [vmem:[#allocation2 + $0x30] sm:$0xff]
    %v67 = vld [vmem:[#allocation2 + $0x38] sm:$0xff]
    %v68 = vld [vmem:[#allocation2 + $0x40] sm:$0xff]
    %v69 = vld [vmem:[#allocation2 + $0x48] sm:$0xff]
    %v70 = vld [vmem:[#allocation2 + $0x50] sm:$0xff]
    %v71 = vld [vmem:[#allocation2 + $0x58] sm:$0xff]
    %v72 = vld [vmem:[#allocation2 + $0x60] sm:$0xff]
    %v73 = vld [vmem:[#allocation2 + $0x68] sm:$0xff]
    %v74 = vld [vmem:[#allocation2 + $0x70] sm:$0xff]
    %v75 = vld [vmem:[#allocation2 + $0x78] sm:$0xff]
    %v92 = vunpack.c.l.b16 %v60
    %v93 = vunpack.c.h.b16 %v60
    %v94 = vunpack.c.l.b16 %v61
    %v95 = vunpack.c.h.b16 %v61
    %v96 = vunpack.c.l.b16 %v62
    %v97 = vunpack.c.h.b16 %v62
    %v98 = vunpack.c.l.b16 %v63
    %v99 = vunpack.c.h.b16 %v63
    %v100 = vunpack.c.l.b16 %v64
    %v101 = vunpack.c.h.b16 %v64
    %v102 = vunpack.c.l.b16 %v65
    %v103 = vunpack.c.h.b16 %v65
    %v104 = vunpack.c.l.b16 %v66
    %v105 = vunpack.c.h.b16 %v66
    %v106 = vunpack.c.l.b16 %v67
    %v107 = vunpack.c.h.b16 %v67
    %v108 = vunpack.c.l.b16 %v68
    %v109 = vunpack.c.h.b16 %v68
    %v110 = vunpack.c.l.b16 %v69
    %v111 = vunpack.c.h.b16 %v69
    %v112 = vunpack.c.l.b16 %v70
    %v113 = vunpack.c.h.b16 %v70
    %v114 = vunpack.c.l.b16 %v71
    %v115 = vunpack.c.h.b16 %v71
    %v116 = vunpack.c.l.b16 %v72
    %v117 = vunpack.c.h.b16 %v72
    %v118 = vunpack.c.l.b16 %v73
    %v119 = vunpack.c.h.b16 %v73
    %v120 = vunpack.c.l.b16 %v74
    %v121 = vunpack.c.h.b16 %v74
    %v122 = vunpack.c.l.b16 %v75
    %v123 = vunpack.c.h.b16 %v75
    %v124 = vpack.c.b16 %v96, %v92
    %v125 = vpack.c.b16 %v97, %v93
    %v126 = vpack.c.b16 %v98, %v94
    %v127 = vpack.c.b16 %v99, %v95
    %v128 = vpack.c.b16 %v104, %v100
    %v129 = vpack.c.b16 %v105, %v101
    %v130 = vpack.c.b16 %v106, %v102
    %v131 = vpack.c.b16 %v107, %v103
    %v132 = vpack.c.b16 %v112, %v108
    %v133 = vpack.c.b16 %v113, %v109
    %v134 = vpack.c.b16 %v114, %v110
    %v135 = vpack.c.b16 %v115, %v111
    %v136 = vpack.c.b16 %v120, %v116
    %v137 = vpack.c.b16 %v121, %v117
    %v138 = vpack.c.b16 %v122, %v118
    %v139 = vpack.c.b16 %v123, %v119
    %vm156 = vcmask 523264
    %v158 = vsel %vm156, %v58, 0
    %v161 = vsel %vm156, %v59, 0
    %163 = vmatpush.bf16.msra.mxu0 0
    %164 = vmatpush.bf16.msra.mxu0 0
    %165 = vmatpush.bf16.msra.mxu0 0
    %166 = vmatpush.bf16.msra.mxu0 0
    %167 = vmatpush.bf16.msra.mxu0 %v136
    %168 = vmatpush.bf16.msra.mxu0 %v132
    %169 = vmatpush.bf16.msra.mxu0 %v128
    %170 = vmatpush.bf16.msra.mxu0 %v124
    %171 = vmatmul.bf16.gmra.mxu0 %v158
    %v172 = vpop.f32.mrf.mxu0
    %v173 = vadd.f32 0.0, %v172
    %v174 = vpop.f32.mrf.mxu0
    %v175 = vadd.f32 0.0, %v174
    %176 = vmatmul.bf16.gmra.mxu0 %v161
    %v177 = vpop.f32.mrf.mxu0
    %v178 = vadd.f32 0.0, %v177
    %v179 = vpop.f32.mrf.mxu0
    %v180 = vadd.f32 0.0, %v179
    %181 = vdwg.mxu0
    %182 = vmatpush.bf16.msra.mxu0 0
    %183 = vmatpush.bf16.msra.mxu0 0
    %184 = vmatpush.bf16.msra.mxu0 0
    %185 = vmatpush.bf16.msra.mxu0 0
    %186 = vmatpush.bf16.msra.mxu0 %v137
    %187 = vmatpush.bf16.msra.mxu0 %v133
    %188 = vmatpush.bf16.msra.mxu0 %v129
    %189 = vmatpush.bf16.msra.mxu0 %v125
    %190 = vmatmul.bf16.gmra.mxu0 %v158
    %v191 = vpop.f32.mrf.mxu0
    %v192 = vadd.f32 0.0, %v191
    %v193 = vpop.f32.mrf.mxu0
    %v194 = vadd.f32 0.0, %v193
    %195 = vmatmul.bf16.gmra.mxu0 %v161
    %v196 = vpop.f32.mrf.mxu0
    %v197 = vadd.f32 0.0, %v196
    %v198 = vpop.f32.mrf.mxu0
    %v199 = vadd.f32 0.0, %v198
    %200 = vdwg.mxu0
    %201 = vmatpush.bf16.msra.mxu0 0
    %202 = vmatpush.bf16.msra.mxu0 0
    %203 = vmatpush.bf16.msra.mxu0 0
    %204 = vmatpush.bf16.msra.mxu0 0
    %205 = vmatpush.bf16.msra.mxu0 %v138
    %206 = vmatpush.bf16.msra.mxu0 %v134
    %207 = vmatpush.bf16.msra.mxu0 %v130
    %208 = vmatpush.bf16.msra.mxu0 %v126
    %209 = vmatmul.bf16.gmra.mxu0 %v158
    %v210 = vpop.f32.mrf.mxu0
    %v211 = vadd.f32 0.0, %v210
    %v212 = vpop.f32.mrf.mxu0
    %v213 = vadd.f32 0.0, %v212
    %214 = vmatmul.bf16.gmra.mxu0 %v161
    %v215 = vpop.f32.mrf.mxu0
    %v216 = vadd.f32 0.0, %v215
    %v217 = vpop.f32.mrf.mxu0
    %v218 = vadd.f32 0.0, %v217
    %219 = vdwg.mxu0
    %220 = vmatpush.bf16.msra.mxu0 0
    %221 = vmatpush.bf16.msra.mxu0 0
    %222 = vmatpush.bf16.msra.mxu0 0
    %223 = vmatpush.bf16.msra.mxu0 0
    %224 = vmatpush.bf16.msra.mxu0 %v139
    %225 = vmatpush.bf16.msra.mxu0 %v135
    %226 = vmatpush.bf16.msra.mxu0 %v131
    %227 = vmatpush.bf16.msra.mxu0 %v127
    %228 = vmatmul.bf16.gmra.mxu0 %v158
    %v229 = vpop.f32.mrf.mxu0
    %v230 = vadd.f32 0.0, %v229
    %v231 = vpop.f32.mrf.mxu0
    %v232 = vadd.f32 0.0, %v231
    %233 = vmatmul.bf16.gmra.mxu0 %v161
    %v234 = vpop.f32.mrf.mxu0
    %v235 = vadd.f32 0.0, %v234
    %v236 = vpop.f32.mrf.mxu0
    %v237 = vadd.f32 0.0, %v236
    %238 = vdwg.mxu0
    %239 = vst [vmem:[%s4] sm:$0xff] %v173
    %240 = vst [vmem:[%s4 + $0x8] sm:$0xff] %v192
    %241 = vst [vmem:[%s4 + $0x10] sm:$0xff] %v211
    %242 = vst [vmem:[%s4 + $0x18] sm:$0xff] %v230
    %243 = vst [vmem:[%s4 + $0x20] sm:$0xff] %v175
    %244 = vst [vmem:[%s4 + $0x28] sm:$0xff] %v194
    %245 = vst [vmem:[%s4 + $0x30] sm:$0xff] %v213
    %246 = vst [vmem:[%s4 + $0x38] sm:$0xff] %v232
    %247 = vst [vmem:[%s4 + $0x40] sm:$0xff] %v178
    %248 = vst [vmem:[%s4 + $0x48] sm:$0xff] %v197
    %249 = vst [vmem:[%s4 + $0x50] sm:$0xff] %v216
    %250 = vst [vmem:[%s4 + $0x58] sm:$0xff] %v235
    %251 = vst [vmem:[%s4 + $0x60] sm:$0xff] %v180
    %252 = vst [vmem:[%s4 + $0x68] sm:$0xff] %v199
    %253 = vst [vmem:[%s4 + $0x70] sm:$0xff] %v218
    %254 = vst [vmem:[%s4 + $0x78] sm:$0xff] %v237
    // Predicated region
    $region22: #{generator_forward.4} parent=1 // pred_check
      _
    $region23: #{generator_forward.4} parent=1 // pred_check_branch
      %256 = sbr.rel (0) target = $region25
    $region24: #{generator_forward.4} parent=1 // pred_region
      _
    $region25: #{generator_forward.4} parent=1 // pred_fallthru
      _
    // Predicated region
    $region26: #{generator_forward.4} parent=1 // pred_check
      _
    $region27: #{generator_forward.4} parent=1 // pred_check_branch
      %258 = sbr.rel (0) target = $region29
    $region28: #{generator_forward.4} parent=1 // pred_region
      _
    $region29: #{generator_forward.4} parent=1 // pred_fallthru
      _
    %259 = vsyncpa [#allocation3], 1

// kernel: generator_forward.5
$region0: #{generator_forward.5}
  #allocation0 [shape = 'u32[]', space=smem, size = 0x4, offset = 0x4, fixed_abs, tag = 'smem constant byte address 0x4 - core index']
  #allocation1 [shape = 'u32[72,128]{1,0:T(1,128)}', space=vmem, size = 0x9000, scoped, tag = 'internal scratch']
  %s0 = inlined_call_operand.vmem [shape: f32[128,32], index: 0, kind: input, shape index: {}]
  %s1 = inlined_call_operand.vmem [shape: bf16[32,256], index: 1, kind: input, shape index: {}]
  %s2 = inlined_call_operand.vmem [shape: f32[1,32], index: 2, kind: input, shape index: {}]
  %s3 = inlined_call_operand.vmem [shape: f32[1,32], index: 3, kind: input, shape index: {}]
  %s4 = inlined_call_operand.vmem [shape: f32[128,256], index: 4, kind: output, shape index: {}]
  %s5 = sld [smem:[#allocation0]]
  $region26: #{generator_forward.5} parent=0
    _
  %s7 = ssub.s32 1, %s5
  %s8 = scalar_select 0, %s7, %s5
  // Predicated region
  $region2: #{generator_forward.5} parent=0 // pred_check
    _
  $region3: #{generator_forward.5} parent=0 // pred_check_branch
    %10 = sbr.rel (0) target = $region5
  $region4: #{generator_forward.5} parent=0 // pred_region
    _
  $region5: #{generator_forward.5} parent=0 // pred_fallthru
    _
  // Predicated region
  $region6: #{generator_forward.5} parent=0 // pred_check
    _
  $region7: #{generator_forward.5} parent=0 // pred_check_branch
    %12 = sbr.rel (0) target = $region9
  $region8: #{generator_forward.5} parent=0 // pred_region
    _
  $region9: #{generator_forward.5} parent=0 // pred_fallthru
    _
  // Predicated region
  $region10: #{generator_forward.5} parent=0 // pred_check
    _
  $region11: #{generator_forward.5} parent=0 // pred_check_branch
    %14 = sbr.rel (0) target = $region13
  $region12: #{generator_forward.5} parent=0 // pred_region
    _
  $region13: #{generator_forward.5} parent=0 // pred_fallthru
    _
  // Predicated region
  $region14: #{generator_forward.5} parent=0 // pred_check
    _
  $region15: #{generator_forward.5} parent=0 // pred_check_branch
    %16 = sbr.rel (0) target = $region17
  $region16: #{generator_forward.5} parent=0 // pred_region
    _
  $region17: #{generator_forward.5} parent=0 // pred_fallthru
    _
  %v18 = vld [vmem:[%s0] sm:$0xff]
  %v19 = vld [vmem:[%s0 + $0x8] sm:$0xff]
  %v20 = vld [vmem:[%s0 + $0x10] sm:$0xff]
  %v21 = vld [vmem:[%s0 + $0x18] sm:$0xff]
  %v22 = vld [vmem:[%s0 + $0x20] sm:$0xff]
  %v23 = vld [vmem:[%s0 + $0x28] sm:$0xff]
  %v24 = vld [vmem:[%s0 + $0x30] sm:$0xff]
  %v25 = vld [vmem:[%s0 + $0x38] sm:$0xff]
  %v26 = vld [vmem:[%s0 + $0x40] sm:$0xff]
  %v27 = vld [vmem:[%s0 + $0x48] sm:$0xff]
  %v28 = vld [vmem:[%s0 + $0x50] sm:$0xff]
  %v29 = vld [vmem:[%s0 + $0x58] sm:$0xff]
  %v30 = vld [vmem:[%s0 + $0x60] sm:$0xff]
  %v31 = vld [vmem:[%s0 + $0x68] sm:$0xff]
  %v32 = vld [vmem:[%s0 + $0x70] sm:$0xff]
  %v33 = vld [vmem:[%s0 + $0x78] sm:$0xff]
  %v34 = vld [vmem:[%s2] sm:$0x1]
  %v36 = vperm.slane %v34, 0
  %v38 = vmul.f32 %v18, %v36
  %v39 = vmul.f32 %v19, %v36
  %v40 = vmul.f32 %v20, %v36
  %v41 = vmul.f32 %v21, %v36
  %v42 = vmul.f32 %v22, %v36
  %v43 = vmul.f32 %v23, %v36
  %v44 = vmul.f32 %v24, %v36
  %v45 = vmul.f32 %v25, %v36
  %v46 = vmul.f32 %v26, %v36
  %v47 = vmul.f32 %v27, %v36
  %v48 = vmul.f32 %v28, %v36
  %v49 = vmul.f32 %v29, %v36
  %v50 = vmul.f32 %v30, %v36
  %v51 = vmul.f32 %v31, %v36
  %v52 = vmul.f32 %v32, %v36
  %v53 = vmul.f32 %v33, %v36
  %v54 = vld [vmem:[%s3] sm:$0x1]
  %v56 = vperm.slane %v54, 0
  %v58 = vadd.f32 %v38, %v56
  %v59 = vadd.f32 %v39, %v56
  %v60 = vadd.f32 %v40, %v56
  %v61 = vadd.f32 %v41, %v56
  %v62 = vadd.f32 %v42, %v56
  %v63 = vadd.f32 %v43, %v56
  %v64 = vadd.f32 %v44, %v56
  %v65 = vadd.f32 %v45, %v56
  %v66 = vadd.f32 %v46, %v56
  %v67 = vadd.f32 %v47, %v56
  %v68 = vadd.f32 %v48, %v56
  %v69 = vadd.f32 %v49, %v56
  %v70 = vadd.f32 %v50, %v56
  %v71 = vadd.f32 %v51, %v56
  %v72 = vadd.f32 %v52, %v56
  %v73 = vadd.f32 %v53, %v56
  %v74 = vmax.f32 %v58, 0.0
  %v75 = vmax.f32 %v59, 0.0
  %v76 = vmax.f32 %v60, 0.0
  %v77 = vmax.f32 %v61, 0.0
  %v78 = vmax.f32 %v62, 0.0
  %v79 = vmax.f32 %v63, 0.0
  %v80 = vmax.f32 %v64, 0.0
  %v81 = vmax.f32 %v65, 0.0
  %v82 = vmax.f32 %v66, 0.0
  %v83 = vmax.f32 %v67, 0.0
  %v84 = vmax.f32 %v68, 0.0
  %v85 = vmax.f32 %v69, 0.0
  %v86 = vmax.f32 %v70, 0.0
  %v87 = vmax.f32 %v71, 0.0
  %v88 = vmax.f32 %v72, 0.0
  %v89 = vmax.f32 %v73, 0.0
  %v90 = vpack.c.bf16 %v75, %v74
  %v91 = vpack.c.bf16 %v77, %v76
  %v92 = vpack.c.bf16 %v79, %v78
  %v93 = vpack.c.bf16 %v81, %v80
  %v94 = vpack.c.bf16 %v83, %v82
  %v95 = vpack.c.bf16 %v85, %v84
  %v96 = vpack.c.bf16 %v87, %v86
  %v97 = vpack.c.bf16 %v89, %v88
  %v98 = vld [vmem:[%s1] sm:$0xff]
  %v99 = vld [vmem:[%s1 + $0x8] sm:$0xff]
  %v100 = vld [vmem:[%s1 + $0x10] sm:$0xff]
  %v101 = vld [vmem:[%s1 + $0x18] sm:$0xff]
  %v106 = vunpack.c.l.b16 %v98
  %v107 = vunpack.c.h.b16 %v98
  %v108 = vunpack.c.l.b16 %v99
  %v109 = vunpack.c.h.b16 %v99
  %v110 = vunpack.c.l.b16 %v100
  %v111 = vunpack.c.h.b16 %v100
  %v112 = vunpack.c.l.b16 %v101
  %v113 = vunpack.c.h.b16 %v101
  %v114 = vpack.c.b16 %v108, %v106
  %v115 = vpack.c.b16 %v109, %v107
  %v116 = vpack.c.b16 %v112, %v110
  %v117 = vpack.c.b16 %v113, %v111
  %vm122 = vcmask 261120
  %v124 = vsel %vm122, %v90, 0
  %v127 = vsel %vm122, %v91, 0
  %v130 = vsel %vm122, %v92, 0
  %v133 = vsel %vm122, %v93, 0
  %v136 = vsel %vm122, %v94, 0
  %v139 = vsel %vm122, %v95, 0
  %v142 = vsel %vm122, %v96, 0
  %v145 = vsel %vm122, %v97, 0
  %147 = vmatpush.bf16.msra.mxu0 0
  %148 = vmatpush.bf16.msra.mxu0 0
  %149 = vmatpush.bf16.msra.mxu0 0
  %150 = vmatpush.bf16.msra.mxu0 0
  %151 = vmatpush.bf16.msra.mxu0 0
  %152 = vmatpush.bf16.msra.mxu0 0
  %153 = vmatpush.bf16.msra.mxu0 %v116
  %154 = vmatpush.bf16.msra.mxu0 %v114
  %155 = vmatmul.bf16.gmra.mxu0 %v124
  %v156 = vpop.f32.mrf.mxu0
  %v157 = vadd.f32 0.0, %v156
  %v158 = vpop.f32.mrf.mxu0
  %v159 = vadd.f32 0.0, %v158
  %160 = vmatmul.bf16.gmra.mxu0 %v127
  %v161 = vpop.f32.mrf.mxu0
  %v162 = vadd.f32 0.0, %v161
  %v163 = vpop.f32.mrf.mxu0
  %v164 = vadd.f32 0.0, %v163
  %165 = vmatmul.bf16.gmra.mxu0 %v130
  %v166 = vpop.f32.mrf.mxu0
  %v167 = vadd.f32 0.0, %v166
  %v168 = vpop.f32.mrf.mxu0
  %v169 = vadd.f32 0.0, %v168
  %170 = vmatmul.bf16.gmra.mxu0 %v133
  %v171 = vpop.f32.mrf.mxu0
  %v172 = vadd.f32 0.0, %v171
  %v173 = vpop.f32.mrf.mxu0
  %v174 = vadd.f32 0.0, %v173
  %175 = vmatmul.bf16.gmra.mxu0 %v136
  %v176 = vpop.f32.mrf.mxu0
  %v177 = vadd.f32 0.0, %v176
  %v178 = vpop.f32.mrf.mxu0
  %v179 = vadd.f32 0.0, %v178
  %180 = vmatmul.bf16.gmra.mxu0 %v139
  %v181 = vpop.f32.mrf.mxu0
  %v182 = vadd.f32 0.0, %v181
  %v183 = vpop.f32.mrf.mxu0
  %v184 = vadd.f32 0.0, %v183
  %185 = vmatmul.bf16.gmra.mxu0 %v142
  %v186 = vpop.f32.mrf.mxu0
  %v187 = vadd.f32 0.0, %v186
  %v188 = vpop.f32.mrf.mxu0
  %v189 = vadd.f32 0.0, %v188
  %190 = vmatmul.bf16.gmra.mxu0 %v145
  %v191 = vpop.f32.mrf.mxu0
  %v192 = vadd.f32 0.0, %v191
  %v193 = vpop.f32.mrf.mxu0
  %v194 = vadd.f32 0.0, %v193
  %195 = vdwg.mxu0
  %196 = vmatpush.bf16.msra.mxu0 0
  %197 = vmatpush.bf16.msra.mxu0 0
  %198 = vmatpush.bf16.msra.mxu0 0
  %199 = vmatpush.bf16.msra.mxu0 0
  %200 = vmatpush.bf16.msra.mxu0 0
  %201 = vmatpush.bf16.msra.mxu0 0
  %202 = vmatpush.bf16.msra.mxu0 %v117
  %203 = vmatpush.bf16.msra.mxu0 %v115
  %204 = vmatmul.bf16.gmra.mxu0 %v124
  %v205 = vpop.f32.mrf.mxu0
  %v206 = vadd.f32 0.0, %v205
  %v207 = vpop.f32.mrf.mxu0
  %v208 = vadd.f32 0.0, %v207
  %209 = vmatmul.bf16.gmra.mxu0 %v127
  %v210 = vpop.f32.mrf.mxu0
  %v211 = vadd.f32 0.0, %v210
  %v212 = vpop.f32.mrf.mxu0
  %v213 = vadd.f32 0.0, %v212
  %214 = vmatmul.bf16.gmra.mxu0 %v130
  %v215 = vpop.f32.mrf.mxu0
  %v216 = vadd.f32 0.0, %v215
  %v217 = vpop.f32.mrf.mxu0
  %v218 = vadd.f32 0.0, %v217
  %219 = vmatmul.bf16.gmra.mxu0 %v133
  %v220 = vpop.f32.mrf.mxu0
  %v221 = vadd.f32 0.0, %v220
  %v222 = vpop.f32.mrf.mxu0
  %v223 = vadd.f32 0.0, %v222
  %224 = vmatmul.bf16.gmra.mxu0 %v136
  %v225 = vpop.f32.mrf.mxu0
  %v226 = vadd.f32 0.0, %v225
  %v227 = vpop.f32.mrf.mxu0
  %v228 = vadd.f32 0.0, %v227
  %229 = vmatmul.bf16.gmra.mxu0 %v139
  %v230 = vpop.f32.mrf.mxu0
  %v231 = vadd.f32 0.0, %v230
  %v232 = vpop.f32.mrf.mxu0
  %v233 = vadd.f32 0.0, %v232
  %234 = vmatmul.bf16.gmra.mxu0 %v142
  %v235 = vpop.f32.mrf.mxu0
  %v236 = vadd.f32 0.0, %v235
  %v237 = vpop.f32.mrf.mxu0
  %v238 = vadd.f32 0.0, %v237
  %239 = vmatmul.bf16.gmra.mxu0 %v145
  %v240 = vpop.f32.mrf.mxu0
  %v241 = vadd.f32 0.0, %v240
  %v242 = vpop.f32.mrf.mxu0
  %v243 = vadd.f32 0.0, %v242
  %244 = vdwg.mxu0
  %245 = vst [vmem:[%s4] sm:$0xff] %v157
  %246 = vst [vmem:[%s4 + $0x8] sm:$0xff] %v206
  %247 = vst [vmem:[%s4 + $0x10] sm:$0xff] %v159
  %248 = vst [vmem:[%s4 + $0x18] sm:$0xff] %v208
  %249 = vst [vmem:[%s4 + $0x20] sm:$0xff] %v162
  %250 = vst [vmem:[%s4 + $0x28] sm:$0xff] %v211
  %251 = vst [vmem:[%s4 + $0x30] sm:$0xff] %v164
  %252 = vst [vmem:[%s4 + $0x38] sm:$0xff] %v213
  %253 = vst [vmem:[%s4 + $0x40] sm:$0xff] %v167
  %254 = vst [vmem:[%s4 + $0x48] sm:$0xff] %v216
  %255 = vst [vmem:[%s4 + $0x50] sm:$0xff] %v169
  %256 = vst [vmem:[%s4 + $0x58] sm:$0xff] %v218
  %257 = vst [vmem:[%s4 + $0x60] sm:$0xff] %v172
  %258 = vst [vmem:[%s4 + $0x68] sm:$0xff] %v221
  %259 = vst [vmem:[%s4 + $0x70] sm:$0xff] %v174
  %260 = vst [vmem:[%s4 + $0x78] sm:$0xff] %v223
  %261 = vst [vmem:[%s4 + $0x80] sm:$0xff] %v177
  %262 = vst [vmem:[%s4 + $0x88] sm:$0xff] %v226
  %263 = vst [vmem:[%s4 + $0x90] sm:$0xff] %v179
  %264 = vst [vmem:[%s4 + $0x98] sm:$0xff] %v228
  %265 = vst [vmem:[%s4 + $0xa0] sm:$0xff] %v182
  %266 = vst [vmem:[%s4 + $0xa8] sm:$0xff] %v231
  %267 = vst [vmem:[%s4 + $0xb0] sm:$0xff] %v184
  %268 = vst [vmem:[%s4 + $0xb8] sm:$0xff] %v233
  %269 = vst [vmem:[%s4 + $0xc0] sm:$0xff] %v187
  %270 = vst [vmem:[%s4 + $0xc8] sm:$0xff] %v236
  %271 = vst [vmem:[%s4 + $0xd0] sm:$0xff] %v189
  %272 = vst [vmem:[%s4 + $0xd8] sm:$0xff] %v238
  %273 = vst [vmem:[%s4 + $0xe0] sm:$0xff] %v192
  %274 = vst [vmem:[%s4 + $0xe8] sm:$0xff] %v241
  %275 = vst [vmem:[%s4 + $0xf0] sm:$0xff] %v194
  %276 = vst [vmem:[%s4 + $0xf8] sm:$0xff] %v243
  // Predicated region
  $region18: #{generator_forward.5} parent=0 // pred_check
    _
  $region19: #{generator_forward.5} parent=0 // pred_check_branch
    %278 = sbr.rel (0) target = $region21
  $region20: #{generator_forward.5} parent=0 // pred_region
    _
  $region21: #{generator_forward.5} parent=0 // pred_fallthru
    _
  // Predicated region
  $region22: #{generator_forward.5} parent=0 // pred_check
    _
  $region23: #{generator_forward.5} parent=0 // pred_check_branch
    %280 = sbr.rel (0) target = $region25
  $region24: #{generator_forward.5} parent=0 // pred_region
    _
  $region25: #{generator_forward.5} parent=0 // pred_fallthru
    _

// kernel: generator_forward.6
$region0: #{generator_forward.6}
  #allocation0 [shape = 'u32[]', space=smem, size = 0x4, offset = 0x4, fixed_abs, tag = 'smem constant byte address 0x4 - core index']
  #allocation1 [shape = 'u32[72,128]{1,0:T(1,128)}', space=vmem, size = 0x9000, scoped, tag = 'internal scratch']
  %s0 = inlined_call_operand.vmem [shape: f32[512,16], index: 0, kind: input, shape index: {}]
  %s1 = inlined_call_operand.vmem [shape: bf16[16,128], index: 1, kind: input, shape index: {}]
  %s2 = inlined_call_operand.vmem [shape: f32[1,16], index: 2, kind: input, shape index: {}]
  %s3 = inlined_call_operand.vmem [shape: f32[1,16], index: 3, kind: input, shape index: {}]
  %s4 = inlined_call_operand.vmem [shape: f32[512,128], index: 4, kind: output, shape index: {}]
  %s5 = sld [smem:[#allocation0]]
  $region26: #{generator_forward.6} parent=0
    _
  %s7 = ssub.s32 1, %s5
  %s8 = scalar_select 0, %s7, %s5
  // Predicated region
  $region2: #{generator_forward.6} parent=0 // pred_check
    _
  $region3: #{generator_forward.6} parent=0 // pred_check_branch
    %10 = sbr.rel (0) target = $region5
  $region4: #{generator_forward.6} parent=0 // pred_region
    _
  $region5: #{generator_forward.6} parent=0 // pred_fallthru
    _
  // Predicated region
  $region6: #{generator_forward.6} parent=0 // pred_check
    _
  $region7: #{generator_forward.6} parent=0 // pred_check_branch
    %12 = sbr.rel (0) target = $region9
  $region8: #{generator_forward.6} parent=0 // pred_region
    _
  $region9: #{generator_forward.6} parent=0 // pred_fallthru
    _
  // Predicated region
  $region10: #{generator_forward.6} parent=0 // pred_check
    _
  $region11: #{generator_forward.6} parent=0 // pred_check_branch
    %14 = sbr.rel (0) target = $region13
  $region12: #{generator_forward.6} parent=0 // pred_region
    _
  $region13: #{generator_forward.6} parent=0 // pred_fallthru
    _
  // Predicated region
  $region14: #{generator_forward.6} parent=0 // pred_check
    _
  $region15: #{generator_forward.6} parent=0 // pred_check_branch
    %16 = sbr.rel (0) target = $region17
  $region16: #{generator_forward.6} parent=0 // pred_region
    _
  $region17: #{generator_forward.6} parent=0 // pred_fallthru
    _
  %v18 = vld [vmem:[%s0] sm:$0xff]
  %v19 = vld [vmem:[%s0 + $0x8] sm:$0xff]
  %v20 = vld [vmem:[%s0 + $0x10] sm:$0xff]
  %v21 = vld [vmem:[%s0 + $0x18] sm:$0xff]
  %v22 = vld [vmem:[%s0 + $0x20] sm:$0xff]
  %v23 = vld [vmem:[%s0 + $0x28] sm:$0xff]
  %v24 = vld [vmem:[%s0 + $0x30] sm:$0xff]
  %v25 = vld [vmem:[%s0 + $0x38] sm:$0xff]
  %v26 = vld [vmem:[%s0 + $0x40] sm:$0xff]
  %v27 = vld [vmem:[%s0 + $0x48] sm:$0xff]
  %v28 = vld [vmem:[%s0 + $0x50] sm:$0xff]
  %v29 = vld [vmem:[%s0 + $0x58] sm:$0xff]
  %v30 = vld [vmem:[%s0 + $0x60] sm:$0xff]
  %v31 = vld [vmem:[%s0 + $0x68] sm:$0xff]
  %v32 = vld [vmem:[%s0 + $0x70] sm:$0xff]
  %v33 = vld [vmem:[%s0 + $0x78] sm:$0xff]
  %v34 = vld [vmem:[%s0 + $0x80] sm:$0xff]
  %v35 = vld [vmem:[%s0 + $0x88] sm:$0xff]
  %v36 = vld [vmem:[%s0 + $0x90] sm:$0xff]
  %v37 = vld [vmem:[%s0 + $0x98] sm:$0xff]
  %v38 = vld [vmem:[%s0 + $0xa0] sm:$0xff]
  %v39 = vld [vmem:[%s0 + $0xa8] sm:$0xff]
  %v40 = vld [vmem:[%s0 + $0xb0] sm:$0xff]
  %v41 = vld [vmem:[%s0 + $0xb8] sm:$0xff]
  %v42 = vld [vmem:[%s0 + $0xc0] sm:$0xff]
  %v43 = vld [vmem:[%s0 + $0xc8] sm:$0xff]
  %v44 = vld [vmem:[%s0 + $0xd0] sm:$0xff]
  %v45 = vld [vmem:[%s0 + $0xd8] sm:$0xff]
  %v46 = vld [vmem:[%s0 + $0xe0] sm:$0xff]
  %v47 = vld [vmem:[%s0 + $0xe8] sm:$0xff]
  %v48 = vld [vmem:[%s0 + $0xf0] sm:$0xff]
  %v49 = vld [vmem:[%s0 + $0xf8] sm:$0xff]
  %v50 = vld [vmem:[%s0 + $0x100] sm:$0xff]
  %v51 = vld [vmem:[%s0 + $0x108] sm:$0xff]
  %v52 = vld [vmem:[%s0 + $0x110] sm:$0xff]
  %v53 = vld [vmem:[%s0 + $0x118] sm:$0xff]
  %v54 = vld [vmem:[%s0 + $0x120] sm:$0xff]
  %v55 = vld [vmem:[%s0 + $0x128] sm:$0xff]
  %v56 = vld [vmem:[%s0 + $0x130] sm:$0xff]
  %v57 = vld [vmem:[%s0 + $0x138] sm:$0xff]
  %v58 = vld [vmem:[%s0 + $0x140] sm:$0xff]
  %v59 = vld [vmem:[%s0 + $0x148] sm:$0xff]
  %v60 = vld [vmem:[%s0 + $0x150] sm:$0xff]
  %v61 = vld [vmem:[%s0 + $0x158] sm:$0xff]
  %v62 = vld [vmem:[%s0 + $0x160] sm:$0xff]
  %v63 = vld [vmem:[%s0 + $0x168] sm:$0xff]
  %v64 = vld [vmem:[%s0 + $0x170] sm:$0xff]
  %v65 = vld [vmem:[%s0 + $0x178] sm:$0xff]
  %v66 = vld [vmem:[%s0 + $0x180] sm:$0xff]
  %v67 = vld [vmem:[%s0 + $0x188] sm:$0xff]
  %v68 = vld [vmem:[%s0 + $0x190] sm:$0xff]
  %v69 = vld [vmem:[%s0 + $0x198] sm:$0xff]
  %v70 = vld [vmem:[%s0 + $0x1a0] sm:$0xff]
  %v71 = vld [vmem:[%s0 + $0x1a8] sm:$0xff]
  %v72 = vld [vmem:[%s0 + $0x1b0] sm:$0xff]
  %v73 = vld [vmem:[%s0 + $0x1b8] sm:$0xff]
  %v74 = vld [vmem:[%s0 + $0x1c0] sm:$0xff]
  %v75 = vld [vmem:[%s0 + $0x1c8] sm:$0xff]
  %v76 = vld [vmem:[%s0 + $0x1d0] sm:$0xff]
  %v77 = vld [vmem:[%s0 + $0x1d8] sm:$0xff]
  %v78 = vld [vmem:[%s0 + $0x1e0] sm:$0xff]
  %v79 = vld [vmem:[%s0 + $0x1e8] sm:$0xff]
  %v80 = vld [vmem:[%s0 + $0x1f0] sm:$0xff]
  %v81 = vld [vmem:[%s0 + $0x1f8] sm:$0xff]
  %v82 = vld [vmem:[%s2] sm:$0x1]
  %v84 = vperm.slane %v82, 0
  %v86 = vmul.f32 %v18, %v84
  %v87 = vmul.f32 %v19, %v84
  %v88 = vmul.f32 %v20, %v84
  %v89 = vmul.f32 %v21, %v84
  %v90 = vmul.f32 %v22, %v84
  %v91 = vmul.f32 %v23, %v84
  %v92 = vmul.f32 %v24, %v84
  %v93 = vmul.f32 %v25, %v84
  %v94 = vmul.f32 %v26, %v84
  %v95 = vmul.f32 %v27, %v84
  %v96 = vmul.f32 %v28, %v84
  %v97 = vmul.f32 %v29, %v84
  %v98 = vmul.f32 %v30, %v84
  %v99 = vmul.f32 %v31, %v84
  %v100 = vmul.f32 %v32, %v84
  %v101 = vmul.f32 %v33, %v84
  %v102 = vmul.f32 %v34, %v84
  %v103 = vmul.f32 %v35, %v84
  %v104 = vmul.f32 %v36, %v84
  %v105 = vmul.f32 %v37, %v84
  %v106 = vmul.f32 %v38, %v84
  %v107 = vmul.f32 %v39, %v84
  %v108 = vmul.f32 %v40, %v84
  %v109 = vmul.f32 %v41, %v84
  %v110 = vmul.f32 %v42, %v84
  %v111 = vmul.f32 %v43, %v84
  %v112 = vmul.f32 %v44, %v84
  %v113 = vmul.f32 %v45, %v84
  %v114 = vmul.f32 %v46, %v84
  %v115 = vmul.f32 %v47, %v84
  %v116 = vmul.f32 %v48, %v84
  %v117 = vmul.f32 %v49, %v84
  %v118 = vmul.f32 %v50, %v84
  %v119 = vmul.f32 %v51, %v84
  %v120 = vmul.f32 %v52, %v84
  %v121 = vmul.f32 %v53, %v84
  %v122 = vmul.f32 %v54, %v84
  %v123 = vmul.f32 %v55, %v84
  %v124 = vmul.f32 %v56, %v84
  %v125 = vmul.f32 %v57, %v84
  %v126 = vmul.f32 %v58, %v84
  %v127 = vmul.f32 %v59, %v84
  %v128 = vmul.f32 %v60, %v84
  %v129 = vmul.f32 %v61, %v84
  %v130 = vmul.f32 %v62, %v84
  %v131 = vmul.f32 %v63, %v84
  %v132 = vmul.f32 %v64, %v84
  %v133 = vmul.f32 %v65, %v84
  %v134 = vmul.f32 %v66, %v84
  %v135 = vmul.f32 %v67, %v84
  %v136 = vmul.f32 %v68, %v84
  %v137 = vmul.f32 %v69, %v84
  %v138 = vmul.f32 %v70, %v84
  %v139 = vmul.f32 %v71, %v84
  %v140 = vmul.f32 %v72, %v84
  %v141 = vmul.f32 %v73, %v84
  %v142 = vmul.f32 %v74, %v84
  %v143 = vmul.f32 %v75, %v84
  %v144 = vmul.f32 %v76, %v84
  %v145 = vmul.f32 %v77, %v84
  %v146 = vmul.f32 %v78, %v84
  %v147 = vmul.f32 %v79, %v84
  %v148 = vmul.f32 %v80, %v84
  %v149 = vmul.f32 %v81, %v84
  %v150 = vld [vmem:[%s3] sm:$0x1]
  %v152 = vperm.slane %v150, 0
  %v154 = vadd.f32 %v86, %v152
  %v155 = vadd.f32 %v87, %v152
  %v156 = vadd.f32 %v88, %v152
  %v157 = vadd.f32 %v89, %v152
  %v158 = vadd.f32 %v90, %v152
  %v159 = vadd.f32 %v91, %v152
  %v160 = vadd.f32 %v92, %v152
  %v161 = vadd.f32 %v93, %v152
  %v162 = vadd.f32 %v94, %v152
  %v163 = vadd.f32 %v95, %v152
  %v164 = vadd.f32 %v96, %v152
  %v165 = vadd.f32 %v97, %v152
  %v166 = vadd.f32 %v98, %v152
  %v167 = vadd.f32 %v99, %v152
  %v168 = vadd.f32 %v100, %v152
  %v169 = vadd.f32 %v101, %v152
  %v170 = vadd.f32 %v102, %v152
  %v171 = vadd.f32 %v103, %v152
  %v172 = vadd.f32 %v104, %v152
  %v173 = vadd.f32 %v105, %v152
  %v174 = vadd.f32 %v106, %v152
  %v175 = vadd.f32 %v107, %v152
  %v176 = vadd.f32 %v108, %v152
  %v177 = vadd.f32 %v109, %v152
  %v178 = vadd.f32 %v110, %v152
  %v179 = vadd.f32 %v111, %v152
  %v180 = vadd.f32 %v112, %v152
  %v181 = vadd.f32 %v113, %v152
  %v182 = vadd.f32 %v114, %v152
  %v183 = vadd.f32 %v115, %v152
  %v184 = vadd.f32 %v116, %v152
  %v185 = vadd.f32 %v117, %v152
  %v186 = vadd.f32 %v118, %v152
  %v187 = vadd.f32 %v119, %v152
  %v188 = vadd.f32 %v120, %v152
  %v189 = vadd.f32 %v121, %v152
  %v190 = vadd.f32 %v122, %v152
  %v191 = vadd.f32 %v123, %v152
  %v192 = vadd.f32 %v124, %v152
  %v193 = vadd.f32 %v125, %v152
  %v194 = vadd.f32 %v126, %v152
  %v195 = vadd.f32 %v127, %v152
  %v196 = vadd.f32 %v128, %v152
  %v197 = vadd.f32 %v129, %v152
  %v198 = vadd.f32 %v130, %v152
  %v199 = vadd.f32 %v131, %v152
  %v200 = vadd.f32 %v132, %v152
  %v201 = vadd.f32 %v133, %v152
  %v202 = vadd.f32 %v134, %v152
  %v203 = vadd.f32 %v135, %v152
  %v204 = vadd.f32 %v136, %v152
  %v205 = vadd.f32 %v137, %v152
  %v206 = vadd.f32 %v138, %v152
  %v207 = vadd.f32 %v139, %v152
  %v208 = vadd.f32 %v140, %v152
  %v209 = vadd.f32 %v141, %v152
  %v210 = vadd.f32 %v142, %v152
  %v211 = vadd.f32 %v143, %v152
  %v212 = vadd.f32 %v144, %v152
  %v213 = vadd.f32 %v145, %v152
  %v214 = vadd.f32 %v146, %v152
  %v215 = vadd.f32 %v147, %v152
  %v216 = vadd.f32 %v148, %v152
  %v217 = vadd.f32 %v149, %v152
  %v218 = vmax.f32 %v154, 0.0
  %v219 = vmax.f32 %v155, 0.0
  %v220 = vmax.f32 %v156, 0.0
  %v221 = vmax.f32 %v157, 0.0
  %v222 = vmax.f32 %v158, 0.0
  %v223 = vmax.f32 %v159, 0.0
  %v224 = vmax.f32 %v160, 0.0
  %v225 = vmax.f32 %v161, 0.0
  %v226 = vmax.f32 %v162, 0.0
  %v227 = vmax.f32 %v163, 0.0
  %v228 = vmax.f32 %v164, 0.0
  %v229 = vmax.f32 %v165, 0.0
  %v230 = vmax.f32 %v166, 0.0
  %v231 = vmax.f32 %v167, 0.0
  %v232 = vmax.f32 %v168, 0.0
  %v233 = vmax.f32 %v169, 0.0
  %v234 = vmax.f32 %v170, 0.0
  %v235 = vmax.f32 %v171, 0.0
  %v236 = vmax.f32 %v172, 0.0
  %v237 = vmax.f32 %v173, 0.0
  %v238 = vmax.f32 %v174, 0.0
  %v239 = vmax.f32 %v175, 0.0
  %v240 = vmax.f32 %v176, 0.0
  %v241 = vmax.f32 %v177, 0.0
  %v242 = vmax.f32 %v178, 0.0
  %v243 = vmax.f32 %v179, 0.0
  %v244 = vmax.f32 %v180, 0.0
  %v245 = vmax.f32 %v181, 0.0
  %v246 = vmax.f32 %v182, 0.0
  %v247 = vmax.f32 %v183, 0.0
  %v248 = vmax.f32 %v184, 0.0
  %v249 = vmax.f32 %v185, 0.0
  %v250 = vmax.f32 %v186, 0.0
  %v251 = vmax.f32 %v187, 0.0
  %v252 = vmax.f32 %v188, 0.0
  %v253 = vmax.f32 %v189, 0.0
  %v254 = vmax.f32 %v190, 0.0
  %v255 = vmax.f32 %v191, 0.0
  %v256 = vmax.f32 %v192, 0.0
  %v257 = vmax.f32 %v193, 0.0
  %v258 = vmax.f32 %v194, 0.0
  %v259 = vmax.f32 %v195, 0.0
  %v260 = vmax.f32 %v196, 0.0
  %v261 = vmax.f32 %v197, 0.0
  %v262 = vmax.f32 %v198, 0.0
  %v263 = vmax.f32 %v199, 0.0
  %v264 = vmax.f32 %v200, 0.0
  %v265 = vmax.f32 %v201, 0.0
  %v266 = vmax.f32 %v202, 0.0
  %v267 = vmax.f32 %v203, 0.0
  %v268 = vmax.f32 %v204, 0.0
  %v269 = vmax.f32 %v205, 0.0
  %v270 = vmax.f32 %v206, 0.0
  %v271 = vmax.f32 %v207, 0.0
  %v272 = vmax.f32 %v208, 0.0
  %v273 = vmax.f32 %v209, 0.0
  %v274 = vmax.f32 %v210, 0.0
  %v275 = vmax.f32 %v211, 0.0
  %v276 = vmax.f32 %v212, 0.0
  %v277 = vmax.f32 %v213, 0.0
  %v278 = vmax.f32 %v214, 0.0
  %v279 = vmax.f32 %v215, 0.0
  %v280 = vmax.f32 %v216, 0.0
  %v281 = vmax.f32 %v217, 0.0
  %v282 = vpack.c.bf16 %v219, %v218
  %v283 = vpack.c.bf16 %v221, %v220
  %v284 = vpack.c.bf16 %v223, %v222
  %v285 = vpack.c.bf16 %v225, %v224
  %v286 = vpack.c.bf16 %v227, %v226
  %v287 = vpack.c.bf16 %v229, %v228
  %v288 = vpack.c.bf16 %v231, %v230
  %v289 = vpack.c.bf16 %v233, %v232
  %v290 = vpack.c.bf16 %v235, %v234
  %v291 = vpack.c.bf16 %v237, %v236
  %v292 = vpack.c.bf16 %v239, %v238
  %v293 = vpack.c.bf16 %v241, %v240
  %v294 = vpack.c.bf16 %v243, %v242
  %v295 = vpack.c.bf16 %v245, %v244
  %v296 = vpack.c.bf16 %v247, %v246
  %v297 = vpack.c.bf16 %v249, %v248
  %v298 = vpack.c.bf16 %v251, %v250
  %v299 = vpack.c.bf16 %v253, %v252
  %v300 = vpack.c.bf16 %v255, %v254
  %v301 = vpack.c.bf16 %v257, %v256
  %v302 = vpack.c.bf16 %v259, %v258
  %v303 = vpack.c.bf16 %v261, %v260
  %v304 = vpack.c.bf16 %v263, %v262
  %v305 = vpack.c.bf16 %v265, %v264
  %v306 = vpack.c.bf16 %v267, %v266
  %v307 = vpack.c.bf16 %v269, %v268
  %v308 = vpack.c.bf16 %v271, %v270
  %v309 = vpack.c.bf16 %v273, %v272
  %v310 = vpack.c.bf16 %v275, %v274
  %v311 = vpack.c.bf16 %v277, %v276
  %v312 = vpack.c.bf16 %v279, %v278
  %v313 = vpack.c.bf16 %v281, %v280
  %v314 = vld [vmem:[%s1] sm:$0xf]
  %v315 = vld [vmem:[%s1 + $0x4] sm:$0xf]
  %v318 = vunpack.c.l.b16 %v314
  %v319 = vunpack.c.l.b16 %v315
  %v320 = vpack.c.b16 %v319, %v318
  %vm322 = vcmask 130048
  %v324 = vsel %vm322, %v282, 0
  %v327 = vsel %vm322, %v283, 0
  %v330 = vsel %vm322, %v284, 0
  %v333 = vsel %vm322, %v285, 0
  %v336 = vsel %vm322, %v286, 0
  %v339 = vsel %vm322, %v287, 0
  %v342 = vsel %vm322, %v288, 0
  %v345 = vsel %vm322, %v289, 0
  %v348 = vsel %vm322, %v290, 0
  %v351 = vsel %vm322, %v291, 0
  %v354 = vsel %vm322, %v292, 0
  %v357 = vsel %vm322, %v293, 0
  %v360 = vsel %vm322, %v294, 0
  %v363 = vsel %vm322, %v295, 0
  %v366 = vsel %vm322, %v296, 0
  %v369 = vsel %vm322, %v297, 0
  %v372 = vsel %vm322, %v298, 0
  %v375 = vsel %vm322, %v299, 0
  %v378 = vsel %vm322, %v300, 0
  %v381 = vsel %vm322, %v301, 0
  %v384 = vsel %vm322, %v302, 0
  %v387 = vsel %vm322, %v303, 0
  %v390 = vsel %vm322, %v304, 0
  %v393 = vsel %vm322, %v305, 0
  %v396 = vsel %vm322, %v306, 0
  %v399 = vsel %vm322, %v307, 0
  %v402 = vsel %vm322, %v308, 0
  %v405 = vsel %vm322, %v309, 0
  %v408 = vsel %vm322, %v310, 0
  %v411 = vsel %vm322, %v311, 0
  %v414 = vsel %vm322, %v312, 0
  %v417 = vsel %vm322, %v313, 0
  %419 = vmatpush.bf16.msra.mxu0 0
  %420 = vmatpush.bf16.msra.mxu0 0
  %421 = vmatpush.bf16.msra.mxu0 0
  %422 = vmatpush.bf16.msra.mxu0 0
  %423 = vmatpush.bf16.msra.mxu0 0
  %424 = vmatpush.bf16.msra.mxu0 0
  %425 = vmatpush.bf16.msra.mxu0 0
  %426 = vmatpush.bf16.msra.mxu0 %v320
  %427 = vmatmul.bf16.gmra.mxu0 %v324
  %v428 = vpop.f32.mrf.mxu0
  %v429 = vadd.f32 0.0, %v428
  %v430 = vpop.f32.mrf.mxu0
  %v431 = vadd.f32 0.0, %v430
  %432 = vmatmul.bf16.gmra.mxu0 %v327
  %v433 = vpop.f32.mrf.mxu0
  %v434 = vadd.f32 0.0, %v433
  %v435 = vpop.f32.mrf.mxu0
  %v436 = vadd.f32 0.0, %v435
  %437 = vmatmul.bf16.gmra.mxu0 %v330
  %v438 = vpop.f32.mrf.mxu0
  %v439 = vadd.f32 0.0, %v438
  %v440 = vpop.f32.mrf.mxu0
  %v441 = vadd.f32 0.0, %v440
  %442 = vmatmul.bf16.gmra.mxu0 %v333
  %v443 = vpop.f32.mrf.mxu0
  %v444 = vadd.f32 0.0, %v443
  %v445 = vpop.f32.mrf.mxu0
  %v446 = vadd.f32 0.0, %v445
  %447 = vmatmul.bf16.gmra.mxu0 %v336
  %v448 = vpop.f32.mrf.mxu0
  %v449 = vadd.f32 0.0, %v448
  %v450 = vpop.f32.mrf.mxu0
  %v451 = vadd.f32 0.0, %v450
  %452 = vmatmul.bf16.gmra.mxu0 %v339
  %v453 = vpop.f32.mrf.mxu0
  %v454 = vadd.f32 0.0, %v453
  %v455 = vpop.f32.mrf.mxu0
  %v456 = vadd.f32 0.0, %v455
  %457 = vmatmul.bf16.gmra.mxu0 %v342
  %v458 = vpop.f32.mrf.mxu0
  %v459 = vadd.f32 0.0, %v458
  %v460 = vpop.f32.mrf.mxu0
  %v461 = vadd.f32 0.0, %v460
  %462 = vmatmul.bf16.gmra.mxu0 %v345
  %v463 = vpop.f32.mrf.mxu0
  %v464 = vadd.f32 0.0, %v463
  %v465 = vpop.f32.mrf.mxu0
  %v466 = vadd.f32 0.0, %v465
  %467 = vmatmul.bf16.gmra.mxu0 %v348
  %v468 = vpop.f32.mrf.mxu0
  %v469 = vadd.f32 0.0, %v468
  %v470 = vpop.f32.mrf.mxu0
  %v471 = vadd.f32 0.0, %v470
  %472 = vmatmul.bf16.gmra.mxu0 %v351
  %v473 = vpop.f32.mrf.mxu0
  %v474 = vadd.f32 0.0, %v473
  %v475 = vpop.f32.mrf.mxu0
  %v476 = vadd.f32 0.0, %v475
  %477 = vmatmul.bf16.gmra.mxu0 %v354
  %v478 = vpop.f32.mrf.mxu0
  %v479 = vadd.f32 0.0, %v478
  %v480 = vpop.f32.mrf.mxu0
  %v481 = vadd.f32 0.0, %v480
  %482 = vmatmul.bf16.gmra.mxu0 %v357
  %v483 = vpop.f32.mrf.mxu0
  %v484 = vadd.f32 0.0, %v483
  %v485 = vpop.f32.mrf.mxu0
  %v486 = vadd.f32 0.0, %v485
  %487 = vmatmul.bf16.gmra.mxu0 %v360
  %v488 = vpop.f32.mrf.mxu0
  %v489 = vadd.f32 0.0, %v488
  %v490 = vpop.f32.mrf.mxu0
  %v491 = vadd.f32 0.0, %v490
  %492 = vmatmul.bf16.gmra.mxu0 %v363
  %v493 = vpop.f32.mrf.mxu0
  %v494 = vadd.f32 0.0, %v493
  %v495 = vpop.f32.mrf.mxu0
  %v496 = vadd.f32 0.0, %v495
  %497 = vmatmul.bf16.gmra.mxu0 %v366
  %v498 = vpop.f32.mrf.mxu0
  %v499 = vadd.f32 0.0, %v498
  %v500 = vpop.f32.mrf.mxu0
  %v501 = vadd.f32 0.0, %v500
  %502 = vmatmul.bf16.gmra.mxu0 %v369
  %v503 = vpop.f32.mrf.mxu0
  %v504 = vadd.f32 0.0, %v503
  %v505 = vpop.f32.mrf.mxu0
  %v506 = vadd.f32 0.0, %v505
  %507 = vmatmul.bf16.gmra.mxu0 %v372
  %v508 = vpop.f32.mrf.mxu0
  %v509 = vadd.f32 0.0, %v508
  %v510 = vpop.f32.mrf.mxu0
  %v511 = vadd.f32 0.0, %v510
  %512 = vmatmul.bf16.gmra.mxu0 %v375
  %v513 = vpop.f32.mrf.mxu0
  %v514 = vadd.f32 0.0, %v513
  %v515 = vpop.f32.mrf.mxu0
  %v516 = vadd.f32 0.0, %v515
  %517 = vmatmul.bf16.gmra.mxu0 %v378
  %v518 = vpop.f32.mrf.mxu0
  %v519 = vadd.f32 0.0, %v518
  %v520 = vpop.f32.mrf.mxu0
  %v521 = vadd.f32 0.0, %v520
  %522 = vmatmul.bf16.gmra.mxu0 %v381
  %v523 = vpop.f32.mrf.mxu0
  %v524 = vadd.f32 0.0, %v523
  %v525 = vpop.f32.mrf.mxu0
  %v526 = vadd.f32 0.0, %v525
  %527 = vmatmul.bf16.gmra.mxu0 %v384
  %v528 = vpop.f32.mrf.mxu0
  %v529 = vadd.f32 0.0, %v528
  %v530 = vpop.f32.mrf.mxu0
  %v531 = vadd.f32 0.0, %v530
  %532 = vmatmul.bf16.gmra.mxu0 %v387
  %v533 = vpop.f32.mrf.mxu0
  %v534 = vadd.f32 0.0, %v533
  %v535 = vpop.f32.mrf.mxu0
  %v536 = vadd.f32 0.0, %v535
  %537 = vmatmul.bf16.gmra.mxu0 %v390
  %v538 = vpop.f32.mrf.mxu0
  %v539 = vadd.f32 0.0, %v538
  %v540 = vpop.f32.mrf.mxu0
  %v541 = vadd.f32 0.0, %v540
  %542 = vmatmul.bf16.gmra.mxu0 %v393
  %v543 = vpop.f32.mrf.mxu0
  %v544 = vadd.f32 0.0, %v543
  %v545 = vpop.f32.mrf.mxu0
  %v546 = vadd.f32 0.0, %v545
  %547 = vmatmul.bf16.gmra.mxu0 %v396
  %v548 = vpop.f32.mrf.mxu0
  %v549 = vadd.f32 0.0, %v548
  %v550 = vpop.f32.mrf.mxu0
  %v551 = vadd.f32 0.0, %v550
  %552 = vmatmul.bf16.gmra.mxu0 %v399
  %v553 = vpop.f32.mrf.mxu0
  %v554 = vadd.f32 0.0, %v553
  %v555 = vpop.f32.mrf.mxu0
  %v556 = vadd.f32 0.0, %v555
  %557 = vmatmul.bf16.gmra.mxu0 %v402
  %v558 = vpop.f32.mrf.mxu0
  %v559 = vadd.f32 0.0, %v558
  %v560 = vpop.f32.mrf.mxu0
  %v561 = vadd.f32 0.0, %v560
  %562 = vmatmul.bf16.gmra.mxu0 %v405
  %v563 = vpop.f32.mrf.mxu0
  %v564 = vadd.f32 0.0, %v563
  %v565 = vpop.f32.mrf.mxu0
  %v566 = vadd.f32 0.0, %v565
  %567 = vmatmul.bf16.gmra.mxu0 %v408
  %v568 = vpop.f32.mrf.mxu0
  %v569 = vadd.f32 0.0, %v568
  %v570 = vpop.f32.mrf.mxu0
  %v571 = vadd.f32 0.0, %v570
  %572 = vmatmul.bf16.gmra.mxu0 %v411
  %v573 = vpop.f32.mrf.mxu0
  %v574 = vadd.f32 0.0, %v573
  %v575 = vpop.f32.mrf.mxu0
  %v576 = vadd.f32 0.0, %v575
  %577 = vmatmul.bf16.gmra.mxu0 %v414
  %v578 = vpop.f32.mrf.mxu0
  %v579 = vadd.f32 0.0, %v578
  %v580 = vpop.f32.mrf.mxu0
  %v581 = vadd.f32 0.0, %v580
  %582 = vmatmul.bf16.gmra.mxu0 %v417
  %v583 = vpop.f32.mrf.mxu0
  %v584 = vadd.f32 0.0, %v583
  %v585 = vpop.f32.mrf.mxu0
  %v586 = vadd.f32 0.0, %v585
  %587 = vdwg.mxu0
  %588 = vst [vmem:[%s4] sm:$0xff] %v429
  %589 = vst [vmem:[%s4 + $0x8] sm:$0xff] %v431
  %590 = vst [vmem:[%s4 + $0x10] sm:$0xff] %v434
  %591 = vst [vmem:[%s4 + $0x18] sm:$0xff] %v436
  %592 = vst [vmem:[%s4 + $0x20] sm:$0xff] %v439
  %593 = vst [vmem:[%s4 + $0x28] sm:$0xff] %v441
  %594 = vst [vmem:[%s4 + $0x30] sm:$0xff] %v444
  %595 = vst [vmem:[%s4 + $0x38] sm:$0xff] %v446
  %596 = vst [vmem:[%s4 + $0x40] sm:$0xff] %v449
  %597 = vst [vmem:[%s4 + $0x48] sm:$0xff] %v451
  %598 = vst [vmem:[%s4 + $0x50] sm:$0xff] %v454
  %599 = vst [vmem:[%s4 + $0x58] sm:$0xff] %v456
  %600 = vst [vmem:[%s4 + $0x60] sm:$0xff] %v459
  %601 = vst [vmem:[%s4 + $0x68] sm:$0xff] %v461
  %602 = vst [vmem:[%s4 + $0x70] sm:$0xff] %v464
  %603 = vst [vmem:[%s4 + $0x78] sm:$0xff] %v466
  %604 = vst [vmem:[%s4 + $0x80] sm:$0xff] %v469
  %605 = vst [vmem:[%s4 + $0x88] sm:$0xff] %v471
  %606 = vst [vmem:[%s4 + $0x90] sm:$0xff] %v474
  %607 = vst [vmem:[%s4 + $0x98] sm:$0xff] %v476
  %608 = vst [vmem:[%s4 + $0xa0] sm:$0xff] %v479
  %609 = vst [vmem:[%s4 + $0xa8] sm:$0xff] %v481
  %610 = vst [vmem:[%s4 + $0xb0] sm:$0xff] %v484
  %611 = vst [vmem:[%s4 + $0xb8] sm:$0xff] %v486
  %612 = vst [vmem:[%s4 + $0xc0] sm:$0xff] %v489
  %613 = vst [vmem:[%s4 + $0xc8] sm:$0xff] %v491
  %614 = vst [vmem:[%s4 + $0xd0] sm:$0xff] %v494
  %615 = vst [vmem:[%s4 + $0xd8] sm:$0xff] %v496
  %616 = vst [vmem:[%s4 + $0xe0] sm:$0xff] %v499
  %617 = vst [vmem:[%s4 + $0xe8] sm:$0xff] %v501
  %618 = vst [vmem:[%s4 + $0xf0] sm:$0xff] %v504
  %619 = vst [vmem:[%s4 + $0xf8] sm:$0xff] %v506
  %620 = vst [vmem:[%s4 + $0x100] sm:$0xff] %v509
  %621 = vst [vmem:[%s4 + $0x108] sm:$0xff] %v511
  %622 = vst [vmem:[%s4 + $0x110] sm:$0xff] %v514
  %623 = vst [vmem:[%s4 + $0x118] sm:$0xff] %v516
  %624 = vst [vmem:[%s4 + $0x120] sm:$0xff] %v519
  %625 = vst [vmem:[%s4 + $0x128] sm:$0xff] %v521
  %626 = vst [vmem:[%s4 + $0x130] sm:$0xff] %v524
  %627 = vst [vmem:[%s4 + $0x138] sm:$0xff] %v526
  %628 = vst [vmem:[%s4 + $0x140] sm:$0xff] %v529
  %629 = vst [vmem:[%s4 + $0x148] sm:$0xff] %v531
  %630 = vst [vmem:[%s4 + $0x150] sm:$0xff] %v534
  %631 = vst [vmem:[%s4 + $0x158] sm:$0xff] %v536
  %632 = vst [vmem:[%s4 + $0x160] sm:$0xff] %v539
  %633 = vst [vmem:[%s4 + $0x168] sm:$0xff] %v541
  %634 = vst [vmem:[%s4 + $0x170] sm:$0xff] %v544
  %635 = vst [vmem:[%s4 + $0x178] sm:$0xff] %v546
  %636 = vst [vmem:[%s4 + $0x180] sm:$0xff] %v549
  %637 = vst [vmem:[%s4 + $0x188] sm:$0xff] %v551
  %638 = vst [vmem:[%s4 + $0x190] sm:$0xff] %v554
  %639 = vst [vmem:[%s4 + $0x198] sm:$0xff] %v556
  %640 = vst [vmem:[%s4 + $0x1a0] sm:$0xff] %v559
  %641 = vst [vmem:[%s4 + $0x1a8] sm:$0xff] %v561
  %642 = vst [vmem:[%s4 + $0x1b0] sm:$0xff] %v564
  %643 = vst [vmem:[%s4 + $0x1b8] sm:$0xff] %v566
  %644 = vst [vmem:[%s4 + $0x1c0] sm:$0xff] %v569
  %645 = vst [vmem:[%s4 + $0x1c8] sm:$0xff] %v571
  %646 = vst [vmem:[%s4 + $0x1d0] sm:$0xff] %v574
  %647 = vst [vmem:[%s4 + $0x1d8] sm:$0xff] %v576
  %648 = vst [vmem:[%s4 + $0x1e0] sm:$0xff] %v579
  %649 = vst [vmem:[%s4 + $0x1e8] sm:$0xff] %v581
  %650 = vst [vmem:[%s4 + $0x1f0] sm:$0xff] %v584
  %651 = vst [vmem:[%s4 + $0x1f8] sm:$0xff] %v586
  // Predicated region
  $region18: #{generator_forward.6} parent=0 // pred_check
    _
  $region19: #{generator_forward.6} parent=0 // pred_check_branch
    %653 = sbr.rel (0) target = $region21
  $region20: #{generator_forward.6} parent=0 // pred_region
    _
  $region21: #{generator_forward.6} parent=0 // pred_fallthru
    _
  // Predicated region
  $region22: #{generator_forward.6} parent=0 // pred_check
    _
  $region23: #{generator_forward.6} parent=0 // pred_check_branch
    %655 = sbr.rel (0) target = $region25
  $region24: #{generator_forward.6} parent=0 // pred_region
    _
  $region25: #{generator_forward.6} parent=0 // pred_fallthru
    _

// kernel: generator_forward.7
$region0: #{generator_forward.7}
  #allocation0 [shape = 'u32[]', space=smem, size = 0x4, offset = 0x4, fixed_abs, tag = 'smem constant byte address 0x4 - core index']
  #allocation1 [shape = 'u32[72,128]{1,0:T(1,128)}', space=vmem, size = 0x9000, scoped, tag = 'internal scratch']
  %s0 = inlined_call_operand.vmem [shape: f32[2048,8], index: 0, kind: input, shape index: {}]
  %s1 = inlined_call_operand.vmem [shape: bf16[8,128], index: 1, kind: input, shape index: {}]
  %s2 = inlined_call_operand.vmem [shape: f32[1,8], index: 2, kind: input, shape index: {}]
  %s3 = inlined_call_operand.vmem [shape: f32[1,8], index: 3, kind: input, shape index: {}]
  %s4 = inlined_call_operand.vmem [shape: f32[2048,128], index: 4, kind: output, shape index: {}]
  %s5 = sld [smem:[#allocation0]]
  $region26: #{generator_forward.7} parent=0
    _
  %s7 = ssub.s32 1, %s5
  %s8 = scalar_select 0, %s7, %s5
  // Predicated region
  $region2: #{generator_forward.7} parent=0 // pred_check
    _
  $region3: #{generator_forward.7} parent=0 // pred_check_branch
    %10 = sbr.rel (0) target = $region5
  $region4: #{generator_forward.7} parent=0 // pred_region
    _
  $region5: #{generator_forward.7} parent=0 // pred_fallthru
    _
  // Predicated region
  $region6: #{generator_forward.7} parent=0 // pred_check
    _
  $region7: #{generator_forward.7} parent=0 // pred_check_branch
    %12 = sbr.rel (0) target = $region9
  $region8: #{generator_forward.7} parent=0 // pred_region
    _
  $region9: #{generator_forward.7} parent=0 // pred_fallthru
    _
  // Predicated region
  $region10: #{generator_forward.7} parent=0 // pred_check
    _
  $region11: #{generator_forward.7} parent=0 // pred_check_branch
    %14 = sbr.rel (0) target = $region13
  $region12: #{generator_forward.7} parent=0 // pred_region
    _
  $region13: #{generator_forward.7} parent=0 // pred_fallthru
    _
  // Predicated region
  $region14: #{generator_forward.7} parent=0 // pred_check
    _
  $region15: #{generator_forward.7} parent=0 // pred_check_branch
    %16 = sbr.rel (0) target = $region17
  $region16: #{generator_forward.7} parent=0 // pred_region
    _
  $region17: #{generator_forward.7} parent=0 // pred_fallthru
    _
  %v18 = vld [vmem:[%s0] sm:$0xff]
  %v19 = vld [vmem:[%s0 + $0x8] sm:$0xff]
  %v20 = vld [vmem:[%s0 + $0x10] sm:$0xff]
  %v21 = vld [vmem:[%s0 + $0x18] sm:$0xff]
  %v22 = vld [vmem:[%s0 + $0x20] sm:$0xff]
  %v23 = vld [vmem:[%s0 + $0x28] sm:$0xff]
  %v24 = vld [vmem:[%s0 + $0x30] sm:$0xff]
  %v25 = vld [vmem:[%s0 + $0x38] sm:$0xff]
  %v26 = vld [vmem:[%s0 + $0x40] sm:$0xff]
  %v27 = vld [vmem:[%s0 + $0x48] sm:$0xff]
  %v28 = vld [vmem:[%s0 + $0x50] sm:$0xff]
  %v29 = vld [vmem:[%s0 + $0x58] sm:$0xff]
  %v30 = vld [vmem:[%s0 + $0x60] sm:$0xff]
  %v31 = vld [vmem:[%s0 + $0x68] sm:$0xff]
  %v32 = vld [vmem:[%s0 + $0x70] sm:$0xff]
  %v33 = vld [vmem:[%s0 + $0x78] sm:$0xff]
  %v34 = vld [vmem:[%s0 + $0x80] sm:$0xff]
  %v35 = vld [vmem:[%s0 + $0x88] sm:$0xff]
  %v36 = vld [vmem:[%s0 + $0x90] sm:$0xff]
  %v37 = vld [vmem:[%s0 + $0x98] sm:$0xff]
  %v38 = vld [vmem:[%s0 + $0xa0] sm:$0xff]
  %v39 = vld [vmem:[%s0 + $0xa8] sm:$0xff]
  %v40 = vld [vmem:[%s0 + $0xb0] sm:$0xff]
  %v41 = vld [vmem:[%s0 + $0xb8] sm:$0xff]
  %v42 = vld [vmem:[%s0 + $0xc0] sm:$0xff]
  %v43 = vld [vmem:[%s0 + $0xc8] sm:$0xff]
  %v44 = vld [vmem:[%s0 + $0xd0] sm:$0xff]
  %v45 = vld [vmem:[%s0 + $0xd8] sm:$0xff]
  %v46 = vld [vmem:[%s0 + $0xe0] sm:$0xff]
  %v47 = vld [vmem:[%s0 + $0xe8] sm:$0xff]
  %v48 = vld [vmem:[%s0 + $0xf0] sm:$0xff]
  %v49 = vld [vmem:[%s0 + $0xf8] sm:$0xff]
  %v50 = vld [vmem:[%s0 + $0x100] sm:$0xff]
  %v51 = vld [vmem:[%s0 + $0x108] sm:$0xff]
  %v52 = vld [vmem:[%s0 + $0x110] sm:$0xff]
  %v53 = vld [vmem:[%s0 + $0x118] sm:$0xff]
  %v54 = vld [vmem:[%s0 + $0x120] sm:$0xff]
  %v55 = vld [vmem:[%s0 + $0x128] sm:$0xff]
  %v56 = vld [vmem:[%s0 + $0x130] sm:$0xff]
  %v57 = vld [vmem:[%s0 + $0x138] sm:$0xff]
  %v58 = vld [vmem:[%s0 + $0x140] sm:$0xff]
  %v59 = vld [vmem:[%s0 + $0x148] sm:$0xff]
  %v60 = vld [vmem:[%s0 + $0x150] sm:$0xff]
  %v61 = vld [vmem:[%s0 + $0x158] sm:$0xff]
  %v62 = vld [vmem:[%s0 + $0x160] sm:$0xff]
  %v63 = vld [vmem:[%s0 + $0x168] sm:$0xff]
  %v64 = vld [vmem:[%s0 + $0x170] sm:$0xff]
  %v65 = vld [vmem:[%s0 + $0x178] sm:$0xff]
  %v66 = vld [vmem:[%s0 + $0x180] sm:$0xff]
  %v67 = vld [vmem:[%s0 + $0x188] sm:$0xff]
  %v68 = vld [vmem:[%s0 + $0x190] sm:$0xff]
  %v69 = vld [vmem:[%s0 + $0x198] sm:$0xff]
  %v70 = vld [vmem:[%s0 + $0x1a0] sm:$0xff]
  %v71 = vld [vmem:[%s0 + $0x1a8] sm:$0xff]
  %v72 = vld [vmem:[%s0 + $0x1b0] sm:$0xff]
  %v73 = vld [vmem:[%s0 + $0x1b8] sm:$0xff]
  %v74 = vld [vmem:[%s0 + $0x1c0] sm:$0xff]
  %v75 = vld [vmem:[%s0 + $0x1c8] sm:$0xff]
  %v76 = vld [vmem:[%s0 + $0x1d0] sm:$0xff]
  %v77 = vld [vmem:[%s0 + $0x1d8] sm:$0xff]
  %v78 = vld [vmem:[%s0 + $0x1e0] sm:$0xff]
  %v79 = vld [vmem:[%s0 + $0x1e8] sm:$0xff]
  %v80 = vld [vmem:[%s0 + $0x1f0] sm:$0xff]
  %v81 = vld [vmem:[%s0 + $0x1f8] sm:$0xff]
  %v82 = vld [vmem:[%s0 + $0x200] sm:$0xff]
  %v83 = vld [vmem:[%s0 + $0x208] sm:$0xff]
  %v84 = vld [vmem:[%s0 + $0x210] sm:$0xff]
  %v85 = vld [vmem:[%s0 + $0x218] sm:$0xff]
  %v86 = vld [vmem:[%s0 + $0x220] sm:$0xff]
  %v87 = vld [vmem:[%s0 + $0x228] sm:$0xff]
  %v88 = vld [vmem:[%s0 + $0x230] sm:$0xff]
  %v89 = vld [vmem:[%s0 + $0x238] sm:$0xff]
  %v90 = vld [vmem:[%s0 + $0x240] sm:$0xff]
  %v91 = vld [vmem:[%s0 + $0x248] sm:$0xff]
  %v92 = vld [vmem:[%s0 + $0x250] sm:$0xff]
  %v93 = vld [vmem:[%s0 + $0x258] sm:$0xff]
  %v94 = vld [vmem:[%s0 + $0x260] sm:$0xff]
  %v95 = vld [vmem:[%s0 + $0x268] sm:$0xff]
  %v96 = vld [vmem:[%s0 + $0x270] sm:$0xff]
  %v97 = vld [vmem:[%s0 + $0x278] sm:$0xff]
  %v98 = vld [vmem:[%s0 + $0x280] sm:$0xff]
  %v99 = vld [vmem:[%s0 + $0x288] sm:$0xff]
  %v100 = vld [vmem:[%s0 + $0x290] sm:$0xff]
  %v101 = vld [vmem:[%s0 + $0x298] sm:$0xff]
  %v102 = vld [vmem:[%s0 + $0x2a0] sm:$0xff]
  %v103 = vld [vmem:[%s0 + $0x2a8] sm:$0xff]
  %v104 = vld [vmem:[%s0 + $0x2b0] sm:$0xff]
  %v105 = vld [vmem:[%s0 + $0x2b8] sm:$0xff]
  %v106 = vld [vmem:[%s0 + $0x2c0] sm:$0xff]
  %v107 = vld [vmem:[%s0 + $0x2c8] sm:$0xff]
  %v108 = vld [vmem:[%s0 + $0x2d0] sm:$0xff]
  %v109 = vld [vmem:[%s0 + $0x2d8] sm:$0xff]
  %v110 = vld [vmem:[%s0 + $0x2e0] sm:$0xff]
  %v111 = vld [vmem:[%s0 + $0x2e8] sm:$0xff]
  %v112 = vld [vmem:[%s0 + $0x2f0] sm:$0xff]
  %v113 = vld [vmem:[%s0 + $0x2f8] sm:$0xff]
  %v114 = vld [vmem:[%s0 + $0x300] sm:$0xff]
  %v115 = vld [vmem:[%s0 + $0x308] sm:$0xff]
  %v116 = vld [vmem:[%s0 + $0x310] sm:$0xff]
  %v117 = vld [vmem:[%s0 + $0x318] sm:$0xff]
  %v118 = vld [vmem:[%s0 + $0x320] sm:$0xff]
  %v119 = vld [vmem:[%s0 + $0x328] sm:$0xff]
  %v120 = vld [vmem:[%s0 + $0x330] sm:$0xff]
  %v121 = vld [vmem:[%s0 + $0x338] sm:$0xff]
  %v122 = vld [vmem:[%s0 + $0x340] sm:$0xff]
  %v123 = vld [vmem:[%s0 + $0x348] sm:$0xff]
  %v124 = vld [vmem:[%s0 + $0x350] sm:$0xff]
  %v125 = vld [vmem:[%s0 + $0x358] sm:$0xff]
  %v126 = vld [vmem:[%s0 + $0x360] sm:$0xff]
  %v127 = vld [vmem:[%s0 + $0x368] sm:$0xff]
  %v128 = vld [vmem:[%s0 + $0x370] sm:$0xff]
  %v129 = vld [vmem:[%s0 + $0x378] sm:$0xff]
  %v130 = vld [vmem:[%s0 + $0x380] sm:$0xff]
  %v131 = vld [vmem:[%s0 + $0x388] sm:$0xff]
  %v132 = vld [vmem:[%s0 + $0x390] sm:$0xff]
  %v133 = vld [vmem:[%s0 + $0x398] sm:$0xff]
  %v134 = vld [vmem:[%s0 + $0x3a0] sm:$0xff]
  %v135 = vld [vmem:[%s0 + $0x3a8] sm:$0xff]
  %v136 = vld [vmem:[%s0 + $0x3b0] sm:$0xff]
  %v137 = vld [vmem:[%s0 + $0x3b8] sm:$0xff]
  %v138 = vld [vmem:[%s0 + $0x3c0] sm:$0xff]
  %v139 = vld [vmem:[%s0 + $0x3c8] sm:$0xff]
  %v140 = vld [vmem:[%s0 + $0x3d0] sm:$0xff]
  %v141 = vld [vmem:[%s0 + $0x3d8] sm:$0xff]
  %v142 = vld [vmem:[%s0 + $0x3e0] sm:$0xff]
  %v143 = vld [vmem:[%s0 + $0x3e8] sm:$0xff]
  %v144 = vld [vmem:[%s0 + $0x3f0] sm:$0xff]
  %v145 = vld [vmem:[%s0 + $0x3f8] sm:$0xff]
  %v146 = vld [vmem:[%s0 + $0x400] sm:$0xff]
  %v147 = vld [vmem:[%s0 + $0x408] sm:$0xff]
  %v148 = vld [vmem:[%s0 + $0x410] sm:$0xff]
  %v149 = vld [vmem:[%s0 + $0x418] sm:$0xff]
  %v150 = vld [vmem:[%s0 + $0x420] sm:$0xff]
  %v151 = vld [vmem:[%s0 + $0x428] sm:$0xff]
  %v152 = vld [vmem:[%s0 + $0x430] sm:$0xff]
  %v153 = vld [vmem:[%s0 + $0x438] sm:$0xff]
  %v154 = vld [vmem:[%s0 + $0x440] sm:$0xff]
  %v155 = vld [vmem:[%s0 + $0x448] sm:$0xff]
  %v156 = vld [vmem:[%s0 + $0x450] sm:$0xff]
  %v157 = vld [vmem:[%s0 + $0x458] sm:$0xff]
  %v158 = vld [vmem:[%s0 + $0x460] sm:$0xff]
  %v159 = vld [vmem:[%s0 + $0x468] sm:$0xff]
  %v160 = vld [vmem:[%s0 + $0x470] sm:$0xff]
  %v161 = vld [vmem:[%s0 + $0x478] sm:$0xff]
  %v162 = vld [vmem:[%s0 + $0x480] sm:$0xff]
  %v163 = vld [vmem:[%s0 + $0x488] sm:$0xff]
  %v164 = vld [vmem:[%s0 + $0x490] sm:$0xff]
  %v165 = vld [vmem:[%s0 + $0x498] sm:$0xff]
  %v166 = vld [vmem:[%s0 + $0x4a0] sm:$0xff]
  %v167 = vld [vmem:[%s0 + $0x4a8] sm:$0xff]
  %v168 = vld [vmem:[%s0 + $0x4b0] sm:$0xff]
  %v169 = vld [vmem:[%s0 + $0x4b8] sm:$0xff]
  %v170 = vld [vmem:[%s0 + $0x4c0] sm:$0xff]
  %v171 = vld [vmem:[%s0 + $0x4c8] sm:$0xff]
  %v172 = vld [vmem:[%s0 + $0x4d0] sm:$0xff]
  %v173 = vld [vmem:[%s0 + $0x4d8] sm:$0xff]
  %v174 = vld [vmem:[%s0 + $0x4e0] sm:$0xff]
  %v175 = vld [vmem:[%s0 + $0x4e8] sm:$0xff]
  %v176 = vld [vmem:[%s0 + $0x4f0] sm:$0xff]
  %v177 = vld [vmem:[%s0 + $0x4f8] sm:$0xff]
  %v178 = vld [vmem:[%s0 + $0x500] sm:$0xff]
  %v179 = vld [vmem:[%s0 + $0x508] sm:$0xff]
  %v180 = vld [vmem:[%s0 + $0x510] sm:$0xff]
  %v181 = vld [vmem:[%s0 + $0x518] sm:$0xff]
  %v182 = vld [vmem:[%s0 + $0x520] sm:$0xff]
  %v183 = vld [vmem:[%s0 + $0x528] sm:$0xff]
  %v184 = vld [vmem:[%s0 + $0x530] sm:$0xff]
  %v185 = vld [vmem:[%s0 + $0x538] sm:$0xff]
  %v186 = vld [vmem:[%s0 + $0x540] sm:$0xff]
  %v187 = vld [vmem:[%s0 + $0x548] sm:$0xff]
  %v188 = vld [vmem:[%s0 + $0x550] sm:$0xff]
  %v189 = vld [vmem:[%s0 + $0x558] sm:$0xff]
  %v190 = vld [vmem:[%s0 + $0x560] sm:$0xff]
  %v191 = vld [vmem:[%s0 + $0x568] sm:$0xff]
  %v192 = vld [vmem:[%s0 + $0x570] sm:$0xff]
  %v193 = vld [vmem:[%s0 + $0x578] sm:$0xff]
  %v194 = vld [vmem:[%s0 + $0x580] sm:$0xff]
  %v195 = vld [vmem:[%s0 + $0x588] sm:$0xff]
  %v196 = vld [vmem:[%s0 + $0x590] sm:$0xff]
  %v197 = vld [vmem:[%s0 + $0x598] sm:$0xff]
  %v198 = vld [vmem:[%s0 + $0x5a0] sm:$0xff]
  %v199 = vld [vmem:[%s0 + $0x5a8] sm:$0xff]
  %v200 = vld [vmem:[%s0 + $0x5b0] sm:$0xff]
  %v201 = vld [vmem:[%s0 + $0x5b8] sm:$0xff]
  %v202 = vld [vmem:[%s0 + $0x5c0] sm:$0xff]
  %v203 = vld [vmem:[%s0 + $0x5c8] sm:$0xff]
  %v204 = vld [vmem:[%s0 + $0x5d0] sm:$0xff]
  %v205 = vld [vmem:[%s0 + $0x5d8] sm:$0xff]
  %v206 = vld [vmem:[%s0 + $0x5e0] sm:$0xff]
  %v207 = vld [vmem:[%s0 + $0x5e8] sm:$0xff]
  %v208 = vld [vmem:[%s0 + $0x5f0] sm:$0xff]
  %v209 = vld [vmem:[%s0 + $0x5f8] sm:$0xff]
  %v210 = vld [vmem:[%s0 + $0x600] sm:$0xff]
  %v211 = vld [vmem:[%s0 + $0x608] sm:$0xff]
  %v212 = vld [vmem:[%s0 + $0x610] sm:$0xff]
  %v213 = vld [vmem:[%s0 + $0x618] sm:$0xff]
  %v214 = vld [vmem:[%s0 + $0x620] sm:$0xff]
  %v215 = vld [vmem:[%s0 + $0x628] sm:$0xff]
  %v216 = vld [vmem:[%s0 + $0x630] sm:$0xff]
  %v217 = vld [vmem:[%s0 + $0x638] sm:$0xff]
  %v218 = vld [vmem:[%s0 + $0x640] sm:$0xff]
  %v219 = vld [vmem:[%s0 + $0x648] sm:$0xff]
  %v220 = vld [vmem:[%s0 + $0x650] sm:$0xff]
  %v221 = vld [vmem:[%s0 + $0x658] sm:$0xff]
  %v222 = vld [vmem:[%s0 + $0x660] sm:$0xff]
  %v223 = vld [vmem:[%s0 + $0x668] sm:$0xff]
  %v224 = vld [vmem:[%s0 + $0x670] sm:$0xff]
  %v225 = vld [vmem:[%s0 + $0x678] sm:$0xff]
  %v226 = vld [vmem:[%s0 + $0x680] sm:$0xff]
  %v227 = vld [vmem:[%s0 + $0x688] sm:$0xff]
  %v228 = vld [vmem:[%s0 + $0x690] sm:$0xff]
  %v229 = vld [vmem:[%s0 + $0x698] sm:$0xff]
  %v230 = vld [vmem:[%s0 + $0x6a0] sm:$0xff]
  %v231 = vld [vmem:[%s0 + $0x6a8] sm:$0xff]
  %v232 = vld [vmem:[%s0 + $0x6b0] sm:$0xff]
  %v233 = vld [vmem:[%s0 + $0x6b8] sm:$0xff]
  %v234 = vld [vmem:[%s0 + $0x6c0] sm:$0xff]
  %v235 = vld [vmem:[%s0 + $0x6c8] sm:$0xff]
  %v236 = vld [vmem:[%s0 + $0x6d0] sm:$0xff]
  %v237 = vld [vmem:[%s0 + $0x6d8] sm:$0xff]
  %v238 = vld [vmem:[%s0 + $0x6e0] sm:$0xff]
  %v239 = vld [vmem:[%s0 + $0x6e8] sm:$0xff]
  %v240 = vld [vmem:[%s0 + $0x6f0] sm:$0xff]
  %v241 = vld [vmem:[%s0 + $0x6f8] sm:$0xff]
  %v242 = vld [vmem:[%s0 + $0x700] sm:$0xff]
  %v243 = vld [vmem:[%s0 + $0x708] sm:$0xff]
  %v244 = vld [vmem:[%s0 + $0x710] sm:$0xff]
  %v245 = vld [vmem:[%s0 + $0x718] sm:$0xff]
  %v246 = vld [vmem:[%s0 + $0x720] sm:$0xff]
  %v247 = vld [vmem:[%s0 + $0x728] sm:$0xff]
  %v248 = vld [vmem:[%s0 + $0x730] sm:$0xff]
  %v249 = vld [vmem:[%s0 + $0x738] sm:$0xff]
  %v250 = vld [vmem:[%s0 + $0x740] sm:$0xff]
  %v251 = vld [vmem:[%s0 + $0x748] sm:$0xff]
  %v252 = vld [vmem:[%s0 + $0x750] sm:$0xff]
  %v253 = vld [vmem:[%s0 + $0x758] sm:$0xff]
  %v254 = vld [vmem:[%s0 + $0x760] sm:$0xff]
  %v255 = vld [vmem:[%s0 + $0x768] sm:$0xff]
  %v256 = vld [vmem:[%s0 + $0x770] sm:$0xff]
  %v257 = vld [vmem:[%s0 + $0x778] sm:$0xff]
  %v258 = vld [vmem:[%s0 + $0x780] sm:$0xff]
  %v259 = vld [vmem:[%s0 + $0x788] sm:$0xff]
  %v260 = vld [vmem:[%s0 + $0x790] sm:$0xff]
  %v261 = vld [vmem:[%s0 + $0x798] sm:$0xff]
  %v262 = vld [vmem:[%s0 + $0x7a0] sm:$0xff]
  %v263 = vld [vmem:[%s0 + $0x7a8] sm:$0xff]
  %v264 = vld [vmem:[%s0 + $0x7b0] sm:$0xff]
  %v265 = vld [vmem:[%s0 + $0x7b8] sm:$0xff]
  %v266 = vld [vmem:[%s0 + $0x7c0] sm:$0xff]
  %v267 = vld [vmem:[%s0 + $0x7c8] sm:$0xff]
  %v268 = vld [vmem:[%s0 + $0x7d0] sm:$0xff]
  %v269 = vld [vmem:[%s0 + $0x7d8] sm:$0xff]
  %v270 = vld [vmem:[%s0 + $0x7e0] sm:$0xff]
  %v271 = vld [vmem:[%s0 + $0x7e8] sm:$0xff]
  %v272 = vld [vmem:[%s0 + $0x7f0] sm:$0xff]
  %v273 = vld [vmem:[%s0 + $0x7f8] sm:$0xff]
  %v274 = vld [vmem:[%s2] sm:$0x1]
  %v276 = vperm.slane %v274, 0
  %v278 = vmul.f32 %v18, %v276
  %v279 = vmul.f32 %v19, %v276
  %v280 = vmul.f32 %v20, %v276
  %v281 = vmul.f32 %v21, %v276
  %v282 = vmul.f32 %v22, %v276
  %v283 = vmul.f32 %v23, %v276
  %v284 = vmul.f32 %v24, %v276
  %v285 = vmul.f32 %v25, %v276
  %v286 = vmul.f32 %v26, %v276
  %v287 = vmul.f32 %v27, %v276
  %v288 = vmul.f32 %v28, %v276
  %v289 = vmul.f32 %v29, %v276
  %v290 = vmul.f32 %v30, %v276
  %v291 = vmul.f32 %v31, %v276
  %v292 = vmul.f32 %v32, %v276
  %v293 = vmul.f32 %v33, %v276
  %v294 = vmul.f32 %v34, %v276
  %v295 = vmul.f32 %v35, %v276
  %v296 = vmul.f32 %v36, %v276
  %v297 = vmul.f32 %v37, %v276
  %v298 = vmul.f32 %v38, %v276
  %v299 = vmul.f32 %v39, %v276
  %v300 = vmul.f32 %v40, %v276
  %v301 = vmul.f32 %v41, %v276
  %v302 = vmul.f32 %v42, %v276
  %v303 = vmul.f32 %v43, %v276
  %v304 = vmul.f32 %v44, %v276
  %v305 = vmul.f32 %v45, %v276
  %v306 = vmul.f32 %v46, %v276
  %v307 = vmul.f32 %v47, %v276
  %v308 = vmul.f32 %v48, %v276
  %v309 = vmul.f32 %v49, %v276
  %v310 = vmul.f32 %v50, %v276
  %v311 = vmul.f32 %v51, %v276
  %v312 = vmul.f32 %v52, %v276
  %v313 = vmul.f32 %v53, %v276
  %v314 = vmul.f32 %v54, %v276
  %v315 = vmul.f32 %v55, %v276
  %v316 = vmul.f32 %v56, %v276
  %v317 = vmul.f32 %v57, %v276
  %v318 = vmul.f32 %v58, %v276
  %v319 = vmul.f32 %v59, %v276
  %v320 = vmul.f32 %v60, %v276
  %v321 = vmul.f32 %v61, %v276
  %v322 = vmul.f32 %v62, %v276
  %v323 = vmul.f32 %v63, %v276
  %v324 = vmul.f32 %v64, %v276
  %v325 = vmul.f32 %v65, %v276
  %v326 = vmul.f32 %v66, %v276
  %v327 = vmul.f32 %v67, %v276
  %v328 = vmul.f32 %v68, %v276
  %v329 = vmul.f32 %v69, %v276
  %v330 = vmul.f32 %v70, %v276
  %v331 = vmul.f32 %v71, %v276
  %v332 = vmul.f32 %v72, %v276
  %v333 = vmul.f32 %v73, %v276
  %v334 = vmul.f32 %v74, %v276
  %v335 = vmul.f32 %v75, %v276
  %v336 = vmul.f32 %v76, %v276
  %v337 = vmul.f32 %v77, %v276
  %v338 = vmul.f32 %v78, %v276
  %v339 = vmul.f32 %v79, %v276
  %v340 = vmul.f32 %v80, %v276
  %v341 = vmul.f32 %v81, %v276
  %v342 = vmul.f32 %v82, %v276
  %v343 = vmul.f32 %v83, %v276
  %v344 = vmul.f32 %v84, %v276
  %v345 = vmul.f32 %v85, %v276
  %v346 = vmul.f32 %v86, %v276
  %v347 = vmul.f32 %v87, %v276
  %v348 = vmul.f32 %v88, %v276
  %v349 = vmul.f32 %v89, %v276
  %v350 = vmul.f32 %v90, %v276
  %v351 = vmul.f32 %v91, %v276
  %v352 = vmul.f32 %v92, %v276
  %v353 = vmul.f32 %v93, %v276
  %v354 = vmul.f32 %v94, %v276
  %v355 = vmul.f32 %v95, %v276
  %v356 = vmul.f32 %v96, %v276
  %v357 = vmul.f32 %v97, %v276
  %v358 = vmul.f32 %v98, %v276
  %v359 = vmul.f32 %v99, %v276
  %v360 = vmul.f32 %v100, %v276
  %v361 = vmul.f32 %v101, %v276
  %v362 = vmul.f32 %v102, %v276
  %v363 = vmul.f32 %v103, %v276
  %v364 = vmul.f32 %v104, %v276
  %v365 = vmul.f32 %v105, %v276
  %v366 = vmul.f32 %v106, %v276
  %v367 = vmul.f32 %v107, %v276
  %v368 = vmul.f32 %v108, %v276
  %v369 = vmul.f32 %v109, %v276
  %v370 = vmul.f32 %v110, %v276
  %v371 = vmul.f32 %v111, %v276
  %v372 = vmul.f32 %v112, %v276
  %v373 = vmul.f32 %v113, %v276
  %v374 = vmul.f32 %v114, %v276
  %v375 = vmul.f32 %v115, %v276
  %v376 = vmul.f32 %v116, %v276
  %v377 = vmul.f32 %v117, %v276
  %v378 = vmul.f32 %v118, %v276
  %v379 = vmul.f32 %v119, %v276
  %v380 = vmul.f32 %v120, %v276
  %v381 = vmul.f32 %v121, %v276
  %v382 = vmul.f32 %v122, %v276
  %v383 = vmul.f32 %v123, %v276
  %v384 = vmul.f32 %v124, %v276
  %v385 = vmul.f32 %v125, %v276
  %v386 = vmul.f32 %v126, %v276
  %v387 = vmul.f32 %v127, %v276
  %v388 = vmul.f32 %v128, %v276
  %v389 = vmul.f32 %v129, %v276
  %v390 = vmul.f32 %v130, %v276
  %v391 = vmul.f32 %v131, %v276
  %v392 = vmul.f32 %v132, %v276
  %v393 = vmul.f32 %v133, %v276
  %v394 = vmul.f32 %v134, %v276
  %v395 = vmul.f32 %v135, %v276
  %v396 = vmul.f32 %v136, %v276
  %v397 = vmul.f32 %v137, %v276
  %v398 = vmul.f32 %v138, %v276
  %v399 = vmul.f32 %v139, %v276
  %v400 = vmul.f32 %v140, %v276
  %v401 = vmul.f32 %v141, %v276
  %v402 = vmul.f32 %v142, %v276
  %v403 = vmul.f32 %v143, %v276
  %v404 = vmul.f32 %v144, %v276
  %v405 = vmul.f32 %v145, %v276
  %v406 = vmul.f32 %v146, %v276
  %v407 = vmul.f32 %v147, %v276
  %v408 = vmul.f32 %v148, %v276
  %v409 = vmul.f32 %v149, %v276
  %v410 = vmul.f32 %v150, %v276
  %v411 = vmul.f32 %v151, %v276
  %v412 = vmul.f32 %v152, %v276
  %v413 = vmul.f32 %v153, %v276
  %v414 = vmul.f32 %v154, %v276
  %v415 = vmul.f32 %v155, %v276
  %v416 = vmul.f32 %v156, %v276
  %v417 = vmul.f32 %v157, %v276
  %v418 = vmul.f32 %v158, %v276
  %v419 = vmul.f32 %v159, %v276
  %v420 = vmul.f32 %v160, %v276
  %v421 = vmul.f32 %v161, %v276
  %v422 = vmul.f32 %v162, %v276
  %v423 = vmul.f32 %v163, %v276
  %v424 = vmul.f32 %v164, %v276
  %v425 = vmul.f32 %v165, %v276
  %v426 = vmul.f32 %v166, %v276
  %v427 = vmul.f32 %v167, %v276
  %v428 = vmul.f32 %v168, %v276
  %v429 = vmul.f32 %v169, %v276
  %v430 = vmul.f32 %v170, %v276
  %v431 = vmul.f32 %v171, %v276
  %v432 = vmul.f32 %v172, %v276
  %v433 = vmul.f32 %v173, %v276
  %v434 = vmul.f32 %v174, %v276
  %v435 = vmul.f32 %v175, %v276
  %v436 = vmul.f32 %v176, %v276
  %v437 = vmul.f32 %v177, %v276
  %v438 = vmul.f32 %v178, %v276
  %v439 = vmul.f32 %v179, %v276
  %v440 = vmul.f32 %v180, %v276
  %v441 = vmul.f32 %v181, %v276
  %v442 = vmul.f32 %v182, %v276
  %v443 = vmul.f32 %v183, %v276
  %v444 = vmul.f32 %v184, %v276
  %v445 = vmul.f32 %v185, %v276
  %v446 = vmul.f32 %v186, %v276
  %v447 = vmul.f32 %v187, %v276
  %v448 = vmul.f32 %v188, %v276
  %v449 = vmul.f32 %v189, %v276
  %v450 = vmul.f32 %v190, %v276
  %v451 = vmul.f32 %v191, %v276
  %v452 = vmul.f32 %v192, %v276
  %v453 = vmul.f32 %v193, %v276
  %v454 = vmul.f32 %v194, %v276
  %v455 = vmul.f32 %v195, %v276
  %v456 = vmul.f32 %v196, %v276
  %v457 = vmul.f32 %v197, %v276
  %v458 = vmul.f32 %v198, %v276
  %v459 = vmul.f32 %v199, %v276
  %v460 = vmul.f32 %v200, %v276
  %v461 = vmul.f32 %v201, %v276
  %v462 = vmul.f32 %v202, %v276
  %v463 = vmul.f32 %v203, %v276
  %v464 = vmul.f32 %v204, %v276
  %v465 = vmul.f32 %v205, %v276
  %v466 = vmul.f32 %v206, %v276
  %v467 = vmul.f32 %v207, %v276
  %v468 = vmul.f32 %v208, %v276
  %v469 = vmul.f32 %v209, %v276
  %v470 = vmul.f32 %v210, %v276
  %v471 = vmul.f32 %v211, %v276
  %v472 = vmul.f32 %v212, %v276
  %v473 = vmul.f32 %v213, %v276
  %v474 = vmul.f32 %v214, %v276
  %v475 = vmul.f32 %v215, %v276
  %v476 = vmul.f32 %v216, %v276
  %v477 = vmul.f32 %v217, %v276
  %v478 = vmul.f32 %v218, %v276
  %v479 = vmul.f32 %v219, %v276
  %v480 = vmul.f32 %v220, %v276
  %v481 = vmul.f32 %v221, %v276
  %v482 = vmul.f32 %v222, %v276
  %v483 = vmul.f32 %v223, %v276
  %v484 = vmul.f32 %v224, %v276
  %v485 = vmul.f32 %v225, %v276
  %v486 = vmul.f32 %v226, %v276
  %v487 = vmul.f32 %v227, %v276
  %v488 = vmul.f32 %v228, %v276
  %v489 = vmul.f32 %v229, %v276
  %v490 = vmul.f32 %v230, %v276
  %v491 = vmul.f32 %v231, %v276
  %v492 = vmul.f32 %v232, %v276
  %v493 = vmul.f32 %v233, %v276
  %v494 = vmul.f32 %v234, %v276
  %v495 = vmul.f32 %v235, %v276
  %v496 = vmul.f32 %v236, %v276
  %v497 = vmul.f32 %v237, %v276
  %v498 = vmul.f32 %v238, %v276
  %v499 = vmul.f32 %v239, %v276
  %v500 = vmul.f32 %v240, %v276
  %v501 = vmul.f32 %v241, %v276
  %v502 = vmul.f32 %v242, %v276
  %v503 = vmul.f32 %v243, %v276
  %v504 = vmul.f32 %v244, %v276
  %v505 = vmul.f32 %v245, %v276
  %v506 = vmul.f32 %v246, %v276
  %v507 = vmul.f32 %v247, %v276
  %v508 = vmul.f32 %v248, %v276
  %v509 = vmul.f32 %v249, %v276
  %v510 = vmul.f32 %v250, %v276
  %v511 = vmul.f32 %v251, %v276
  %v512 = vmul.f32 %v252, %v276
  %v513 = vmul.f32 %v253, %v276
  %v514 = vmul.f32 %v254, %v276
  %v515 = vmul.f32 %v255, %v276
  %v516 = vmul.f32 %v256, %v276
  %v517 = vmul.f32 %v257, %v276
  %v518 = vmul.f32 %v258, %v276
  %v519 = vmul.f32 %v259, %v276
  %v520 = vmul.f32 %v260, %v276
  %v521 = vmul.f32 %v261, %v276
  %v522 = vmul.f32 %v262, %v276
  %v523 = vmul.f32 %v263, %v276
  %v524 = vmul.f32 %v264, %v276
  %v525 = vmul.f32 %v265, %v276
  %v526 = vmul.f32 %v266, %v276
  %v527 = vmul.f32 %v267, %v276
  %v528 = vmul.f32 %v268, %v276
  %v529 = vmul.f32 %v269, %v276
  %v530 = vmul.f32 %v270, %v276
  %v531 = vmul.f32 %v271, %v276
  %v532 = vmul.f32 %v272, %v276
  %v533 = vmul.f32 %v273, %v276
  %v534 = vld [vmem:[%s3] sm:$0x1]
  %v536 = vperm.slane %v534, 0
  %v538 = vadd.f32 %v278, %v536
  %v539 = vadd.f32 %v279, %v536
  %v540 = vadd.f32 %v280, %v536
  %v541 = vadd.f32 %v281, %v536
  %v542 = vadd.f32 %v282, %v536
  %v543 = vadd.f32 %v283, %v536
  %v544 = vadd.f32 %v284, %v536
  %v545 = vadd.f32 %v285, %v536
  %v546 = vadd.f32 %v286, %v536
  %v547 = vadd.f32 %v287, %v536
  %v548 = vadd.f32 %v288, %v536
  %v549 = vadd.f32 %v289, %v536
  %v550 = vadd.f32 %v290, %v536
  %v551 = vadd.f32 %v291, %v536
  %v552 = vadd.f32 %v292, %v536
  %v553 = vadd.f32 %v293, %v536
  %v554 = vadd.f32 %v294, %v536
  %v555 = vadd.f32 %v295, %v536
  %v556 = vadd.f32 %v296, %v536
  %v557 = vadd.f32 %v297, %v536
  %v558 = vadd.f32 %v298, %v536
  %v559 = vadd.f32 %v299, %v536
  %v560 = vadd.f32 %v300, %v536
  %v561 = vadd.f32 %v301, %v536
  %v562 = vadd.f32 %v302, %v536
  %v563 = vadd.f32 %v303, %v536
  %v564 = vadd.f32 %v304, %v536
  %v565 = vadd.f32 %v305, %v536
  %v566 = vadd.f32 %v306, %v536
  %v567 = vadd.f32 %v307, %v536
  %v568 = vadd.f32 %v308, %v536
  %v569 = vadd.f32 %v309, %v536
  %v570 = vadd.f32 %v310, %v536
  %v571 = vadd.f32 %v311, %v536
  %v572 = vadd.f32 %v312, %v536
  %v573 = vadd.f32 %v313, %v536
  %v574 = vadd.f32 %v314, %v536
  %v575 = vadd.f32 %v315, %v536
  %v576 = vadd.f32 %v316, %v536
  %v577 = vadd.f32 %v317, %v536
  %v578 = vadd.f32 %v318, %v536
  %v579 = vadd.f32 %v319, %v536
  %v580 = vadd.f32 %v320, %v536
  %v581 = vadd.f32 %v321, %v536
  %v582 = vadd.f32 %v322, %v536
  %v583 = vadd.f32 %v323, %v536
  %v584 = vadd.f32 %v324, %v536
  %v585 = vadd.f32 %v325, %v536
  %v586 = vadd.f32 %v326, %v536
  %v587 = vadd.f32 %v327, %v536
  %v588 = vadd.f32 %v328, %v536
  %v589 = vadd.f32 %v329, %v536
  %v590 = vadd.f32 %v330, %v536
  %v591 = vadd.f32 %v331, %v536
  %v592 = vadd.f32 %v332, %v536
  %v593 = vadd.f32 %v333, %v536
  %v594 = vadd.f32 %v334, %v536
  %v595 = vadd.f32 %v335, %v536
  %v596 = vadd.f32 %v336, %v536
  %v597 = vadd.f32 %v337, %v536
  %v598 = vadd.f32 %v338, %v536
  %v599 = vadd.f32 %v339, %v536
  %v600 = vadd.f32 %v340, %v536
  %v601 = vadd.f32 %v341, %v536
  %v602 = vadd.f32 %v342, %v536
  %v603 = vadd.f32 %v343, %v536
  %v604 = vadd.f32 %v344, %v536
  %v605 = vadd.f32 %v345, %v536
  %v606 = vadd.f32 %v346, %v536
  %v607 = vadd.f32 %v347, %v536
  %v608 = vadd.f32 %v348, %v536
  %v609 = vadd.f32 %v349, %v536
  %v610 = vadd.f32 %v350, %v536
  %v611 = vadd.f32 %v351, %v536
  %v612 = vadd.f32 %v352, %v536
  %v613 = vadd.f32 %v353, %v536
  %v614 = vadd.f32 %v354, %v536
  %v615 = vadd.f32 %v355, %v536
  %v616 = vadd.f32 %v356, %v536
  %v617 = vadd.f32 %v357, %v536
  %v618 = vadd.f32 %v358, %v536
  %v619 = vadd.f32 %v359, %v536
  %v620 = vadd.f32 %v360, %v536
  %v621 = vadd.f32 %v361, %v536
  %v622 = vadd.f32 %v362, %v536
  %v623 = vadd.f32 %v363, %v536
  %v624 = vadd.f32 %v364, %v536
  %v625 = vadd.f32 %v365, %v536
  %v626 = vadd.f32 %v366, %v536
  %v627 = vadd.f32 %v367, %v536
  %v628 = vadd.f32 %v368, %v536
  %v629 = vadd.f32 %v369, %v536
  %v630 = vadd.f32 %v370, %v536
  %v631 = vadd.f32 %v371, %v536
  %v632 = vadd.f32 %v372, %v536
  %v633 = vadd.f32 %v373, %v536
  %v634 = vadd.f32 %v374, %v536
  %v635 = vadd.f32 %v375, %v536
  %v636 = vadd.f32 %v376, %v536
  %v637 = vadd.f32 %v377, %v536
  %v638 = vadd.f32 %v378, %v536
  %v639 = vadd.f32 %v379, %v536
  %v640 = vadd.f32 %v380, %v536
  %v641 = vadd.f32 %v381, %v536
  %v642 = vadd.f32 %v382, %v536
  %v643 = vadd.f32 %v383, %v536
  %v644 = vadd.f32 %v384, %v536
  %v645 = vadd.f32 %v385, %v536
  %v646 = vadd.f32 %v386, %v536
  %v647 = vadd.f32 %v387, %v536
  %v648 = vadd.f32 %v388, %v536
  %v649 = vadd.f32 %v389, %v536
  %v650 = vadd.f32 %v390, %v536
  %v651 = vadd.f32 %v391, %v536
  %v652 = vadd.f32 %v392, %v536
  %v653 = vadd.f32 %v393, %v536
  %v654 = vadd.f32 %v394, %v536
  %v655 = vadd.f32 %v395, %v536
  %v656 = vadd.f32 %v396, %v536
  %v657 = vadd.f32 %v397, %v536
  %v658 = vadd.f32 %v398, %v536
  %v659 = vadd.f32 %v399, %v536
  %v660 = vadd.f32 %v400, %v536
  %v661 = vadd.f32 %v401, %v536
  %v662 = vadd.f32 %v402, %v536
  %v663 = vadd.f32 %v403, %v536
  %v664 = vadd.f32 %v404, %v536
  %v665 = vadd.f32 %v405, %v536
  %v666 = vadd.f32 %v406, %v536
  %v667 = vadd.f32 %v407, %v536
  %v668 = vadd.f32 %v408, %v536
  %v669 = vadd.f32 %v409, %v536
  %v670 = vadd.f32 %v410, %v536
  %v671 = vadd.f32 %v411, %v536
  %v672 = vadd.f32 %v412, %v536
  %v673 = vadd.f32 %v413, %v536
  %v674 = vadd.f32 %v414, %v536
  %v675 = vadd.f32 %v415, %v536
  %v676 = vadd.f32 %v416, %v536
  %v677 = vadd.f32 %v417, %v536
  %v678 = vadd.f32 %v418, %v536
  %v679 = vadd.f32 %v419, %v536
  %v680 = vadd.f32 %v420, %v536
  %v681 = vadd.f32 %v421, %v536
  %v682 = vadd.f32 %v422, %v536
  %v683 = vadd.f32 %v423, %v536
  %v684 = vadd.f32 %v424, %v536
  %v685 = vadd.f32 %v425, %v536
  %v686 = vadd.f32 %v426, %v536
  %v687 = vadd.f32 %v427, %v536
  %v688 = vadd.f32 %v428, %v536
  %v689 = vadd.f32 %v429, %v536
  %v690 = vadd.f32 %v430, %v536
  %v691 = vadd.f32 %v431, %v536
  %v692 = vadd.f32 %v432, %v536
  %v693 = vadd.f32 %v433, %v536
  %v694 = vadd.f32 %v434, %v536
  %v695 = vadd.f32 %v435, %v536
  %v696 = vadd.f32 %v436, %v536
  %v697 = vadd.f32 %v437, %v536
  %v698 = vadd.f32 %v438, %v536
  %v699 = vadd.f32 %v439, %v536
  %v700 = vadd.f32 %v440, %v536
  %v701 = vadd.f32 %v441, %v536
  %v702 = vadd.f32 %v442, %v536
  %v703 = vadd.f32 %v443, %v536
  %v704 = vadd.f32 %v444, %v536
  %v705 = vadd.f32 %v445, %v536
  %v706 = vadd.f32 %v446, %v536
  %v707 = vadd.f32 %v447, %v536
  %v708 = vadd.f32 %v448, %v536
  %v709 = vadd.f32 %v449, %v536
  %v710 = vadd.f32 %v450, %v536
  %v711 = vadd.f32 %v451, %v536
  %v712 = vadd.f32 %v452, %v536
  %v713 = vadd.f32 %v453, %v536
  %v714 = vadd.f32 %v454, %v536
  %v715 = vadd.f32 %v455, %v536
  %v716 = vadd.f32 %v456, %v536
  %v717 = vadd.f32 %v457, %v536
  %v718 = vadd.f32 %v458, %v536
  %v719 = vadd.f32 %v459, %v536
  %v720 = vadd.f32 %v460, %v536
  %v721 = vadd.f32 %v461, %v536
  %v722 = vadd.f32 %v462, %v536
  %v723 = vadd.f32 %v463, %v536
  %v724 = vadd.f32 %v464, %v536
  %v725 = vadd.f32 %v465, %v536
  %v726 = vadd.f32 %v466, %v536
  %v727 = vadd.f32 %v467, %v536
  %v728 = vadd.f32 %v468, %v536
  %v729 = vadd.f32 %v469, %v536
  %v730 = vadd.f32 %v470, %v536
  %v731 = vadd.f32 %v471, %v536
  %v732 = vadd.f32 %v472, %v536
  %v733 = vadd.f32 %v473, %v536
  %v734 = vadd.f32 %v474, %v536
  %v735 = vadd.f32 %v475, %v536
  %v736 = vadd.f32 %v476, %v536
  %v737 = vadd.f32 %v477, %v536
  %v738 = vadd.f32 %v478, %v536
  %v739 = vadd.f32 %v479, %v536
  %v740 = vadd.f32 %v480, %v536
  %v741 = vadd.f32 %v481, %v536
  %v742 = vadd.f32 %v482, %v536
  %v743 = vadd.f32 %v483, %v536
  %v744 = vadd.f32 %v484, %v536
  %v745 = vadd.f32 %v485, %v536
  %v746 = vadd.f32 %v486, %v536
  %v747 = vadd.f32 %v487, %v536
  %v748 = vadd.f32 %v488, %v536
  %v749 = vadd.f32 %v489, %v536
  %v750 = vadd.f32 %v490, %v536
  %v751 = vadd.f32 %v491, %v536
  %v752 = vadd.f32 %v492, %v536
  %v753 = vadd.f32 %v493, %v536
  %v754 = vadd.f32 %v494, %v536
  %v755 = vadd.f32 %v495, %v536
  %v756 = vadd.f32 %v496, %v536
  %v757 = vadd.f32 %v497, %v536
  %v758 = vadd.f32 %v498, %v536
  %v759 = vadd.f32 %v499, %v536
  %v760 = vadd.f32 %v500, %v536
  %v761 = vadd.f32 %v501, %v536
  %v762 = vadd.f32 %v502, %v536
  %v763 = vadd.f32 %v503, %v536
  %v764 = vadd.f32 %v504, %v536
  %v765 = vadd.f32 %v505, %v536
  %v766 = vadd.f32 %v506, %v536
  %v767 = vadd.f32 %v507, %v536
  %v768 = vadd.f32 %v508, %v536
  %v769 = vadd.f32 %v509, %v536
  %v770 = vadd.f32 %v510, %v536
  %v771 = vadd.f32 %v511, %v536
  %v772 = vadd.f32 %v512, %v536
  %v773 = vadd.f32 %v513, %v536
  %v774 = vadd.f32 %v514, %v536
  %v775 = vadd.f32 %v515, %v536
  %v776 = vadd.f32 %v516, %v536
  %v777 = vadd.f32 %v517, %v536
  %v778 = vadd.f32 %v518, %v536
  %v779 = vadd.f32 %v519, %v536
  %v780 = vadd.f32 %v520, %v536
  %v781 = vadd.f32 %v521, %v536
  %v782 = vadd.f32 %v522, %v536
  %v783 = vadd.f32 %v523, %v536
  %v784 = vadd.f32 %v524, %v536
  %v785 = vadd.f32 %v525, %v536
  %v786 = vadd.f32 %v526, %v536
  %v787 = vadd.f32 %v527, %v536
  %v788 = vadd.f32 %v528, %v536
  %v789 = vadd.f32 %v529, %v536
  %v790 = vadd.f32 %v530, %v536
  %v791 = vadd.f32 %v531, %v536
  %v792 = vadd.f32 %v532, %v536
  %v793 = vadd.f32 %v533, %v536
  %v794 = vmax.f32 %v538, 0.0
  %v795 = vmax.f32 %v539, 0.0
  %v796 = vmax.f32 %v540, 0.0
  %v797 = vmax.f32 %v541, 0.0
  %v798 = vmax.f32 %v542, 0.0
  %v799 = vmax.f32 %v543, 0.0
  %v800 = vmax.f32 %v544, 0.0
  %v801 = vmax.f32 %v545, 0.0
  %v802 = vmax.f32 %v546, 0.0
  %v803 = vmax.f32 %v547, 0.0
  %v804 = vmax.f32 %v548, 0.0
  %v805 = vmax.f32 %v549, 0.0
  %v806 = vmax.f32 %v550, 0.0
  %v807 = vmax.f32 %v551, 0.0
  %v808 = vmax.f32 %v552, 0.0
  %v809 = vmax.f32 %v553, 0.0
  %v810 = vmax.f32 %v554, 0.0
  %v811 = vmax.f32 %v555, 0.0
  %v812 = vmax.f32 %v556, 0.0
  %v813 = vmax.f32 %v557, 0.0
  %v814 = vmax.f32 %v558, 0.0
  %v815 = vmax.f32 %v559, 0.0
  %v816 = vmax.f32 %v560, 0.0
  %v817 = vmax.f32 %v561, 0.0
  %v818 = vmax.f32 %v562, 0.0
  %v819 = vmax.f32 %v563, 0.0
  %v820 = vmax.f32 %v564, 0.0
  %v821 = vmax.f32 %v565, 0.0
  %v822 = vmax.f32 %v566, 0.0
  %v823 = vmax.f32 %v567, 0.0
  %v824 = vmax.f32 %v568, 0.0
  %v825 = vmax.f32 %v569, 0.0
  %v826 = vmax.f32 %v570, 0.0
  %v827 = vmax.f32 %v571, 0.0
  %v828 = vmax.f32 %v572, 0.0
  %v829 = vmax.f32 %v573, 0.0
  %v830 = vmax.f32 %v574, 0.0
  %v831 = vmax.f32 %v575, 0.0
  %v832 = vmax.f32 %v576, 0.0
  %v833 = vmax.f32 %v577, 0.0
  %v834 = vmax.f32 %v578, 0.0
  %v835 = vmax.f32 %v579, 0.0
  %v836 = vmax.f32 %v580, 0.0
  %v837 = vmax.f32 %v581, 0.0
  %v838 = vmax.f32 %v582, 0.0
  %v839 = vmax.f32 %v583, 0.0
  %v840 = vmax.f32 %v584, 0.0
  %v841 = vmax.f32 %v585, 0.0
  %v842 = vmax.f32 %v586, 0.0
  %v843 = vmax.f32 %v587, 0.0
  %v844 = vmax.f32 %v588, 0.0
  %v845 = vmax.f32 %v589, 0.0
  %v846 = vmax.f32 %v590, 0.0
  %v847 = vmax.f32 %v591, 0.0
  %v848 = vmax.f32 %v592, 0.0
  %v849 = vmax.f32 %v593, 0.0
  %v850 = vmax.f32 %v594, 0.0
  %v851 = vmax.f32 %v595, 0.0
  %v852 = vmax.f32 %v596, 0.0
  %v853 = vmax.f32 %v597, 0.0
  %v854 = vmax.f32 %v598, 0.0
  %v855 = vmax.f32 %v599, 0.0
  %v856 = vmax.f32 %v600, 0.0
  %v857 = vmax.f32 %v601, 0.0
  %v858 = vmax.f32 %v602, 0.0
  %v859 = vmax.f32 %v603, 0.0
  %v860 = vmax.f32 %v604, 0.0
  %v861 = vmax.f32 %v605, 0.0
  %v862 = vmax.f32 %v606, 0.0
  %v863 = vmax.f32 %v607, 0.0
  %v864 = vmax.f32 %v608, 0.0
  %v865 = vmax.f32 %v609, 0.0
  %v866 = vmax.f32 %v610, 0.0
  %v867 = vmax.f32 %v611, 0.0
  %v868 = vmax.f32 %v612, 0.0
  %v869 = vmax.f32 %v613, 0.0
  %v870 = vmax.f32 %v614, 0.0
  %v871 = vmax.f32 %v615, 0.0
  %v872 = vmax.f32 %v616, 0.0
  %v873 = vmax.f32 %v617, 0.0
  %v874 = vmax.f32 %v618, 0.0
  %v875 = vmax.f32 %v619, 0.0
  %v876 = vmax.f32 %v620, 0.0
  %v877 = vmax.f32 %v621, 0.0
  %v878 = vmax.f32 %v622, 0.0
  %v879 = vmax.f32 %v623, 0.0
  %v880 = vmax.f32 %v624, 0.0
  %v881 = vmax.f32 %v625, 0.0
  %v882 = vmax.f32 %v626, 0.0
  %v883 = vmax.f32 %v627, 0.0
  %v884 = vmax.f32 %v628, 0.0
  %v885 = vmax.f32 %v629, 0.0
  %v886 = vmax.f32 %v630, 0.0
  %v887 = vmax.f32 %v631, 0.0
  %v888 = vmax.f32 %v632, 0.0
  %v889 = vmax.f32 %v633, 0.0
  %v890 = vmax.f32 %v634, 0.0
  %v891 = vmax.f32 %v635, 0.0
  %v892 = vmax.f32 %v636, 0.0
  %v893 = vmax.f32 %v637, 0.0
  %v894 = vmax.f32 %v638, 0.0
  %v895 = vmax.f32 %v639, 0.0
  %v896 = vmax.f32 %v640, 0.0
  %v897 = vmax.f32 %v641, 0.0
  %v898 = vmax.f32 %v642, 0.0
  %v899 = vmax.f32 %v643, 0.0
  %v900 = vmax.f32 %v644, 0.0
  %v901 = vmax.f32 %v645, 0.0
  %v902 = vmax.f32 %v646, 0.0
  %v903 = vmax.f32 %v647, 0.0
  %v904 = vmax.f32 %v648, 0.0
  %v905 = vmax.f32 %v649, 0.0
  %v906 = vmax.f32 %v650, 0.0
  %v907 = vmax.f32 %v651, 0.0
  %v908 = vmax.f32 %v652, 0.0
  %v909 = vmax.f32 %v653, 0.0
  %v910 = vmax.f32 %v654, 0.0
  %v911 = vmax.f32 %v655, 0.0
  %v912 = vmax.f32 %v656, 0.0
  %v913 = vmax.f32 %v657, 0.0
  %v914 = vmax.f32 %v658, 0.0
  %v915 = vmax.f32 %v659, 0.0
  %v916 = vmax.f32 %v660, 0.0
  %v917 = vmax.f32 %v661, 0.0
  %v918 = vmax.f32 %v662, 0.0
  %v919 = vmax.f32 %v663, 0.0
  %v920 = vmax.f32 %v664, 0.0
  %v921 = vmax.f32 %v665, 0.0
  %v922 = vmax.f32 %v666, 0.0
  %v923 = vmax.f32 %v667, 0.0
  %v924 = vmax.f32 %v668, 0.0
  %v925 = vmax.f32 %v669, 0.0
  %v926 = vmax.f32 %v670, 0.0
  %v927 = vmax.f32 %v671, 0.0
  %v928 = vmax.f32 %v672, 0.0
  %v929 = vmax.f32 %v673, 0.0
  %v930 = vmax.f32 %v674, 0.0
  %v931 = vmax.f32 %v675, 0.0
  %v932 = vmax.f32 %v676, 0.0
  %v933 = vmax.f32 %v677, 0.0
  %v934 = vmax.f32 %v678, 0.0
  %v935 = vmax.f32 %v679, 0.0
  %v936 = vmax.f32 %v680, 0.0
  %v937 = vmax.f32 %v681, 0.0
  %v938 = vmax.f32 %v682, 0.0
  %v939 = vmax.f32 %v683, 0.0
  %v940 = vmax.f32 %v684, 0.0
  %v941 = vmax.f32 %v685, 0.0
  %v942 = vmax.f32 %v686, 0.0
  %v943 = vmax.f32 %v687, 0.0
  %v944 = vmax.f32 %v688, 0.0
  %v945 = vmax.f32 %v689, 0.0
  %v946 = vmax.f32 %v690, 0.0
  %v947 = vmax.f32 %v691, 0.0
  %v948 = vmax.f32 %v692, 0.0
  %v949 = vmax.f32 %v693, 0.0
  %v950 = vmax.f32 %v694, 0.0
  %v951 = vmax.f32 %v695, 0.0
  %v952 = vmax.f32 %v696, 0.0
  %v953 = vmax.f32 %v697, 0.0
  %v954 = vmax.f32 %v698, 0.0
  %v955 = vmax.f32 %v699, 0.0
  %v956 = vmax.f32 %v700, 0.0
  %v957 = vmax.f32 %v701, 0.0
  %v958 = vmax.f32 %v702, 0.0
  %v959 = vmax.f32 %v703, 0.0
  %v960 = vmax.f32 %v704, 0.0
  %v961 = vmax.f32 %v705, 0.0
  %v962 = vmax.f32 %v706, 0.0
  %v963 = vmax.f32 %v707, 0.0
  %v964 = vmax.f32 %v708, 0.0
  %v965 = vmax.f32 %v709, 0.0
  %v966 = vmax.f32 %v710, 0.0
  %v967 = vmax.f32 %v711, 0.0
  %v968 = vmax.f32 %v712, 0.0
  %v969 = vmax.f32 %v713, 0.0
  %v970 = vmax.f32 %v714, 0.0
  %v971 = vmax.f32 %v715, 0.0
  %v972 = vmax.f32 %v716, 0.0
  %v973 = vmax.f32 %v717, 0.0
  %v974 = vmax.f32 %v718, 0.0
  %v975 = vmax.f32 %v719, 0.0
  %v976 = vmax.f32 %v720, 0.0
  %v977 = vmax.f32 %v721, 0.0
  %v978 = vmax.f32 %v722, 0.0
  %v979 = vmax.f32 %v723, 0.0
  %v980 = vmax.f32 %v724, 0.0
  %v981 = vmax.f32 %v725, 0.0
  %v982 = vmax.f32 %v726, 0.0
  %v983 = vmax.f32 %v727, 0.0
  %v984 = vmax.f32 %v728, 0.0
  %v985 = vmax.f32 %v729, 0.0
  %v986 = vmax.f32 %v730, 0.0
  %v987 = vmax.f32 %v731, 0.0
  %v988 = vmax.f32 %v732, 0.0
  %v989 = vmax.f32 %v733, 0.0
  %v990 = vmax.f32 %v734, 0.0
  %v991 = vmax.f32 %v735, 0.0
  %v992 = vmax.f32 %v736, 0.0
  %v993 = vmax.f32 %v737, 0.0
  %v994 = vmax.f32 %v738, 0.0
  %v995 = vmax.f32 %v739, 0.0
  %v996 = vmax.f32 %v740, 0.0
  %v997 = vmax.f32 %v741, 0.0
  %v998 = vmax.f32 %v742, 0.0
  %v999 = vmax.f32 %v743, 0.0
  %v1000 = vmax.f32 %v744, 0.0
  %v1001 = vmax.f32 %v745, 0.0
  %v1002 = vmax.f32 %v746, 0.0
  %v1003 = vmax.f32 %v747, 0.0
  %v1004 = vmax.f32 %v748, 0.0
  %v1005 = vmax.f32 %v749, 0.0
  %v1006 = vmax.f32 %v750, 0.0
  %v1007 = vmax.f32 %v751, 0.0
  %v1008 = vmax.f32 %v752, 0.0
  %v1009 = vmax.f32 %v753, 0.0
  %v1010 = vmax.f32 %v754, 0.0
  %v1011 = vmax.f32 %v755, 0.0
  %v1012 = vmax.f32 %v756, 0.0
  %v1013 = vmax.f32 %v757, 0.0
  %v1014 = vmax.f32 %v758, 0.0
  %v1015 = vmax.f32 %v759, 0.0
  %v1016 = vmax.f32 %v760, 0.0
  %v1017 = vmax.f32 %v761, 0.0
  %v1018 = vmax.f32 %v762, 0.0
  %v1019 = vmax.f32 %v763, 0.0
  %v1020 = vmax.f32 %v764, 0.0
  %v1021 = vmax.f32 %v765, 0.0
  %v1022 = vmax.f32 %v766, 0.0
  %v1023 = vmax.f32 %v767, 0.0
  %v1024 = vmax.f32 %v768, 0.0
  %v1025 = vmax.f32 %v769, 0.0
  %v1026 = vmax.f32 %v770, 0.0
  %v1027 = vmax.f32 %v771, 0.0
  %v1028 = vmax.f32 %v772, 0.0
  %v1029 = vmax.f32 %v773, 0.0
  %v1030 = vmax.f32 %v774, 0.0
  %v1031 = vmax.f32 %v775, 0.0
  %v1032 = vmax.f32 %v776, 0.0
  %v1033 = vmax.f32 %v777, 0.0
  %v1034 = vmax.f32 %v778, 0.0
  %v1035 = vmax.f32 %v779, 0.0
  %v1036 = vmax.f32 %v780, 0.0
  %v1037 = vmax.f32 %v781, 0.0
  %v1038 = vmax.f32 %v782, 0.0
  %v1039 = vmax.f32 %v783, 0.0
  %v1040 = vmax.f32 %v784, 0.0
  %v1041 = vmax.f32 %v785, 0.0
  %v1042 = vmax.f32 %v786, 0.0
  %v1043 = vmax.f32 %v787, 0.0
  %v1044 = vmax.f32 %v788, 0.0
  %v1045 = vmax.f32 %v789, 0.0
  %v1046 = vmax.f32 %v790, 0.0
  %v1047 = vmax.f32 %v791, 0.0
  %v1048 = vmax.f32 %v792, 0.0
  %v1049 = vmax.f32 %v793, 0.0
  %v1050 = vpack.c.bf16 %v795, %v794
  %v1051 = vpack.c.bf16 %v797, %v796
  %v1052 = vpack.c.bf16 %v799, %v798
  %v1053 = vpack.c.bf16 %v801, %v800
  %v1054 = vpack.c.bf16 %v803, %v802
  %v1055 = vpack.c.bf16 %v805, %v804
  %v1056 = vpack.c.bf16 %v807, %v806
  %v1057 = vpack.c.bf16 %v809, %v808
  %v1058 = vpack.c.bf16 %v811, %v810
  %v1059 = vpack.c.bf16 %v813, %v812
  %v1060 = vpack.c.bf16 %v815, %v814
  %v1061 = vpack.c.bf16 %v817, %v816
  %v1062 = vpack.c.bf16 %v819, %v818
  %v1063 = vpack.c.bf16 %v821, %v820
  %v1064 = vpack.c.bf16 %v823, %v822
  %v1065 = vpack.c.bf16 %v825, %v824
  %v1066 = vpack.c.bf16 %v827, %v826
  %v1067 = vpack.c.bf16 %v829, %v828
  %v1068 = vpack.c.bf16 %v831, %v830
  %v1069 = vpack.c.bf16 %v833, %v832
  %v1070 = vpack.c.bf16 %v835, %v834
  %v1071 = vpack.c.bf16 %v837, %v836
  %v1072 = vpack.c.bf16 %v839, %v838
  %v1073 = vpack.c.bf16 %v841, %v840
  %v1074 = vpack.c.bf16 %v843, %v842
  %v1075 = vpack.c.bf16 %v845, %v844
  %v1076 = vpack.c.bf16 %v847, %v846
  %v1077 = vpack.c.bf16 %v849, %v848
  %v1078 = vpack.c.bf16 %v851, %v850
  %v1079 = vpack.c.bf16 %v853, %v852
  %v1080 = vpack.c.bf16 %v855, %v854
  %v1081 = vpack.c.bf16 %v857, %v856
  %v1082 = vpack.c.bf16 %v859, %v858
  %v1083 = vpack.c.bf16 %v861, %v860
  %v1084 = vpack.c.bf16 %v863, %v862
  %v1085 = vpack.c.bf16 %v865, %v864
  %v1086 = vpack.c.bf16 %v867, %v866
  %v1087 = vpack.c.bf16 %v869, %v868
  %v1088 = vpack.c.bf16 %v871, %v870
  %v1089 = vpack.c.bf16 %v873, %v872
  %v1090 = vpack.c.bf16 %v875, %v874
  %v1091 = vpack.c.bf16 %v877, %v876
  %v1092 = vpack.c.bf16 %v879, %v878
  %v1093 = vpack.c.bf16 %v881, %v880
  %v1094 = vpack.c.bf16 %v883, %v882
  %v1095 = vpack.c.bf16 %v885, %v884
  %v1096 = vpack.c.bf16 %v887, %v886
  %v1097 = vpack.c.bf16 %v889, %v888
  %v1098 = vpack.c.bf16 %v891, %v890
  %v1099 = vpack.c.bf16 %v893, %v892
  %v1100 = vpack.c.bf16 %v895, %v894
  %v1101 = vpack.c.bf16 %v897, %v896
  %v1102 = vpack.c.bf16 %v899, %v898
  %v1103 = vpack.c.bf16 %v901, %v900
  %v1104 = vpack.c.bf16 %v903, %v902
  %v1105 = vpack.c.bf16 %v905, %v904
  %v1106 = vpack.c.bf16 %v907, %v906
  %v1107 = vpack.c.bf16 %v909, %v908
  %v1108 = vpack.c.bf16 %v911, %v910
  %v1109 = vpack.c.bf16 %v913, %v912
  %v1110 = vpack.c.bf16 %v915, %v914
  %v1111 = vpack.c.bf16 %v917, %v916
  %v1112 = vpack.c.bf16 %v919, %v918
  %v1113 = vpack.c.bf16 %v921, %v920
  %v1114 = vpack.c.bf16 %v923, %v922
  %v1115 = vpack.c.bf16 %v925, %v924
  %v1116 = vpack.c.bf16 %v927, %v926
  %v1117 = vpack.c.bf16 %v929, %v928
  %v1118 = vpack.c.bf16 %v931, %v930
  %v1119 = vpack.c.bf16 %v933, %v932
  %v1120 = vpack.c.bf16 %v935, %v934
  %v1121 = vpack.c.bf16 %v937, %v936
  %v1122 = vpack.c.bf16 %v939, %v938
  %v1123 = vpack.c.bf16 %v941, %v940
  %v1124 = vpack.c.bf16 %v943, %v942
  %v1125 = vpack.c.bf16 %v945, %v944
  %v1126 = vpack.c.bf16 %v947, %v946
  %v1127 = vpack.c.bf16 %v949, %v948
  %v1128 = vpack.c.bf16 %v951, %v950
  %v1129 = vpack.c.bf16 %v953, %v952
  %v1130 = vpack.c.bf16 %v955, %v954
  %v1131 = vpack.c.bf16 %v957, %v956
  %v1132 = vpack.c.bf16 %v959, %v958
  %v1133 = vpack.c.bf16 %v961, %v960
  %v1134 = vpack.c.bf16 %v963, %v962
  %v1135 = vpack.c.bf16 %v965, %v964
  %v1136 = vpack.c.bf16 %v967, %v966
  %v1137 = vpack.c.bf16 %v969, %v968
  %v1138 = vpack.c.bf16 %v971, %v970
  %v1139 = vpack.c.bf16 %v973, %v972
  %v1140 = vpack.c.bf16 %v975, %v974
  %v1141 = vpack.c.bf16 %v977, %v976
  %v1142 = vpack.c.bf16 %v979, %v978
  %v1143 = vpack.c.bf16 %v981, %v980
  %v1144 = vpack.c.bf16 %v983, %v982
  %v1145 = vpack.c.bf16 %v985, %v984
  %v1146 = vpack.c.bf16 %v987, %v986
  %v1147 = vpack.c.bf16 %v989, %v988
  %v1148 = vpack.c.bf16 %v991, %v990
  %v1149 = vpack.c.bf16 %v993, %v992
  %v1150 = vpack.c.bf16 %v995, %v994
  %v1151 = vpack.c.bf16 %v997, %v996
  %v1152 = vpack.c.bf16 %v999, %v998
  %v1153 = vpack.c.bf16 %v1001, %v1000
  %v1154 = vpack.c.bf16 %v1003, %v1002
  %v1155 = vpack.c.bf16 %v1005, %v1004
  %v1156 = vpack.c.bf16 %v1007, %v1006
  %v1157 = vpack.c.bf16 %v1009, %v1008
  %v1158 = vpack.c.bf16 %v1011, %v1010
  %v1159 = vpack.c.bf16 %v1013, %v1012
  %v1160 = vpack.c.bf16 %v1015, %v1014
  %v1161 = vpack.c.bf16 %v1017, %v1016
  %v1162 = vpack.c.bf16 %v1019, %v1018
  %v1163 = vpack.c.bf16 %v1021, %v1020
  %v1164 = vpack.c.bf16 %v1023, %v1022
  %v1165 = vpack.c.bf16 %v1025, %v1024
  %v1166 = vpack.c.bf16 %v1027, %v1026
  %v1167 = vpack.c.bf16 %v1029, %v1028
  %v1168 = vpack.c.bf16 %v1031, %v1030
  %v1169 = vpack.c.bf16 %v1033, %v1032
  %v1170 = vpack.c.bf16 %v1035, %v1034
  %v1171 = vpack.c.bf16 %v1037, %v1036
  %v1172 = vpack.c.bf16 %v1039, %v1038
  %v1173 = vpack.c.bf16 %v1041, %v1040
  %v1174 = vpack.c.bf16 %v1043, %v1042
  %v1175 = vpack.c.bf16 %v1045, %v1044
  %v1176 = vpack.c.bf16 %v1047, %v1046
  %v1177 = vpack.c.bf16 %v1049, %v1048
  %v1178 = vld [vmem:[%s1] sm:$0xf]
  %vm1179 = vcmask 64512
  %v1181 = vsel %vm1179, %v1050, 0
  %v1184 = vsel %vm1179, %v1051, 0
  %v1187 = vsel %vm1179, %v1052, 0
  %v1190 = vsel %vm1179, %v1053, 0
  %v1193 = vsel %vm1179, %v1054, 0
  %v1196 = vsel %vm1179, %v1055, 0
  %v1199 = vsel %vm1179, %v1056, 0
  %v1202 = vsel %vm1179, %v1057, 0
  %v1205 = vsel %vm1179, %v1058, 0
  %v1208 = vsel %vm1179, %v1059, 0
  %v1211 = vsel %vm1179, %v1060, 0
  %v1214 = vsel %vm1179, %v1061, 0
  %v1217 = vsel %vm1179, %v1062, 0
  %v1220 = vsel %vm1179, %v1063, 0
  %v1223 = vsel %vm1179, %v1064, 0
  %v1226 = vsel %vm1179, %v1065, 0
  %v1229 = vsel %vm1179, %v1066, 0
  %v1232 = vsel %vm1179, %v1067, 0
  %v1235 = vsel %vm1179, %v1068, 0
  %v1238 = vsel %vm1179, %v1069, 0
  %v1241 = vsel %vm1179, %v1070, 0
  %v1244 = vsel %vm1179, %v1071, 0
  %v1247 = vsel %vm1179, %v1072, 0
  %v1250 = vsel %vm1179, %v1073, 0
  %v1253 = vsel %vm1179, %v1074, 0
  %v1256 = vsel %vm1179, %v1075, 0
  %v1259 = vsel %vm1179, %v1076, 0
  %v1262 = vsel %vm1179, %v1077, 0
  %v1265 = vsel %vm1179, %v1078, 0
  %v1268 = vsel %vm1179, %v1079, 0
  %v1271 = vsel %vm1179, %v1080, 0
  %v1274 = vsel %vm1179, %v1081, 0
  %v1277 = vsel %vm1179, %v1082, 0
  %v1280 = vsel %vm1179, %v1083, 0
  %v1283 = vsel %vm1179, %v1084, 0
  %v1286 = vsel %vm1179, %v1085, 0
  %v1289 = vsel %vm1179, %v1086, 0
  %v1292 = vsel %vm1179, %v1087, 0
  %v1295 = vsel %vm1179, %v1088, 0
  %v1298 = vsel %vm1179, %v1089, 0
  %v1301 = vsel %vm1179, %v1090, 0
  %v1304 = vsel %vm1179, %v1091, 0
  %v1307 = vsel %vm1179, %v1092, 0
  %v1310 = vsel %vm1179, %v1093, 0
  %v1313 = vsel %vm1179, %v1094, 0
  %v1316 = vsel %vm1179, %v1095, 0
  %v1319 = vsel %vm1179, %v1096, 0
  %v1322 = vsel %vm1179, %v1097, 0
  %v1325 = vsel %vm1179, %v1098, 0
  %v1328 = vsel %vm1179, %v1099, 0
  %v1331 = vsel %vm1179, %v1100, 0
  %v1334 = vsel %vm1179, %v1101, 0
  %v1337 = vsel %vm1179, %v1102, 0
  %v1340 = vsel %vm1179, %v1103, 0
  %v1343 = vsel %vm1179, %v1104, 0
  %v1346 = vsel %vm1179, %v1105, 0
  %v1349 = vsel %vm1179, %v1106, 0
  %v1352 = vsel %vm1179, %v1107, 0
  %v1355 = vsel %vm1179, %v1108, 0
  %v1358 = vsel %vm1179, %v1109, 0
  %v1361 = vsel %vm1179, %v1110, 0
  %v1364 = vsel %vm1179, %v1111, 0
  %v1367 = vsel %vm1179, %v1112, 0
  %v1370 = vsel %vm1179, %v1113, 0
  %v1373 = vsel %vm1179, %v1114, 0
  %v1376 = vsel %vm1179, %v1115, 0
  %v1379 = vsel %vm1179, %v1116, 0
  %v1382 = vsel %vm1179, %v1117, 0
  %v1385 = vsel %vm1179, %v1118, 0
  %v1388 = vsel %vm1179, %v1119, 0
  %v1391 = vsel %vm1179, %v1120, 0
  %v1394 = vsel %vm1179, %v1121, 0
  %v1397 = vsel %vm1179, %v1122, 0
  %v1400 = vsel %vm1179, %v1123, 0
  %v1403 = vsel %vm1179, %v1124, 0
  %v1406 = vsel %vm1179, %v1125, 0
  %v1409 = vsel %vm1179, %v1126, 0
  %v1412 = vsel %vm1179, %v1127, 0
  %v1415 = vsel %vm1179, %v1128, 0
  %v1418 = vsel %vm1179, %v1129, 0
  %v1421 = vsel %vm1179, %v1130, 0
  %v1424 = vsel %vm1179, %v1131, 0
  %v1427 = vsel %vm1179, %v1132, 0
  %v1430 = vsel %vm1179, %v1133, 0
  %v1433 = vsel %vm1179, %v1134, 0
  %v1436 = vsel %vm1179, %v1135, 0
  %v1439 = vsel %vm1179, %v1136, 0
  %v1442 = vsel %vm1179, %v1137, 0
  %v1445 = vsel %vm1179, %v1138, 0
  %v1448 = vsel %vm1179, %v1139, 0
  %v1451 = vsel %vm1179, %v1140, 0
  %v1454 = vsel %vm1179, %v1141, 0
  %v1457 = vsel %vm1179, %v1142, 0
  %v1460 = vsel %vm1179, %v1143, 0
  %v1463 = vsel %vm1179, %v1144, 0
  %v1466 = vsel %vm1179, %v1145, 0
  %v1469 = vsel %vm1179, %v1146, 0
  %v1472 = vsel %vm1179, %v1147, 0
  %v1475 = vsel %vm1179, %v1148, 0
  %v1478 = vsel %vm1179, %v1149, 0
  %v1481 = vsel %vm1179, %v1150, 0
  %v1484 = vsel %vm1179, %v1151, 0
  %v1487 = vsel %vm1179, %v1152, 0
  %v1490 = vsel %vm1179, %v1153, 0
  %v1493 = vsel %vm1179, %v1154, 0
  %v1496 = vsel %vm1179, %v1155, 0
  %v1499 = vsel %vm1179, %v1156, 0
  %v1502 = vsel %vm1179, %v1157, 0
  %v1505 = vsel %vm1179, %v1158, 0
  %v1508 = vsel %vm1179, %v1159, 0
  %v1511 = vsel %vm1179, %v1160, 0
  %v1514 = vsel %vm1179, %v1161, 0
  %v1517 = vsel %vm1179, %v1162, 0
  %v1520 = vsel %vm1179, %v1163, 0
  %v1523 = vsel %vm1179, %v1164, 0
  %v1526 = vsel %vm1179, %v1165, 0
  %v1529 = vsel %vm1179, %v1166, 0
  %v1532 = vsel %vm1179, %v1167, 0
  %v1535 = vsel %vm1179, %v1168, 0
  %v1538 = vsel %vm1179, %v1169, 0
  %v1541 = vsel %vm1179, %v1170, 0
  %v1544 = vsel %vm1179, %v1171, 0
  %v1547 = vsel %vm1179, %v1172, 0
  %v1550 = vsel %vm1179, %v1173, 0
  %v1553 = vsel %vm1179, %v1174, 0
  %v1556 = vsel %vm1179, %v1175, 0
  %v1559 = vsel %vm1179, %v1176, 0
  %v1562 = vsel %vm1179, %v1177, 0
  %vm1564 = vcmask 1043456
  %v1566 = vsel %vm1564, %v1178, 0
  %1568 = vmatpush.bf16.msra.mxu0 0
  %1569 = vmatpush.bf16.msra.mxu0 0
  %1570 = vmatpush.bf16.msra.mxu0 0
  %1571 = vmatpush.bf16.msra.mxu0 0
  %1572 = vmatpush.bf16.msra.mxu0 0
  %1573 = vmatpush.bf16.msra.mxu0 0
  %1574 = vmatpush.bf16.msra.mxu0 0
  %1575 = vmatpush.bf16.msra.mxu0 %v1566
  %1576 = vmatmul.bf16.gmra.mxu0 %v1181
  %v1577 = vpop.f32.mrf.mxu0
  %v1578 = vadd.f32 0.0, %v1577
  %v1579 = vpop.f32.mrf.mxu0
  %v1580 = vadd.f32 0.0, %v1579
  %1581 = vmatmul.bf16.gmra.mxu0 %v1184
  %v1582 = vpop.f32.mrf.mxu0
  %v1583 = vadd.f32 0.0, %v1582
  %v1584 = vpop.f32.mrf.mxu0
  %v1585 = vadd.f32 0.0, %v1584
  %1586 = vmatmul.bf16.gmra.mxu0 %v1187
  %v1587 = vpop.f32.mrf.mxu0
  %v1588 = vadd.f32 0.0, %v1587
  %v1589 = vpop.f32.mrf.mxu0
  %v1590 = vadd.f32 0.0, %v1589
  %1591 = vmatmul.bf16.gmra.mxu0 %v1190
  %v1592 = vpop.f32.mrf.mxu0
  %v1593 = vadd.f32 0.0, %v1592
  %v1594 = vpop.f32.mrf.mxu0
  %v1595 = vadd.f32 0.0, %v1594
  %1596 = vmatmul.bf16.gmra.mxu0 %v1193
  %v1597 = vpop.f32.mrf.mxu0
  %v1598 = vadd.f32 0.0, %v1597
  %v1599 = vpop.f32.mrf.mxu0
  %v1600 = vadd.f32 0.0, %v1599
  %1601 = vmatmul.bf16.gmra.mxu0 %v1196
  %v1602 = vpop.f32.mrf.mxu0
  %v1603 = vadd.f32 0.0, %v1602
  %v1604 = vpop.f32.mrf.mxu0
  %v1605 = vadd.f32 0.0, %v1604
  %1606 = vmatmul.bf16.gmra.mxu0 %v1199
  %v1607 = vpop.f32.mrf.mxu0
  %v1608 = vadd.f32 0.0, %v1607
  %v1609 = vpop.f32.mrf.mxu0
  %v1610 = vadd.f32 0.0, %v1609
  %1611 = vmatmul.bf16.gmra.mxu0 %v1202
  %v1612 = vpop.f32.mrf.mxu0
  %v1613 = vadd.f32 0.0, %v1612
  %v1614 = vpop.f32.mrf.mxu0
  %v1615 = vadd.f32 0.0, %v1614
  %1616 = vmatmul.bf16.gmra.mxu0 %v1205
  %v1617 = vpop.f32.mrf.mxu0
  %v1618 = vadd.f32 0.0, %v1617
  %v1619 = vpop.f32.mrf.mxu0
  %v1620 = vadd.f32 0.0, %v1619
  %1621 = vmatmul.bf16.gmra.mxu0 %v1208
  %v1622 = vpop.f32.mrf.mxu0
  %v1623 = vadd.f32 0.0, %v1622
  %v1624 = vpop.f32.mrf.mxu0
  %v1625 = vadd.f32 0.0, %v1624
  %1626 = vmatmul.bf16.gmra.mxu0 %v1211
  %v1627 = vpop.f32.mrf.mxu0
  %v1628 = vadd.f32 0.0, %v1627
  %v1629 = vpop.f32.mrf.mxu0
  %v1630 = vadd.f32 0.0, %v1629
  %1631 = vmatmul.bf16.gmra.mxu0 %v1214
  %v1632 = vpop.f32.mrf.mxu0
  %v1633 = vadd.f32 0.0, %v1632
  %v1634 = vpop.f32.mrf.mxu0
  %v1635 = vadd.f32 0.0, %v1634
  %1636 = vmatmul.bf16.gmra.mxu0 %v1217
  %v1637 = vpop.f32.mrf.mxu0
  %v1638 = vadd.f32 0.0, %v1637
  %v1639 = vpop.f32.mrf.mxu0
  %v1640 = vadd.f32 0.0, %v1639
  %1641 = vmatmul.bf16.gmra.mxu0 %v1220
  %v1642 = vpop.f32.mrf.mxu0
  %v1643 = vadd.f32 0.0, %v1642
  %v1644 = vpop.f32.mrf.mxu0
  %v1645 = vadd.f32 0.0, %v1644
  %1646 = vmatmul.bf16.gmra.mxu0 %v1223
  %v1647 = vpop.f32.mrf.mxu0
  %v1648 = vadd.f32 0.0, %v1647
  %v1649 = vpop.f32.mrf.mxu0
  %v1650 = vadd.f32 0.0, %v1649
  %1651 = vmatmul.bf16.gmra.mxu0 %v1226
  %v1652 = vpop.f32.mrf.mxu0
  %v1653 = vadd.f32 0.0, %v1652
  %v1654 = vpop.f32.mrf.mxu0
  %v1655 = vadd.f32 0.0, %v1654
  %1656 = vmatmul.bf16.gmra.mxu0 %v1229
  %v1657 = vpop.f32.mrf.mxu0
  %v1658 = vadd.f32 0.0, %v1657
  %v1659 = vpop.f32.mrf.mxu0
  %v1660 = vadd.f32 0.0, %v1659
  %1661 = vmatmul.bf16.gmra.mxu0 %v1232
  %v1662 = vpop.f32.mrf.mxu0
  %v1663 = vadd.f32 0.0, %v1662
  %v1664 = vpop.f32.mrf.mxu0
  %v1665 = vadd.f32 0.0, %v1664
  %1666 = vmatmul.bf16.gmra.mxu0 %v1235
  %v1667 = vpop.f32.mrf.mxu0
  %v1668 = vadd.f32 0.0, %v1667
  %v1669 = vpop.f32.mrf.mxu0
  %v1670 = vadd.f32 0.0, %v1669
  %1671 = vmatmul.bf16.gmra.mxu0 %v1238
  %v1672 = vpop.f32.mrf.mxu0
  %v1673 = vadd.f32 0.0, %v1672
  %v1674 = vpop.f32.mrf.mxu0
  %v1675 = vadd.f32 0.0, %v1674
  %1676 = vmatmul.bf16.gmra.mxu0 %v1241
  %v1677 = vpop.f32.mrf.mxu0
  %v1678 = vadd.f32 0.0, %v1677
  %v1679 = vpop.f32.mrf.mxu0
  %v1680 = vadd.f32 0.0, %v1679
  %1681 = vmatmul.bf16.gmra.mxu0 %v1244
  %v1682 = vpop.f32.mrf.mxu0
  %v1683 = vadd.f32 0.0, %v1682
  %v1684 = vpop.f32.mrf.mxu0
  %v1685 = vadd.f32 0.0, %v1684
  %1686 = vmatmul.bf16.gmra.mxu0 %v1247
  %v1687 = vpop.f32.mrf.mxu0
  %v1688 = vadd.f32 0.0, %v1687
  %v1689 = vpop.f32.mrf.mxu0
  %v1690 = vadd.f32 0.0, %v1689
  %1691 = vmatmul.bf16.gmra.mxu0 %v1250
  %v1692 = vpop.f32.mrf.mxu0
  %v1693 = vadd.f32 0.0, %v1692
  %v1694 = vpop.f32.mrf.mxu0
  %v1695 = vadd.f32 0.0, %v1694
  %1696 = vmatmul.bf16.gmra.mxu0 %v1253
  %v1697 = vpop.f32.mrf.mxu0
  %v1698 = vadd.f32 0.0, %v1697
  %v1699 = vpop.f32.mrf.mxu0
  %v1700 = vadd.f32 0.0, %v1699
  %1701 = vmatmul.bf16.gmra.mxu0 %v1256
  %v1702 = vpop.f32.mrf.mxu0
  %v1703 = vadd.f32 0.0, %v1702
  %v1704 = vpop.f32.mrf.mxu0
  %v1705 = vadd.f32 0.0, %v1704
  %1706 = vmatmul.bf16.gmra.mxu0 %v1259
  %v1707 = vpop.f32.mrf.mxu0
  %v1708 = vadd.f32 0.0, %v1707
  %v1709 = vpop.f32.mrf.mxu0
  %v1710 = vadd.f32 0.0, %v1709
  %1711 = vmatmul.bf16.gmra.mxu0 %v1262
  %v1712 = vpop.f32.mrf.mxu0
  %v1713 = vadd.f32 0.0, %v1712
  %v1714 = vpop.f32.mrf.mxu0
  %v1715 = vadd.f32 0.0, %v1714
  %1716 = vmatmul.bf16.gmra.mxu0 %v1265
  %v1717 = vpop.f32.mrf.mxu0
  %v1718 = vadd.f32 0.0, %v1717
  %v1719 = vpop.f32.mrf.mxu0
  %v1720 = vadd.f32 0.0, %v1719
  %1721 = vmatmul.bf16.gmra.mxu0 %v1268
  %v1722 = vpop.f32.mrf.mxu0
  %v1723 = vadd.f32 0.0, %v1722
  %v1724 = vpop.f32.mrf.mxu0
  %v1725 = vadd.f32 0.0, %v1724
  %1726 = vmatmul.bf16.gmra.mxu0 %v1271
  %v1727 = vpop.f32.mrf.mxu0
  %v1728 = vadd.f32 0.0, %v1727
  %v1729 = vpop.f32.mrf.mxu0
  %v1730 = vadd.f32 0.0, %v1729
  %1731 = vmatmul.bf16.gmra.mxu0 %v1274
  %v1732 = vpop.f32.mrf.mxu0
  %v1733 = vadd.f32 0.0, %v1732
  %v1734 = vpop.f32.mrf.mxu0
  %v1735 = vadd.f32 0.0, %v1734
  %1736 = vmatmul.bf16.gmra.mxu0 %v1277
  %v1737 = vpop.f32.mrf.mxu0
  %v1738 = vadd.f32 0.0, %v1737
  %v1739 = vpop.f32.mrf.mxu0
  %v1740 = vadd.f32 0.0, %v1739
  %1741 = vmatmul.bf16.gmra.mxu0 %v1280
  %v1742 = vpop.f32.mrf.mxu0
  %v1743 = vadd.f32 0.0, %v1742
  %v1744 = vpop.f32.mrf.mxu0
  %v1745 = vadd.f32 0.0, %v1744
  %1746 = vmatmul.bf16.gmra.mxu0 %v1283
  %v1747 = vpop.f32.mrf.mxu0
  %v1748 = vadd.f32 0.0, %v1747
  %v1749 = vpop.f32.mrf.mxu0
  %v1750 = vadd.f32 0.0, %v1749
  %1751 = vmatmul.bf16.gmra.mxu0 %v1286
  %v1752 = vpop.f32.mrf.mxu0
  %v1753 = vadd.f32 0.0, %v1752
  %v1754 = vpop.f32.mrf.mxu0
  %v1755 = vadd.f32 0.0, %v1754
  %1756 = vmatmul.bf16.gmra.mxu0 %v1289
  %v1757 = vpop.f32.mrf.mxu0
  %v1758 = vadd.f32 0.0, %v1757
  %v1759 = vpop.f32.mrf.mxu0
  %v1760 = vadd.f32 0.0, %v1759
  %1761 = vmatmul.bf16.gmra.mxu0 %v1292
  %v1762 = vpop.f32.mrf.mxu0
  %v1763 = vadd.f32 0.0, %v1762
  %v1764 = vpop.f32.mrf.mxu0
  %v1765 = vadd.f32 0.0, %v1764
  %1766 = vmatmul.bf16.gmra.mxu0 %v1295
  %v1767 = vpop.f32.mrf.mxu0
  %v1768 = vadd.f32 0.0, %v1767
  %v1769 = vpop.f32.mrf.mxu0
  %v1770 = vadd.f32 0.0, %v1769
  %1771 = vmatmul.bf16.gmra.mxu0 %v1298
  %v1772 = vpop.f32.mrf.mxu0
  %v1773 = vadd.f32 0.0, %v1772
  %v1774 = vpop.f32.mrf.mxu0
  %v1775 = vadd.f32 0.0, %v1774
  %1776 = vmatmul.bf16.gmra.mxu0 %v1301
  %v1777 = vpop.f32.mrf.mxu0
  %v1778 = vadd.f32 0.0, %v1777
  %v1779 = vpop.f32.mrf.mxu0
  %v1780 = vadd.f32 0.0, %v1779
  %1781 = vmatmul.bf16.gmra.mxu0 %v1304
  %v1782 = vpop.f32.mrf.mxu0
  %v1783 = vadd.f32 0.0, %v1782
  %v1784 = vpop.f32.mrf.mxu0
  %v1785 = vadd.f32 0.0, %v1784
  %1786 = vmatmul.bf16.gmra.mxu0 %v1307
  %v1787 = vpop.f32.mrf.mxu0
  %v1788 = vadd.f32 0.0, %v1787
  %v1789 = vpop.f32.mrf.mxu0
  %v1790 = vadd.f32 0.0, %v1789
  %1791 = vmatmul.bf16.gmra.mxu0 %v1310
  %v1792 = vpop.f32.mrf.mxu0
  %v1793 = vadd.f32 0.0, %v1792
  %v1794 = vpop.f32.mrf.mxu0
  %v1795 = vadd.f32 0.0, %v1794
  %1796 = vmatmul.bf16.gmra.mxu0 %v1313
  %v1797 = vpop.f32.mrf.mxu0
  %v1798 = vadd.f32 0.0, %v1797
  %v1799 = vpop.f32.mrf.mxu0
  %v1800 = vadd.f32 0.0, %v1799
  %1801 = vmatmul.bf16.gmra.mxu0 %v1316
  %v1802 = vpop.f32.mrf.mxu0
  %v1803 = vadd.f32 0.0, %v1802
  %v1804 = vpop.f32.mrf.mxu0
  %v1805 = vadd.f32 0.0, %v1804
  %1806 = vmatmul.bf16.gmra.mxu0 %v1319
  %v1807 = vpop.f32.mrf.mxu0
  %v1808 = vadd.f32 0.0, %v1807
  %v1809 = vpop.f32.mrf.mxu0
  %v1810 = vadd.f32 0.0, %v1809
  %1811 = vmatmul.bf16.gmra.mxu0 %v1322
  %v1812 = vpop.f32.mrf.mxu0
  %v1813 = vadd.f32 0.0, %v1812
  %v1814 = vpop.f32.mrf.mxu0
  %v1815 = vadd.f32 0.0, %v1814
  %1816 = vmatmul.bf16.gmra.mxu0 %v1325
  %v1817 = vpop.f32.mrf.mxu0
  %v1818 = vadd.f32 0.0, %v1817
  %v1819 = vpop.f32.mrf.mxu0
  %v1820 = vadd.f32 0.0, %v1819
  %1821 = vmatmul.bf16.gmra.mxu0 %v1328
  %v1822 = vpop.f32.mrf.mxu0
  %v1823 = vadd.f32 0.0, %v1822
  %v1824 = vpop.f32.mrf.mxu0
  %v1825 = vadd.f32 0.0, %v1824
  %1826 = vmatmul.bf16.gmra.mxu0 %v1331
  %v1827 = vpop.f32.mrf.mxu0
  %v1828 = vadd.f32 0.0, %v1827
  %v1829 = vpop.f32.mrf.mxu0
  %v1830 = vadd.f32 0.0, %v1829
  %1831 = vmatmul.bf16.gmra.mxu0 %v1334
  %v1832 = vpop.f32.mrf.mxu0
  %v1833 = vadd.f32 0.0, %v1832
  %v1834 = vpop.f32.mrf.mxu0
  %v1835 = vadd.f32 0.0, %v1834
  %1836 = vmatmul.bf16.gmra.mxu0 %v1337
  %v1837 = vpop.f32.mrf.mxu0
  %v1838 = vadd.f32 0.0, %v1837
  %v1839 = vpop.f32.mrf.mxu0
  %v1840 = vadd.f32 0.0, %v1839
  %1841 = vmatmul.bf16.gmra.mxu0 %v1340
  %v1842 = vpop.f32.mrf.mxu0
  %v1843 = vadd.f32 0.0, %v1842
  %v1844 = vpop.f32.mrf.mxu0
  %v1845 = vadd.f32 0.0, %v1844
  %1846 = vmatmul.bf16.gmra.mxu0 %v1343
  %v1847 = vpop.f32.mrf.mxu0
  %v1848 = vadd.f32 0.0, %v1847
  %v1849 = vpop.f32.mrf.mxu0
  %v1850 = vadd.f32 0.0, %v1849
  %1851 = vmatmul.bf16.gmra.mxu0 %v1346
  %v1852 = vpop.f32.mrf.mxu0
  %v1853 = vadd.f32 0.0, %v1852
  %v1854 = vpop.f32.mrf.mxu0
  %v1855 = vadd.f32 0.0, %v1854
  %1856 = vmatmul.bf16.gmra.mxu0 %v1349
  %v1857 = vpop.f32.mrf.mxu0
  %v1858 = vadd.f32 0.0, %v1857
  %v1859 = vpop.f32.mrf.mxu0
  %v1860 = vadd.f32 0.0, %v1859
  %1861 = vmatmul.bf16.gmra.mxu0 %v1352
  %v1862 = vpop.f32.mrf.mxu0
  %v1863 = vadd.f32 0.0, %v1862
  %v1864 = vpop.f32.mrf.mxu0
  %v1865 = vadd.f32 0.0, %v1864
  %1866 = vmatmul.bf16.gmra.mxu0 %v1355
  %v1867 = vpop.f32.mrf.mxu0
  %v1868 = vadd.f32 0.0, %v1867
  %v1869 = vpop.f32.mrf.mxu0
  %v1870 = vadd.f32 0.0, %v1869
  %1871 = vmatmul.bf16.gmra.mxu0 %v1358
  %v1872 = vpop.f32.mrf.mxu0
  %v1873 = vadd.f32 0.0, %v1872
  %v1874 = vpop.f32.mrf.mxu0
  %v1875 = vadd.f32 0.0, %v1874
  %1876 = vmatmul.bf16.gmra.mxu0 %v1361
  %v1877 = vpop.f32.mrf.mxu0
  %v1878 = vadd.f32 0.0, %v1877
  %v1879 = vpop.f32.mrf.mxu0
  %v1880 = vadd.f32 0.0, %v1879
  %1881 = vmatmul.bf16.gmra.mxu0 %v1364
  %v1882 = vpop.f32.mrf.mxu0
  %v1883 = vadd.f32 0.0, %v1882
  %v1884 = vpop.f32.mrf.mxu0
  %v1885 = vadd.f32 0.0, %v1884
  %1886 = vmatmul.bf16.gmra.mxu0 %v1367
  %v1887 = vpop.f32.mrf.mxu0
  %v1888 = vadd.f32 0.0, %v1887
  %v1889 = vpop.f32.mrf.mxu0
  %v1890 = vadd.f32 0.0, %v1889
  %1891 = vmatmul.bf16.gmra.mxu0 %v1370
  %v1892 = vpop.f32.mrf.mxu0
  %v1893 = vadd.f32 0.0, %v1892
  %v1894 = vpop.f32.mrf.mxu0
  %v1895 = vadd.f32 0.0, %v1894
  %1896 = vmatmul.bf16.gmra.mxu0 %v1373
  %v1897 = vpop.f32.mrf.mxu0
  %v1898 = vadd.f32 0.0, %v1897
  %v1899 = vpop.f32.mrf.mxu0
  %v1900 = vadd.f32 0.0, %v1899
  %1901 = vmatmul.bf16.gmra.mxu0 %v1376
  %v1902 = vpop.f32.mrf.mxu0
  %v1903 = vadd.f32 0.0, %v1902
  %v1904 = vpop.f32.mrf.mxu0
  %v1905 = vadd.f32 0.0, %v1904
  %1906 = vmatmul.bf16.gmra.mxu0 %v1379
  %v1907 = vpop.f32.mrf.mxu0
  %v1908 = vadd.f32 0.0, %v1907
  %v1909 = vpop.f32.mrf.mxu0
  %v1910 = vadd.f32 0.0, %v1909
  %1911 = vmatmul.bf16.gmra.mxu0 %v1382
  %v1912 = vpop.f32.mrf.mxu0
  %v1913 = vadd.f32 0.0, %v1912
  %v1914 = vpop.f32.mrf.mxu0
  %v1915 = vadd.f32 0.0, %v1914
  %1916 = vmatmul.bf16.gmra.mxu0 %v1385
  %v1917 = vpop.f32.mrf.mxu0
  %v1918 = vadd.f32 0.0, %v1917
  %v1919 = vpop.f32.mrf.mxu0
  %v1920 = vadd.f32 0.0, %v1919
  %1921 = vmatmul.bf16.gmra.mxu0 %v1388
  %v1922 = vpop.f32.mrf.mxu0
  %v1923 = vadd.f32 0.0, %v1922
  %v1924 = vpop.f32.mrf.mxu0
  %v1925 = vadd.f32 0.0, %v1924
  %1926 = vmatmul.bf16.gmra.mxu0 %v1391
  %v1927 = vpop.f32.mrf.mxu0
  %v1928 = vadd.f32 0.0, %v1927
  %v1929 = vpop.f32.mrf.mxu0
  %v1930 = vadd.f32 0.0, %v1929
  %1931 = vmatmul.bf16.gmra.mxu0 %v1394
  %v1932 = vpop.f32.mrf.mxu0
  %v1933 = vadd.f32 0.0, %v1932
  %v1934 = vpop.f32.mrf.mxu0
  %v1935 = vadd.f32 0.0, %v1934
  %1936 = vmatmul.bf16.gmra.mxu0 %v1397
  %v1937 = vpop.f32.mrf.mxu0
  %v1938 = vadd.f32 0.0, %v1937
  %v1939 = vpop.f32.mrf.mxu0
  %v1940 = vadd.f32 0.0, %v1939
  %1941 = vmatmul.bf16.gmra.mxu0 %v1400
  %v1942 = vpop.f32.mrf.mxu0
  %v1943 = vadd.f32 0.0, %v1942
  %v1944 = vpop.f32.mrf.mxu0
  %v1945 = vadd.f32 0.0, %v1944
  %1946 = vmatmul.bf16.gmra.mxu0 %v1403
  %v1947 = vpop.f32.mrf.mxu0
  %v1948 = vadd.f32 0.0, %v1947
  %v1949 = vpop.f32.mrf.mxu0
  %v1950 = vadd.f32 0.0, %v1949
  %1951 = vmatmul.bf16.gmra.mxu0 %v1406
  %v1952 = vpop.f32.mrf.mxu0
  %v1953 = vadd.f32 0.0, %v1952
  %v1954 = vpop.f32.mrf.mxu0
  %v1955 = vadd.f32 0.0, %v1954
  %1956 = vmatmul.bf16.gmra.mxu0 %v1409
  %v1957 = vpop.f32.mrf.mxu0
  %v1958 = vadd.f32 0.0, %v1957
  %v1959 = vpop.f32.mrf.mxu0
  %v1960 = vadd.f32 0.0, %v1959
  %1961 = vmatmul.bf16.gmra.mxu0 %v1412
  %v1962 = vpop.f32.mrf.mxu0
  %v1963 = vadd.f32 0.0, %v1962
  %v1964 = vpop.f32.mrf.mxu0
  %v1965 = vadd.f32 0.0, %v1964
  %1966 = vmatmul.bf16.gmra.mxu0 %v1415
  %v1967 = vpop.f32.mrf.mxu0
  %v1968 = vadd.f32 0.0, %v1967
  %v1969 = vpop.f32.mrf.mxu0
  %v1970 = vadd.f32 0.0, %v1969
  %1971 = vmatmul.bf16.gmra.mxu0 %v1418
  %v1972 = vpop.f32.mrf.mxu0
  %v1973 = vadd.f32 0.0, %v1972
  %v1974 = vpop.f32.mrf.mxu0
  %v1975 = vadd.f32 0.0, %v1974
  %1976 = vmatmul.bf16.gmra.mxu0 %v1421
  %v1977 = vpop.f32.mrf.mxu0
  %v1978 = vadd.f32 0.0, %v1977
  %v1979 = vpop.f32.mrf.mxu0
  %v1980 = vadd.f32 0.0, %v1979
  %1981 = vmatmul.bf16.gmra.mxu0 %v1424
  %v1982 = vpop.f32.mrf.mxu0
  %v1983 = vadd.f32 0.0, %v1982
  %v1984 = vpop.f32.mrf.mxu0
  %v1985 = vadd.f32 0.0, %v1984
  %1986 = vmatmul.bf16.gmra.mxu0 %v1427
  %v1987 = vpop.f32.mrf.mxu0
  %v1988 = vadd.f32 0.0, %v1987
  %v1989 = vpop.f32.mrf.mxu0
  %v1990 = vadd.f32 0.0, %v1989
  %1991 = vmatmul.bf16.gmra.mxu0 %v1430
  %v1992 = vpop.f32.mrf.mxu0
  %v1993 = vadd.f32 0.0, %v1992
  %v1994 = vpop.f32.mrf.mxu0
  %v1995 = vadd.f32 0.0, %v1994
  %1996 = vmatmul.bf16.gmra.mxu0 %v1433
  %v1997 = vpop.f32.mrf.mxu0
  %v1998 = vadd.f32 0.0, %v1997
  %v1999 = vpop.f32.mrf.mxu0
  %v2000 = vadd.f32 0.0, %v1999
  %2001 = vmatmul.bf16.gmra.mxu0 %v1436
  %v2002 = vpop.f32.mrf.mxu0
  %v2003 = vadd.f32 0.0, %v2002
  %v2004 = vpop.f32.mrf.mxu0
  %v2005 = vadd.f32 0.0, %v2004
  %2006 = vmatmul.bf16.gmra.mxu0 %v1439
  %v2007 = vpop.f32.mrf.mxu0
  %v2008 = vadd.f32 0.0, %v2007
  %v2009 = vpop.f32.mrf.mxu0
  %v2010 = vadd.f32 0.0, %v2009
  %2011 = vmatmul.bf16.gmra.mxu0 %v1442
  %v2012 = vpop.f32.mrf.mxu0
  %v2013 = vadd.f32 0.0, %v2012
  %v2014 = vpop.f32.mrf.mxu0
  %v2015 = vadd.f32 0.0, %v2014
  %2016 = vmatmul.bf16.gmra.mxu0 %v1445
  %v2017 = vpop.f32.mrf.mxu0
  %v2018 = vadd.f32 0.0, %v2017
  %v2019 = vpop.f32.mrf.mxu0
  %v2020 = vadd.f32 0.0, %v2019
  %2021 = vmatmul.bf16.gmra.mxu0 %v1448
  %v2022 = vpop.f32.mrf.mxu0
  %v2023 = vadd.f32 0.0, %v2022
  %v2024 = vpop.f32.mrf.mxu0
  %v2025 = vadd.f32 0.0, %v2024
  %2026 = vmatmul.bf16.gmra.mxu0 %v1451
  %v2027 = vpop.f32.mrf.mxu0
  %v2028 = vadd.f32 0.0, %v2027
  %v2029 = vpop.f32.mrf.mxu0
  %v2030 = vadd.f32 0.0, %v2029
  %2031 = vmatmul.bf16.gmra.mxu0 %v1454
  %v2032 = vpop.f32.mrf.mxu0
  %v2033 = vadd.f32 0.0, %v2032
  %v2034 = vpop.f32.mrf.mxu0
  %v2035 = vadd.f32 0.0, %v2034
  %2036 = vmatmul.bf16.gmra.mxu0 %v1457
  %v2037 = vpop.f32.mrf.mxu0
  %v2038 = vadd.f32 0.0, %v2037
  %v2039 = vpop.f32.mrf.mxu0
  %v2040 = vadd.f32 0.0, %v2039
  %2041 = vmatmul.bf16.gmra.mxu0 %v1460
  %v2042 = vpop.f32.mrf.mxu0
  %v2043 = vadd.f32 0.0, %v2042
  %v2044 = vpop.f32.mrf.mxu0
  %v2045 = vadd.f32 0.0, %v2044
  %2046 = vmatmul.bf16.gmra.mxu0 %v1463
  %v2047 = vpop.f32.mrf.mxu0
  %v2048 = vadd.f32 0.0, %v2047
  %v2049 = vpop.f32.mrf.mxu0
  %v2050 = vadd.f32 0.0, %v2049
  %2051 = vmatmul.bf16.gmra.mxu0 %v1466
  %v2052 = vpop.f32.mrf.mxu0
  %v2053 = vadd.f32 0.0, %v2052
  %v2054 = vpop.f32.mrf.mxu0
  %v2055 = vadd.f32 0.0, %v2054
  %2056 = vmatmul.bf16.gmra.mxu0 %v1469
  %v2057 = vpop.f32.mrf.mxu0
  %v2058 = vadd.f32 0.0, %v2057
  %v2059 = vpop.f32.mrf.mxu0
  %v2060 = vadd.f32 0.0, %v2059
  %2061 = vmatmul.bf16.gmra.mxu0 %v1472
  %v2062 = vpop.f32.mrf.mxu0
  %v2063 = vadd.f32 0.0, %v2062
  %v2064 = vpop.f32.mrf.mxu0
  %v2065 = vadd.f32 0.0, %v2064
  %2066 = vmatmul.bf16.gmra.mxu0 %v1475
  %v2067 = vpop.f32.mrf.mxu0
  %v2068 = vadd.f32 0.0, %v2067
  %v2069 = vpop.f32.mrf.mxu0
  %v2070 = vadd.f32 0.0, %v2069
  %2071 = vmatmul.bf16.gmra.mxu0 %v1478
  %v2072 = vpop.f32.mrf.mxu0
  %v2073 = vadd.f32 0.0, %v2072
  %v2074 = vpop.f32.mrf.mxu0
  %v2075 = vadd.f32 0.0, %v2074
  %2076 = vmatmul.bf16.gmra.mxu0 %v1481
  %v2077 = vpop.f32.mrf.mxu0
  %v2078 = vadd.f32 0.0, %v2077
  %v2079 = vpop.f32.mrf.mxu0
  %v2080 = vadd.f32 0.0, %v2079
  %2081 = vmatmul.bf16.gmra.mxu0 %v1484
  %v2082 = vpop.f32.mrf.mxu0
  %v2083 = vadd.f32 0.0, %v2082
  %v2084 = vpop.f32.mrf.mxu0
  %v2085 = vadd.f32 0.0, %v2084
  %2086 = vmatmul.bf16.gmra.mxu0 %v1487
  %v2087 = vpop.f32.mrf.mxu0
  %v2088 = vadd.f32 0.0, %v2087
  %v2089 = vpop.f32.mrf.mxu0
  %v2090 = vadd.f32 0.0, %v2089
  %2091 = vmatmul.bf16.gmra.mxu0 %v1490
  %v2092 = vpop.f32.mrf.mxu0
  %v2093 = vadd.f32 0.0, %v2092
  %v2094 = vpop.f32.mrf.mxu0
  %v2095 = vadd.f32 0.0, %v2094
  %2096 = vmatmul.bf16.gmra.mxu0 %v1493
  %v2097 = vpop.f32.mrf.mxu0
  %v2098 = vadd.f32 0.0, %v2097
  %v2099 = vpop.f32.mrf.mxu0
  %v2100 = vadd.f32 0.0, %v2099
  %2101 = vmatmul.bf16.gmra.mxu0 %v1496
  %v2102 = vpop.f32.mrf.mxu0
  %v2103 = vadd.f32 0.0, %v2102
  %v2104 = vpop.f32.mrf.mxu0
  %v2105 = vadd.f32 0.0, %v2104
  %2106 = vmatmul.bf16.gmra.mxu0 %v1499
  %v2107 = vpop.f32.mrf.mxu0
  %v2108 = vadd.f32 0.0, %v2107
  %v2109 = vpop.f32.mrf.mxu0
  %v2110 = vadd.f32 0.0, %v2109
  %2111 = vmatmul.bf16.gmra.mxu0 %v1502
  %v2112 = vpop.f32.mrf.mxu0
  %v2113 = vadd.f32 0.0, %v2112
  %v2114 = vpop.f32.mrf.mxu0
  %v2115 = vadd.f32 0.0, %v2114
  %2116 = vmatmul.bf16.gmra.mxu0 %v1505
  %v2117 = vpop.f32.mrf.mxu0
  %v2118 = vadd.f32 0.0, %v2117
  %v2119 = vpop.f32.mrf.mxu0
  %v2120 = vadd.f32 0.0, %v2119
  %2121 = vmatmul.bf16.gmra.mxu0 %v1508
  %v2122 = vpop.f32.mrf.mxu0
  %v2123 = vadd.f32 0.0, %v2122
  %v2124 = vpop.f32.mrf.mxu0
  %v2125 = vadd.f32 0.0, %v2124
  %2126 = vmatmul.bf16.gmra.mxu0 %v1511
  %v2127 = vpop.f32.mrf.mxu0
  %v2128 = vadd.f32 0.0, %v2127
  %v2129 = vpop.f32.mrf.mxu0
  %v2130 = vadd.f32 0.0, %v2129
  %2131 = vmatmul.bf16.gmra.mxu0 %v1514
  %v2132 = vpop.f32.mrf.mxu0
  %v2133 = vadd.f32 0.0, %v2132
  %v2134 = vpop.f32.mrf.mxu0
  %v2135 = vadd.f32 0.0, %v2134
  %2136 = vmatmul.bf16.gmra.mxu0 %v1517
  %v2137 = vpop.f32.mrf.mxu0
  %v2138 = vadd.f32 0.0, %v2137
  %v2139 = vpop.f32.mrf.mxu0
  %v2140 = vadd.f32 0.0, %v2139
  %2141 = vmatmul.bf16.gmra.mxu0 %v1520
  %v2142 = vpop.f32.mrf.mxu0
  %v2143 = vadd.f32 0.0, %v2142
  %v2144 = vpop.f32.mrf.mxu0
  %v2145 = vadd.f32 0.0, %v2144
  %2146 = vmatmul.bf16.gmra.mxu0 %v1523
  %v2147 = vpop.f32.mrf.mxu0
  %v2148 = vadd.f32 0.0, %v2147
  %v2149 = vpop.f32.mrf.mxu0
  %v2150 = vadd.f32 0.0, %v2149
  %2151 = vmatmul.bf16.gmra.mxu0 %v1526
  %v2152 = vpop.f32.mrf.mxu0
  %v2153 = vadd.f32 0.0, %v2152
  %v2154 = vpop.f32.mrf.mxu0
  %v2155 = vadd.f32 0.0, %v2154
  %2156 = vmatmul.bf16.gmra.mxu0 %v1529
  %v2157 = vpop.f32.mrf.mxu0
  %v2158 = vadd.f32 0.0, %v2157
  %v2159 = vpop.f32.mrf.mxu0
  %v2160 = vadd.f32 0.0, %v2159
  %2161 = vmatmul.bf16.gmra.mxu0 %v1532
  %v2162 = vpop.f32.mrf.mxu0
  %v2163 = vadd.f32 0.0, %v2162
  %v2164 = vpop.f32.mrf.mxu0
  %v2165 = vadd.f32 0.0, %v2164
  %2166 = vmatmul.bf16.gmra.mxu0 %v1535
  %v2167 = vpop.f32.mrf.mxu0
  %v2168 = vadd.f32 0.0, %v2167
  %v2169 = vpop.f32.mrf.mxu0
  %v2170 = vadd.f32 0.0, %v2169
  %2171 = vmatmul.bf16.gmra.mxu0 %v1538
  %v2172 = vpop.f32.mrf.mxu0
  %v2173 = vadd.f32 0.0, %v2172
  %v2174 = vpop.f32.mrf.mxu0
  %v2175 = vadd.f32 0.0, %v2174
  %2176 = vmatmul.bf16.gmra.mxu0 %v1541
  %v2177 = vpop.f32.mrf.mxu0
  %v2178 = vadd.f32 0.0, %v2177
  %v2179 = vpop.f32.mrf.mxu0
  %v2180 = vadd.f32 0.0, %v2179
  %2181 = vmatmul.bf16.gmra.mxu0 %v1544
  %v2182 = vpop.f32.mrf.mxu0
  %v2183 = vadd.f32 0.0, %v2182
  %v2184 = vpop.f32.mrf.mxu0
  %v2185 = vadd.f32 0.0, %v2184
  %2186 = vmatmul.bf16.gmra.mxu0 %v1547
  %v2187 = vpop.f32.mrf.mxu0
  %v2188 = vadd.f32 0.0, %v2187
  %v2189 = vpop.f32.mrf.mxu0
  %v2190 = vadd.f32 0.0, %v2189
  %2191 = vmatmul.bf16.gmra.mxu0 %v1550
  %v2192 = vpop.f32.mrf.mxu0
  %v2193 = vadd.f32 0.0, %v2192
  %v2194 = vpop.f32.mrf.mxu0
  %v2195 = vadd.f32 0.0, %v2194
  %2196 = vmatmul.bf16.gmra.mxu0 %v1553
  %v2197 = vpop.f32.mrf.mxu0
  %v2198 = vadd.f32 0.0, %v2197
  %v2199 = vpop.f32.mrf.mxu0
  %v2200 = vadd.f32 0.0, %v2199
  %2201 = vmatmul.bf16.gmra.mxu0 %v1556
  %v2202 = vpop.f32.mrf.mxu0
  %v2203 = vadd.f32 0.0, %v2202
  %v2204 = vpop.f32.mrf.mxu0
  %v2205 = vadd.f32 0.0, %v2204
  %2206 = vmatmul.bf16.gmra.mxu0 %v1559
  %v2207 = vpop.f32.mrf.mxu0
  %v2208 = vadd.f32 0.0, %v2207
  %v2209 = vpop.f32.mrf.mxu0
  %v2210 = vadd.f32 0.0, %v2209
  %2211 = vmatmul.bf16.gmra.mxu0 %v1562
  %v2212 = vpop.f32.mrf.mxu0
  %v2213 = vadd.f32 0.0, %v2212
  %v2214 = vpop.f32.mrf.mxu0
  %v2215 = vadd.f32 0.0, %v2214
  %2216 = vdwg.mxu0
  %2217 = vst [vmem:[%s4] sm:$0xff] %v1578
  %2218 = vst [vmem:[%s4 + $0x8] sm:$0xff] %v1580
  %2219 = vst [vmem:[%s4 + $0x10] sm:$0xff] %v1583
  %2220 = vst [vmem:[%s4 + $0x18] sm:$0xff] %v1585
  %2221 = vst [vmem:[%s4 + $0x20] sm:$0xff] %v1588
  %2222 = vst [vmem:[%s4 + $0x28] sm:$0xff] %v1590
  %2223 = vst [vmem:[%s4 + $0x30] sm:$0xff] %v1593
  %2224 = vst [vmem:[%s4 + $0x38] sm:$0xff] %v1595
  %2225 = vst [vmem:[%s4 + $0x40] sm:$0xff] %v1598
  %2226 = vst [vmem:[%s4 + $0x48] sm:$0xff] %v1600
  %2227 = vst [vmem:[%s4 + $0x50] sm:$0xff] %v1603
  %2228 = vst [vmem:[%s4 + $0x58] sm:$0xff] %v1605
  %2229 = vst [vmem:[%s4 + $0x60] sm:$0xff] %v1608
  %2230 = vst [vmem:[%s4 + $0x68] sm:$0xff] %v1610
  %2231 = vst [vmem:[%s4 + $0x70] sm:$0xff] %v1613
  %2232 = vst [vmem:[%s4 + $0x78] sm:$0xff] %v1615
  %2233 = vst [vmem:[%s4 + $0x80] sm:$0xff] %v1618
  %2234 = vst [vmem:[%s4 + $0x88] sm:$0xff] %v1620
  %2235 = vst [vmem:[%s4 + $0x90] sm:$0xff] %v1623
  %2236 = vst [vmem:[%s4 + $0x98] sm:$0xff] %v1625
  %2237 = vst [vmem:[%s4 + $0xa0] sm:$0xff] %v1628
  %2238 = vst [vmem:[%s4 + $0xa8] sm:$0xff] %v1630
  %2239 = vst [vmem:[%s4 + $0xb0] sm:$0xff] %v1633
  %2240 = vst [vmem:[%s4 + $0xb8] sm:$0xff] %v1635
  %2241 = vst [vmem:[%s4 + $0xc0] sm:$0xff] %v1638
  %2242 = vst [vmem:[%s4 + $0xc8] sm:$0xff] %v1640
  %2243 = vst [vmem:[%s4 + $0xd0] sm:$0xff] %v1643
  %2244 = vst [vmem:[%s4 + $0xd8] sm:$0xff] %v1645
  %2245 = vst [vmem:[%s4 + $0xe0] sm:$0xff] %v1648
  %2246 = vst [vmem:[%s4 + $0xe8] sm:$0xff] %v1650
  %2247 = vst [vmem:[%s4 + $0xf0] sm:$0xff] %v1653
  %2248 = vst [vmem:[%s4 + $0xf8] sm:$0xff] %v1655
  %2249 = vst [vmem:[%s4 + $0x100] sm:$0xff] %v1658
  %2250 = vst [vmem:[%s4 + $0x108] sm:$0xff] %v1660
  %2251 = vst [vmem:[%s4 + $0x110] sm:$0xff] %v1663
  %2252 = vst [vmem:[%s4 + $0x118] sm:$0xff] %v1665
  %2253 = vst [vmem:[%s4 + $0x120] sm:$0xff] %v1668
  %2254 = vst [vmem:[%s4 + $0x128] sm:$0xff] %v1670
  %2255 = vst [vmem:[%s4 + $0x130] sm:$0xff] %v1673
  %2256 = vst [vmem:[%s4 + $0x138] sm:$0xff] %v1675
  %2257 = vst [vmem:[%s4 + $0x140] sm:$0xff] %v1678
  %2258 = vst [vmem:[%s4 + $0x148] sm:$0xff] %v1680
  %2259 = vst [vmem:[%s4 + $0x150] sm:$0xff] %v1683
  %2260 = vst [vmem:[%s4 + $0x158] sm:$0xff] %v1685
  %2261 = vst [vmem:[%s4 + $0x160] sm:$0xff] %v1688
  %2262 = vst [vmem:[%s4 + $0x168] sm:$0xff] %v1690
  %2263 = vst [vmem:[%s4 + $0x170] sm:$0xff] %v1693
  %2264 = vst [vmem:[%s4 + $0x178] sm:$0xff] %v1695
  %2265 = vst [vmem:[%s4 + $0x180] sm:$0xff] %v1698
  %2266 = vst [vmem:[%s4 + $0x188] sm:$0xff] %v1700
  %2267 = vst [vmem:[%s4 + $0x190] sm:$0xff] %v1703
  %2268 = vst [vmem:[%s4 + $0x198] sm:$0xff] %v1705
  %2269 = vst [vmem:[%s4 + $0x1a0] sm:$0xff] %v1708
  %2270 = vst [vmem:[%s4 + $0x1a8] sm:$0xff] %v1710
  %2271 = vst [vmem:[%s4 + $0x1b0] sm:$0xff] %v1713
  %2272 = vst [vmem:[%s4 + $0x1b8] sm:$0xff] %v1715
  %2273 = vst [vmem:[%s4 + $0x1c0] sm:$0xff] %v1718
  %2274 = vst [vmem:[%s4 + $0x1c8] sm:$0xff] %v1720
  %2275 = vst [vmem:[%s4 + $0x1d0] sm:$0xff] %v1723
  %2276 = vst [vmem:[%s4 + $0x1d8] sm:$0xff] %v1725
  %2277 = vst [vmem:[%s4 + $0x1e0] sm:$0xff] %v1728
  %2278 = vst [vmem:[%s4 + $0x1e8] sm:$0xff] %v1730
  %2279 = vst [vmem:[%s4 + $0x1f0] sm:$0xff] %v1733
  %2280 = vst [vmem:[%s4 + $0x1f8] sm:$0xff] %v1735
  %2281 = vst [vmem:[%s4 + $0x200] sm:$0xff] %v1738
  %2282 = vst [vmem:[%s4 + $0x208] sm:$0xff] %v1740
  %2283 = vst [vmem:[%s4 + $0x210] sm:$0xff] %v1743
  %2284 = vst [vmem:[%s4 + $0x218] sm:$0xff] %v1745
  %2285 = vst [vmem:[%s4 + $0x220] sm:$0xff] %v1748
  %2286 = vst [vmem:[%s4 + $0x228] sm:$0xff] %v1750
  %2287 = vst [vmem:[%s4 + $0x230] sm:$0xff] %v1753
  %2288 = vst [vmem:[%s4 + $0x238] sm:$0xff] %v1755
  %2289 = vst [vmem:[%s4 + $0x240] sm:$0xff] %v1758
  %2290 = vst [vmem:[%s4 + $0x248] sm:$0xff] %v1760
  %2291 = vst [vmem:[%s4 + $0x250] sm:$0xff] %v1763
  %2292 = vst [vmem:[%s4 + $0x258] sm:$0xff] %v1765
  %2293 = vst [vmem:[%s4 + $0x260] sm:$0xff] %v1768
  %2294 = vst [vmem:[%s4 + $0x268] sm:$0xff] %v1770
  %2295 = vst [vmem:[%s4 + $0x270] sm:$0xff] %v1773
  %2296 = vst [vmem:[%s4 + $0x278] sm:$0xff] %v1775
  %2297 = vst [vmem:[%s4 + $0x280] sm:$0xff] %v1778
  %2298 = vst [vmem:[%s4 + $0x288] sm:$0xff] %v1780
  %2299 = vst [vmem:[%s4 + $0x290] sm:$0xff] %v1783
  %2300 = vst [vmem:[%s4 + $0x298] sm:$0xff] %v1785
  %2301 = vst [vmem:[%s4 + $0x2a0] sm:$0xff] %v1788
  %2302 = vst [vmem:[%s4 + $0x2a8] sm:$0xff] %v1790
  %2303 = vst [vmem:[%s4 + $0x2b0] sm:$0xff] %v1793
  %2304 = vst [vmem:[%s4 + $0x2b8] sm:$0xff] %v1795
  %2305 = vst [vmem:[%s4 + $0x2c0] sm:$0xff] %v1798
  %2306 = vst [vmem:[%s4 + $0x2c8] sm:$0xff] %v1800
  %2307 = vst [vmem:[%s4 + $0x2d0] sm:$0xff] %v1803
  %2308 = vst [vmem:[%s4 + $0x2d8] sm:$0xff] %v1805
  %2309 = vst [vmem:[%s4 + $0x2e0] sm:$0xff] %v1808
  %2310 = vst [vmem:[%s4 + $0x2e8] sm:$0xff] %v1810
  %2311 = vst [vmem:[%s4 + $0x2f0] sm:$0xff] %v1813
  %2312 = vst [vmem:[%s4 + $0x2f8] sm:$0xff] %v1815
  %2313 = vst [vmem:[%s4 + $0x300] sm:$0xff] %v1818
  %2314 = vst [vmem:[%s4 + $0x308] sm:$0xff] %v1820
  %2315 = vst [vmem:[%s4 + $0x310] sm:$0xff] %v1823
  %2316 = vst [vmem:[%s4 + $0x318] sm:$0xff] %v1825
  %2317 = vst [vmem:[%s4 + $0x320] sm:$0xff] %v1828
  %2318 = vst [vmem:[%s4 + $0x328] sm:$0xff] %v1830
  %2319 = vst [vmem:[%s4 + $0x330] sm:$0xff] %v1833
  %2320 = vst [vmem:[%s4 + $0x338] sm:$0xff] %v1835
  %2321 = vst [vmem:[%s4 + $0x340] sm:$0xff] %v1838
  %2322 = vst [vmem:[%s4 + $0x348] sm:$0xff] %v1840
  %2323 = vst [vmem:[%s4 + $0x350] sm:$0xff] %v1843
  %2324 = vst [vmem:[%s4 + $0x358] sm:$0xff] %v1845
  %2325 = vst [vmem:[%s4 + $0x360] sm:$0xff] %v1848
  %2326 = vst [vmem:[%s4 + $0x368] sm:$0xff] %v1850
  %2327 = vst [vmem:[%s4 + $0x370] sm:$0xff] %v1853
  %2328 = vst [vmem:[%s4 + $0x378] sm:$0xff] %v1855
  %2329 = vst [vmem:[%s4 + $0x380] sm:$0xff] %v1858
  %2330 = vst [vmem:[%s4 + $0x388] sm:$0xff] %v1860
  %2331 = vst [vmem:[%s4 + $0x390] sm:$0xff] %v1863
  %2332 = vst [vmem:[%s4 + $0x398] sm:$0xff] %v1865
  %2333 = vst [vmem:[%s4 + $0x3a0] sm:$0xff] %v1868
  %2334 = vst [vmem:[%s4 + $0x3a8] sm:$0xff] %v1870
  %2335 = vst [vmem:[%s4 + $0x3b0] sm:$0xff] %v1873
  %2336 = vst [vmem:[%s4 + $0x3b8] sm:$0xff] %v1875
  %2337 = vst [vmem:[%s4 + $0x3c0] sm:$0xff] %v1878
  %2338 = vst [vmem:[%s4 + $0x3c8] sm:$0xff] %v1880
  %2339 = vst [vmem:[%s4 + $0x3d0] sm:$0xff] %v1883
  %2340 = vst [vmem:[%s4 + $0x3d8] sm:$0xff] %v1885
  %2341 = vst [vmem:[%s4 + $0x3e0] sm:$0xff] %v1888
  %2342 = vst [vmem:[%s4 + $0x3e8] sm:$0xff] %v1890
  %2343 = vst [vmem:[%s4 + $0x3f0] sm:$0xff] %v1893
  %2344 = vst [vmem:[%s4 + $0x3f8] sm:$0xff] %v1895
  %2345 = vst [vmem:[%s4 + $0x400] sm:$0xff] %v1898
  %2346 = vst [vmem:[%s4 + $0x408] sm:$0xff] %v1900
  %2347 = vst [vmem:[%s4 + $0x410] sm:$0xff] %v1903
  %2348 = vst [vmem:[%s4 + $0x418] sm:$0xff] %v1905
  %2349 = vst [vmem:[%s4 + $0x420] sm:$0xff] %v1908
  %2350 = vst [vmem:[%s4 + $0x428] sm:$0xff] %v1910
  %2351 = vst [vmem:[%s4 + $0x430] sm:$0xff] %v1913
  %2352 = vst [vmem:[%s4 + $0x438] sm:$0xff] %v1915
  %2353 = vst [vmem:[%s4 + $0x440] sm:$0xff] %v1918
  %2354 = vst [vmem:[%s4 + $0x448] sm:$0xff] %v1920
  %2355 = vst [vmem:[%s4 + $0x450] sm:$0xff] %v1923
  %2356 = vst [vmem:[%s4 + $0x458] sm:$0xff] %v1925
  %2357 = vst [vmem:[%s4 + $0x460] sm:$0xff] %v1928
  %2358 = vst [vmem:[%s4 + $0x468] sm:$0xff] %v1930
  %2359 = vst [vmem:[%s4 + $0x470] sm:$0xff] %v1933
  %2360 = vst [vmem:[%s4 + $0x478] sm:$0xff] %v1935
  %2361 = vst [vmem:[%s4 + $0x480] sm:$0xff] %v1938
  %2362 = vst [vmem:[%s4 + $0x488] sm:$0xff] %v1940
  %2363 = vst [vmem:[%s4 + $0x490] sm:$0xff] %v1943
  %2364 = vst [vmem:[%s4 + $0x498] sm:$0xff] %v1945
  %2365 = vst [vmem:[%s4 + $0x4a0] sm:$0xff] %v1948
  %2366 = vst [vmem:[%s4 + $0x4a8] sm:$0xff] %v1950
  %2367 = vst [vmem:[%s4 + $0x4b0] sm:$0xff] %v1953
  %2368 = vst [vmem:[%s4 + $0x4b8] sm:$0xff] %v1955
  %2369 = vst [vmem:[%s4 + $0x4c0] sm:$0xff] %v1958
  %2370 = vst [vmem:[%s4 + $0x4c8] sm:$0xff] %v1960
  %2371 = vst [vmem:[%s4 + $0x4d0] sm:$0xff] %v1963
  %2372 = vst [vmem:[%s4 + $0x4d8] sm:$0xff] %v1965
  %2373 = vst [vmem:[%s4 + $0x4e0] sm:$0xff] %v1968
  %2374 = vst [vmem:[%s4 + $0x4e8] sm:$0xff] %v1970
  %2375 = vst [vmem:[%s4 + $0x4f0] sm:$0xff] %v1973
  %2376 = vst [vmem:[%s4 + $0x4f8] sm:$0xff] %v1975
  %2377 = vst [vmem:[%s4 + $0x500] sm:$0xff] %v1978
  %2378 = vst [vmem:[%s4 + $0x508] sm:$0xff] %v1980
  %2379 = vst [vmem:[%s4 + $0x510] sm:$0xff] %v1983
  %2380 = vst [vmem:[%s4 + $0x518] sm:$0xff] %v1985
  %2381 = vst [vmem:[%s4 + $0x520] sm:$0xff] %v1988
  %2382 = vst [vmem:[%s4 + $0x528] sm:$0xff] %v1990
  %2383 = vst [vmem:[%s4 + $0x530] sm:$0xff] %v1993
  %2384 = vst [vmem:[%s4 + $0x538] sm:$0xff] %v1995
  %2385 = vst [vmem:[%s4 + $0x540] sm:$0xff] %v1998
  %2386 = vst [vmem:[%s4 + $0x548] sm:$0xff] %v2000
  %2387 = vst [vmem:[%s4 + $0x550] sm:$0xff] %v2003
  %2388 = vst [vmem:[%s4 + $0x558] sm:$0xff] %v2005
  %2389 = vst [vmem:[%s4 + $0x560] sm:$0xff] %v2008
  %2390 = vst [vmem:[%s4 + $0x568] sm:$0xff] %v2010
  %2391 = vst [vmem:[%s4 + $0x570] sm:$0xff] %v2013
  %2392 = vst [vmem:[%s4 + $0x578] sm:$0xff] %v2015
  %2393 = vst [vmem:[%s4 + $0x580] sm:$0xff] %v2018
  %2394 = vst [vmem:[%s4 + $0x588] sm:$0xff] %v2020
  %2395 = vst [vmem:[%s4 + $0x590] sm:$0xff] %v2023
  %2396 = vst [vmem:[%s4 + $0x598] sm:$0xff] %v2025
  %2397 = vst [vmem:[%s4 + $0x5a0] sm:$0xff] %v2028
  %2398 = vst [vmem:[%s4 + $0x5a8] sm:$0xff] %v2030
  %2399 = vst [vmem:[%s4 + $0x5b0] sm:$0xff] %v2033
  %2400 = vst [vmem:[%s4 + $0x5b8] sm:$0xff] %v2035
  %2401 = vst [vmem:[%s4 + $0x5c0] sm:$0xff] %v2038
  %2402 = vst [vmem:[%s4 + $0x5c8] sm:$0xff] %v2040
  %2403 = vst [vmem:[%s4 + $0x5d0] sm:$0xff] %v2043
  %2404 = vst [vmem:[%s4 + $0x5d8] sm:$0xff] %v2045
  %2405 = vst [vmem:[%s4 + $0x5e0] sm:$0xff] %v2048
  %2406 = vst [vmem:[%s4 + $0x5e8] sm:$0xff] %v2050
  %2407 = vst [vmem:[%s4 + $0x5f0] sm:$0xff] %v2053
  %2408 = vst [vmem:[%s4 + $0x5f8] sm:$0xff] %v2055
  %2409 = vst [vmem:[%s4 + $0x600] sm:$0xff] %v2058
  %2410 = vst [vmem:[%s4 + $0x608] sm:$0xff] %v2060
  %2411 = vst [vmem:[%s4 + $0x610] sm:$0xff] %v2063
  %2412 = vst [vmem:[%s4 + $0x618] sm:$0xff] %v2065
  %2413 = vst [vmem:[%s4 + $0x620] sm:$0xff] %v2068
  %2414 = vst [vmem:[%s4 + $0x628] sm:$0xff] %v2070
  %2415 = vst [vmem:[%s4 + $0x630] sm:$0xff] %v2073
  %2416 = vst [vmem:[%s4 + $0x638] sm:$0xff] %v2075
  %2417 = vst [vmem:[%s4 + $0x640] sm:$0xff] %v2078
  %2418 = vst [vmem:[%s4 + $0x648] sm:$0xff] %v2080
  %2419 = vst [vmem:[%s4 + $0x650] sm:$0xff] %v2083
  %2420 = vst [vmem:[%s4 + $0x658] sm:$0xff] %v2085
  %2421 = vst [vmem:[%s4 + $0x660] sm:$0xff] %v2088
  %2422 = vst [vmem:[%s4 + $0x668] sm:$0xff] %v2090
  %2423 = vst [vmem:[%s4 + $0x670] sm:$0xff] %v2093
  %2424 = vst [vmem:[%s4 + $0x678] sm:$0xff] %v2095
  %2425 = vst [vmem:[%s4 + $0x680] sm:$0xff] %v2098
  %2426 = vst [vmem:[%s4 + $0x688] sm:$0xff] %v2100
  %2427 = vst [vmem:[%s4 + $0x690] sm:$0xff] %v2103
  %2428 = vst [vmem:[%s4 + $0x698] sm:$0xff] %v2105
  %2429 = vst [vmem:[%s4 + $0x6a0] sm:$0xff] %v2108
  %2430 = vst [vmem:[%s4 + $0x6a8] sm:$0xff] %v2110
  %2431 = vst [vmem:[%s4 + $0x6b0] sm:$0xff] %v2113
  %2432 = vst [vmem:[%s4 + $0x6b8] sm:$0xff] %v2115
  %2433 = vst [vmem:[%s4 + $0x6c0] sm:$0xff] %v2118
  %2434 = vst [vmem:[%s4 + $0x6c8] sm:$0xff] %v2120
  %2435 = vst [vmem:[%s4 + $0x6d0] sm:$0xff] %v2123
  %2436 = vst [vmem:[%s4 + $0x6d8] sm:$0xff] %v2125
  %2437 = vst [vmem:[%s4 + $0x6e0] sm:$0xff] %v2128
  %2438 = vst [vmem:[%s4 + $0x6e8] sm:$0xff] %v2130
  %2439 = vst [vmem:[%s4 + $0x6f0] sm:$0xff] %v2133
  %2440 = vst [vmem:[%s4 + $0x6f8] sm:$0xff] %v2135
  %2441 = vst [vmem:[%s4 + $0x700] sm:$0xff] %v2138
  %2442 = vst [vmem:[%s4 + $0x708] sm:$0xff] %v2140
  %2443 = vst [vmem:[%s4 + $0x710] sm:$0xff] %v2143
  %2444 = vst [vmem:[%s4 + $0x718] sm:$0xff] %v2145
  %2445 = vst [vmem:[%s4 + $0x720] sm:$0xff] %v2148
  %2446 = vst [vmem:[%s4 + $0x728] sm:$0xff] %v2150
  %2447 = vst [vmem:[%s4 + $0x730] sm:$0xff] %v2153
  %2448 = vst [vmem:[%s4 + $0x738] sm:$0xff] %v2155
  %2449 = vst [vmem:[%s4 + $0x740] sm:$0xff] %v2158
  %2450 = vst [vmem:[%s4 + $0x748] sm:$0xff] %v2160
  %2451 = vst [vmem:[%s4 + $0x750] sm:$0xff] %v2163
  %2452 = vst [vmem:[%s4 + $0x758] sm:$0xff] %v2165
  %2453 = vst [vmem:[%s4 + $0x760] sm:$0xff] %v2168
  %2454 = vst [vmem:[%s4 + $0x768] sm:$0xff] %v2170
  %2455 = vst [vmem:[%s4 + $0x770] sm:$0xff] %v2173
  %2456 = vst [vmem:[%s4 + $0x778] sm:$0xff] %v2175
  %2457 = vst [vmem:[%s4 + $0x780] sm:$0xff] %v2178
  %2458 = vst [vmem:[%s4 + $0x788] sm:$0xff] %v2180
  %2459 = vst [vmem:[%s4 + $0x790] sm:$0xff] %v2183
  %2460 = vst [vmem:[%s4 + $0x798] sm:$0xff] %v2185
  %2461 = vst [vmem:[%s4 + $0x7a0] sm:$0xff] %v2188
  %2462 = vst [vmem:[%s4 + $0x7a8] sm:$0xff] %v2190
  %2463 = vst [vmem:[%s4 + $0x7b0] sm:$0xff] %v2193
  %2464 = vst [vmem:[%s4 + $0x7b8] sm:$0xff] %v2195
  %2465 = vst [vmem:[%s4 + $0x7c0] sm:$0xff] %v2198
  %2466 = vst [vmem:[%s4 + $0x7c8] sm:$0xff] %v2200
  %2467 = vst [vmem:[%s4 + $0x7d0] sm:$0xff] %v2203
  %2468 = vst [vmem:[%s4 + $0x7d8] sm:$0xff] %v2205
  %2469 = vst [vmem:[%s4 + $0x7e0] sm:$0xff] %v2208
  %2470 = vst [vmem:[%s4 + $0x7e8] sm:$0xff] %v2210
  %2471 = vst [vmem:[%s4 + $0x7f0] sm:$0xff] %v2213
  %2472 = vst [vmem:[%s4 + $0x7f8] sm:$0xff] %v2215
  // Predicated region
  $region18: #{generator_forward.7} parent=0 // pred_check
    _
  $region19: #{generator_forward.7} parent=0 // pred_check_branch
    %2474 = sbr.rel (0) target = $region21
  $region20: #{generator_forward.7} parent=0 // pred_region
    _
  $region21: #{generator_forward.7} parent=0 // pred_fallthru
    _
  // Predicated region
  $region22: #{generator_forward.7} parent=0 // pred_check
    _
  $region23: #{generator_forward.7} parent=0 // pred_check_branch
    %2476 = sbr.rel (0) target = $region25
  $region24: #{generator_forward.7} parent=0 // pred_region
    _
  $region25: #{generator_forward.7} parent=0 // pred_fallthru
    _

</llo_original>
